<compile_context>
chip_gen: v6e
topology: v6e:2x2x1
jax: 0.10.0
libtpu: 0.0.40
codegen_flags: <defaults>
</compile_context>

<pallas_src>
import functools
import math

import jax
import jax.numpy as jnp
from jax.experimental import pallas as pl
from jax.experimental.pallas import tpu as pltpu


# ----------------------------- in-kernel math -------------------------------

def _layer_norm(x, g, b, eps=1e-5):
    mu = jnp.mean(x, axis=-1, keepdims=True)
    var = jnp.mean((x - mu) ** 2, axis=-1, keepdims=True)
    return (x - mu) * jax.lax.rsqrt(var + eps) * g + b


def _attend(q, k, v, n_heads):
    """Per-head attention on one batch element.

    q: (Lq, H) f32, k/v: (Lk, H) f32 (scale already folded into q's weights).
    Returns context (Lq, H) f32.  Heads are dh=16 lane slices; scores/PV are
    small K=dh matmuls (unavoidable per MHA math); softmax is f32.
    """
    f32, bf16 = jnp.float32, jnp.bfloat16
    H = q.shape[-1]
    dh = H // n_heads
    qb, kb, vb = q.astype(bf16), k.astype(bf16), v.astype(bf16)
    ctx_heads = []
    for h in range(n_heads):                       # small static unroll
        sl = slice(h * dh, (h + 1) * dh)
        qh, kh, vh = qb[:, sl], kb[:, sl], vb[:, sl]
        # scores = qh @ kh.T (contract last dims; no materialized transpose)
        e = jax.lax.dot_general(qh, kh, (((1,), (1,)), ((), ())),
                                preferred_element_type=f32)
        m = jnp.max(e, axis=-1, keepdims=True)
        p = jnp.exp(e - m)
        a = p * pl.reciprocal(jnp.sum(p, axis=-1, keepdims=True), approx=True)
        ctx_heads.append(jnp.dot(a.astype(bf16), vh,
                                 preferred_element_type=f32))
    return jnp.concatenate(ctx_heads, axis=-1)     # (Lq, H) f32


def decoder_kernel(trg_ref, src_ref,
                   # self-attention (fused QKV) params, stacked over layers
                   sa_wqkv, sa_bqkv, sa_wo, sa_bo,
                   # cross-attention (over src) params
                   ea_wq, ea_bq, ea_wkv, ea_bkv, ea_wo, ea_bo,
                   # positionwise feedforward (Conv1d kernel_size=1 == Linear)
                   ff_w1, ff_b1, ff_w2, ff_b2,
                   # shared LayerNorm
                   ln_g, ln_b,
                   out_ref,
                   *, n_layers, n_heads):
    f32, bf16 = jnp.float32, jnp.bfloat16
    Lt, H = trg_ref.shape
    Ls = src_ref.shape[0]

    x = trg_ref[...]                               # (Lt, H) f32 residual path
    src = src_ref[...]                             # (Ls, H) f32
    src_b = src.astype(bf16)                       # layer-invariant K/V input

    for l in range(n_layers):                      # static unroll over layers
        g = ln_g[l]
        b = ln_b[l]

        # 1) self attention: fused (H,3H) QKV projection (lane-dense, K=H),
        #    then per-head scores/PV, then single K=H output projection.
        qkv = jnp.dot(x.astype(bf16), sa_wqkv[l],
                      preferred_element_type=f32) + sa_bqkv[l]
        q, k, v = qkv[:, :H], qkv[:, H:2 * H], qkv[:, 2 * H:]
        ctx = _attend(q, k, v, n_heads)
        sa = jnp.dot(ctx.astype(bf16), sa_wo[l],
                     preferred_element_type=f32) + sa_bo[l]
        x = _layer_norm(x + sa, g, b)              # dropout == identity

        # 2) cross attention over src: Q from trg, fused (H,2H) K/V from src.
        q = jnp.dot(x.astype(bf16), ea_wq[l],
                    preferred_element_type=f32) + ea_bq[l]
        kv = jnp.dot(src_b, ea_wkv[l],
                     preferred_element_type=f32) + ea_bkv[l]
        k, v = kv[:, :H], kv[:, H:]
        ctx = _attend(q, k, v, n_heads)
        ea = jnp.dot(ctx.astype(bf16), ea_wo[l],
                     preferred_element_type=f32) + ea_bo[l]
        x = _layer_norm(x + ea, g, b)

        # 3) positionwise feedforward + residual + LN
        h1 = jnp.dot(x.astype(bf16), ff_w1[l],
                     preferred_element_type=f32) + ff_b1[l]
        h1 = jnp.maximum(h1, 0.0)
        h2 = jnp.dot(h1.astype(bf16), ff_w2[l],
                     preferred_element_type=f32) + ff_b2[l]
        x = _layer_norm(x + h2, g, b)

    # result = torch.cat((trg, src), dim=1): two contiguous per-program stores
    # (Lt and Ls are multiples of 8 -> sublane-aligned).
    out_ref[:Lt, :] = x.astype(out_ref.dtype)
    out_ref[Lt:, :] = src.astype(out_ref.dtype)


# ------------------------------- wrappers ------------------------------------

def prepare_decoder_params(layer_params, n_heads):
    """Fuse QKV / KV weights, fold 1/scale into Q, cast, stack over layers."""
    H = layer_params[0]["sa_wq"].shape[0]
    scale = math.sqrt(H // n_heads)
    bf16, f32 = jnp.bfloat16, jnp.float32

    def per_layer(p):
        sa_wqkv = jnp.concatenate([p["sa_wq"] / scale, p["sa_wk"], p["sa_wv"]],
                                  axis=1)                      # (H, 3H)
        sa_bqkv = jnp.concatenate([p["sa_bq"] / scale, p["sa_bk"], p["sa_bv"]],
                                  axis=1)                      # (1, 3H)
        ea_wkv = jnp.concatenate([p["ea_wk"], p["ea_wv"]], axis=1)   # (H, 2H)
        ea_bkv = jnp.concatenate([p["ea_bk"], p["ea_bv"]], axis=1)   # (1, 2H)
        return [
            sa_wqkv.astype(bf16), sa_bqkv.astype(f32),
            p["sa_wo"].astype(bf16), p["sa_bo"].astype(f32),
            (p["ea_wq"] / scale).astype(bf16), (p["ea_bq"] / scale).astype(f32),
            ea_wkv.astype(bf16), ea_bkv.astype(f32),
            p["ea_wo"].astype(bf16), p["ea_bo"].astype(f32),
            p["ff_w1"].astype(bf16), p["ff_b1"].astype(f32),
            p["ff_w2"].astype(bf16), p["ff_b2"].astype(f32),
            p["ln_g"].astype(f32), p["ln_b"].astype(f32),
        ]

    per = [per_layer(p) for p in layer_params]
    n_arrays = len(per[0])
    return tuple(jnp.stack([per[l][i] for l in range(len(per))], axis=0)
                 for i in range(n_arrays))


@functools.partial(jax.jit, static_argnames=("n_heads",))
def decoder_forward(trg, src, layer_params, n_heads):
    """Decoder.forward: stack of layers, then torch.cat((trg, src), dim=1)."""
    B, Lt, H = trg.shape
    _, Ls, _ = src.shape
    n_layers = len(layer_params)
    PF = layer_params[0]["ff_w1"].shape[1]
    weights = prepare_decoder_params(layer_params, n_heads)

    trg2 = trg.reshape(B * Lt, H).astype(jnp.float32)
    src2 = src.reshape(B * Ls, H).astype(jnp.float32)

    kernel = functools.partial(decoder_kernel,
                               n_layers=n_layers, n_heads=n_heads)

    # Per-batch blocks for the sequence tensors; weights are full-array
    # resident (constant block index -> fetched once, stays in VMEM).
    def full_spec(a):
        return pl.BlockSpec(a.shape, lambda b, nd=a.ndim: (0,) * nd)

    in_specs = [
        pl.BlockSpec((Lt, H), lambda b: (b, 0)),
        pl.BlockSpec((Ls, H), lambda b: (b, 0)),
    ] + [full_spec(w) for w in weights]
    out_specs = pl.BlockSpec((Lt + Ls, H), lambda b: (b, 0))

    # Advisory cost estimate for XLA's scheduler.
    flops_layer = (
        2 * Lt * H * (3 * H)        # self QKV projection
        + 4 * Lt * Lt * H           # self scores + PV
        + 2 * Lt * H * H            # self output projection
        + 2 * Lt * H * H            # cross Q projection
        + 2 * Ls * H * (2 * H)      # cross KV projection
        + 4 * Lt * Ls * H           # cross scores + PV
        + 2 * Lt * H * H            # cross output projection
        + 4 * Lt * H * PF           # FFN
    )
    def nbytes(a):
        return int(a.size) * a.dtype.itemsize
    cost = pl.CostEstimate(
        flops=int(B * n_layers * flops_layer),
        transcendentals=int(B * n_layers * (Lt * Lt + Lt * Ls)),
        bytes_accessed=int(nbytes(trg2) + nbytes(src2)
                           + sum(nbytes(w) for w in weights)
                           + B * (Lt + Ls) * H * 4),
    )

    out = pl.pallas_call(
        kernel,
        out_shape=jax.ShapeDtypeStruct((B * (Lt + Ls), H), jnp.float32),
        grid=(B,),
        in_specs=in_specs,
        out_specs=out_specs,
        compiler_params=pltpu.CompilerParams(
            dimension_semantics=("parallel",)),
        cost_estimate=cost,
    )(trg2, src2, *weights)
    return out.reshape(B, Lt + Ls, H)


# ------------------------------ param init -----------------------------------

def _linear_init(key, fan_in, fan_out):
    k1, k2 = jax.random.split(key)
    bound = 1.0 / math.sqrt(fan_in)
    w = jax.random.uniform(k1, (fan_in, fan_out), jnp.float32, -bound, bound)
    b = jax.random.uniform(k2, (1, fan_out), jnp.float32, -bound, bound)
    return w, b


def init_decoder_params(key, n_layers, hid_dim, pf_dim):
    layers = []
    for _ in range(n_layers):
        keys = jax.random.split(key, 11)
        key = keys[0]
        p = {}
        p["sa_wq"], p["sa_bq"] = _linear_init(keys[1], hid_dim, hid_dim)
        p["sa_wk"], p["sa_bk"] = _linear_init(keys[2], hid_dim, hid_dim)
        p["sa_wv"], p["sa_bv"] = _linear_init(keys[3], hid_dim, hid_dim)
        p["sa_wo"], p["sa_bo"] = _linear_init(keys[4], hid_dim, hid_dim)
        p["ea_wq"], p["ea_bq"] = _linear_init(keys[5], hid_dim, hid_dim)
        p["ea_wk"], p["ea_bk"] = _linear_init(keys[6], hid_dim, hid_dim)
        p["ea_wv"], p["ea_bv"] = _linear_init(keys[7], hid_dim, hid_dim)
        p["ea_wo"], p["ea_bo"] = _linear_init(keys[8], hid_dim, hid_dim)
        p["ff_w1"], p["ff_b1"] = _linear_init(keys[9], hid_dim, pf_dim)
        p["ff_w2"], p["ff_b2"] = _linear_init(keys[10], pf_dim, hid_dim)
        p["ln_g"] = jnp.ones((1, hid_dim), jnp.float32)
        p["ln_b"] = jnp.zeros((1, hid_dim), jnp.float32)
        layers.append(p)
    # init_line = nn.Linear(128, 256, bias=False): present in the module but
    # unused in forward; created here for state fidelity only.
    init_line_w = jax.random.uniform(jax.random.fold_in(key, 7),
                                     (128, 256), jnp.float32,
                                     -1 / math.sqrt(128), 1 / math.sqrt(128))
    return layers, init_line_w


# --------------------------------- main ---------------------------------------

if __name__ == "__main__":
    B, L_TRG, L_SRC = 2, 8, 16
    HID, N_HEADS, PF, N_LAYERS = 64, 4, 128, 2

    key = jax.random.PRNGKey(0)
    k_trg, k_src, k_par = jax.random.split(key, 3)
    trg = jax.random.normal(k_trg, (B, L_TRG, HID), jnp.float32)
    src = jax.random.normal(k_src, (B, L_SRC, HID), jnp.float32)

    layer_params, _init_line_w = init_decoder_params(k_par, N_LAYERS, HID, PF)

    result = decoder_forward(trg, src, layer_params, N_HEADS)
    result = jax.block_until_ready(result)

    assert result.shape == (B, L_TRG + L_SRC, HID), result.shape
    assert result.dtype == jnp.float32
    assert bool(jnp.all(jnp.isfinite(result)))
    print("KERNEL_OK")
</pallas_src>

<mosaic_0001>
module attributes {stable_mosaic.version = 11 : i64} {
  func.func @decoder_kernel(%arg0: i32, %arg1: memref<8x64xf32, #tpu.memory_space<vmem>>, %arg2: memref<16x64xf32, #tpu.memory_space<vmem>>, %arg3: memref<2x64x192xbf16, #tpu.memory_space<vmem>>, %arg4: memref<2x1x192xf32, #tpu.memory_space<vmem>>, %arg5: memref<2x64x64xbf16, #tpu.memory_space<vmem>>, %arg6: memref<2x1x64xf32, #tpu.memory_space<vmem>>, %arg7: memref<2x64x64xbf16, #tpu.memory_space<vmem>>, %arg8: memref<2x1x64xf32, #tpu.memory_space<vmem>>, %arg9: memref<2x64x128xbf16, #tpu.memory_space<vmem>>, %arg10: memref<2x1x128xf32, #tpu.memory_space<vmem>>, %arg11: memref<2x64x64xbf16, #tpu.memory_space<vmem>>, %arg12: memref<2x1x64xf32, #tpu.memory_space<vmem>>, %arg13: memref<2x64x128xbf16, #tpu.memory_space<vmem>>, %arg14: memref<2x1x128xf32, #tpu.memory_space<vmem>>, %arg15: memref<2x128x64xbf16, #tpu.memory_space<vmem>>, %arg16: memref<2x1x64xf32, #tpu.memory_space<vmem>>, %arg17: memref<2x1x64xf32, #tpu.memory_space<vmem>>, %arg18: memref<2x1x64xf32, #tpu.memory_space<vmem>>, %arg19: memref<24x64xf32, #tpu.memory_space<vmem>>) attributes {dimension_semantics = [#tpu.dimension_semantics<parallel>], iteration_bounds = array<i64: 2>, scalar_prefetch = 0 : i64, scratch_operands = 0 : i64, tpu.core_type = #tpu.core_type<tc>, window_params = [{transform_indices = @transform_0, window_bounds = array<i64: 8, 64>}, {transform_indices = @transform_1, window_bounds = array<i64: 16, 64>}, {pipeline_mode = #tpu.pipeline_mode<synchronous>, transform_indices = @transform_2, window_bounds = array<i64: 2, 64, 192>}, {pipeline_mode = #tpu.pipeline_mode<synchronous>, transform_indices = @transform_3, window_bounds = array<i64: 2, 1, 192>}, {pipeline_mode = #tpu.pipeline_mode<synchronous>, transform_indices = @transform_4, window_bounds = array<i64: 2, 64, 64>}, {pipeline_mode = #tpu.pipeline_mode<synchronous>, transform_indices = @transform_5, window_bounds = array<i64: 2, 1, 64>}, {pipeline_mode = #tpu.pipeline_mode<synchronous>, transform_indices = @transform_6, window_bounds = array<i64: 2, 64, 64>}, {pipeline_mode = #tpu.pipeline_mode<synchronous>, transform_indices = @transform_7, window_bounds = array<i64: 2, 1, 64>}, {pipeline_mode = #tpu.pipeline_mode<synchronous>, transform_indices = @transform_8, window_bounds = array<i64: 2, 64, 128>}, {pipeline_mode = #tpu.pipeline_mode<synchronous>, transform_indices = @transform_9, window_bounds = array<i64: 2, 1, 128>}, {pipeline_mode = #tpu.pipeline_mode<synchronous>, transform_indices = @transform_10, window_bounds = array<i64: 2, 64, 64>}, {pipeline_mode = #tpu.pipeline_mode<synchronous>, transform_indices = @transform_11, window_bounds = array<i64: 2, 1, 64>}, {pipeline_mode = #tpu.pipeline_mode<synchronous>, transform_indices = @transform_12, window_bounds = array<i64: 2, 64, 128>}, {pipeline_mode = #tpu.pipeline_mode<synchronous>, transform_indices = @transform_13, window_bounds = array<i64: 2, 1, 128>}, {pipeline_mode = #tpu.pipeline_mode<synchronous>, transform_indices = @transform_14, window_bounds = array<i64: 2, 128, 64>}, {pipeline_mode = #tpu.pipeline_mode<synchronous>, transform_indices = @transform_15, window_bounds = array<i64: 2, 1, 64>}, {pipeline_mode = #tpu.pipeline_mode<synchronous>, transform_indices = @transform_16, window_bounds = array<i64: 2, 1, 64>}, {pipeline_mode = #tpu.pipeline_mode<synchronous>, transform_indices = @transform_17, window_bounds = array<i64: 2, 1, 64>}, {transform_indices = @transform_18, window_bounds = array<i64: 24, 64>}]} {
    %c0 = arith.constant 0 : index
    %c0_0 = arith.constant 0 : index
    %0 = vector.load %arg1[%c0, %c0_0] : memref<8x64xf32, #tpu.memory_space<vmem>>, vector<8x64xf32>
    %c0_1 = arith.constant 0 : index
    %c0_2 = arith.constant 0 : index
    %1 = vector.load %arg2[%c0_1, %c0_2] : memref<16x64xf32, #tpu.memory_space<vmem>>, vector<16x64xf32>
    %2 = arith.truncf %1 : vector<16x64xf32> to vector<16x64xbf16>
    %c0_3 = arith.constant 0 : index
    %c0_4 = arith.constant 0 : index
    %c0_5 = arith.constant 0 : index
    %3 = vector.load %arg17[%c0_3, %c0_4, %c0_5] : memref<2x1x64xf32, #tpu.memory_space<vmem>>, vector<1x1x64xf32>
    %4 = vector.shape_cast %3 : vector<1x1x64xf32> to vector<1x64xf32>
    %c0_6 = arith.constant 0 : index
    %c0_7 = arith.constant 0 : index
    %c0_8 = arith.constant 0 : index
    %5 = vector.load %arg18[%c0_6, %c0_7, %c0_8] : memref<2x1x64xf32, #tpu.memory_space<vmem>>, vector<1x1x64xf32>
    %6 = vector.shape_cast %5 : vector<1x1x64xf32> to vector<1x64xf32>
    %7 = arith.truncf %0 : vector<8x64xf32> to vector<8x64xbf16>
    %c0_9 = arith.constant 0 : index
    %c0_10 = arith.constant 0 : index
    %c0_11 = arith.constant 0 : index
    %8 = vector.load %arg3[%c0_9, %c0_10, %c0_11] : memref<2x64x192xbf16, #tpu.memory_space<vmem>>, vector<1x64x192xbf16>
    %9 = vector.shape_cast %8 : vector<1x64x192xbf16> to vector<64x192xbf16>
    %cst = arith.constant dense<0.000000e+00> : vector<8x192xf32>
    %10 = tpu.matmul %7, %9, %cst {dimension_numbers = #tpu.dot_dimension_numbers<[1], [0], [0], [1], [0, 0, 1, 1], [], []>} : vector<8x64xbf16>, vector<64x192xbf16>, vector<8x192xf32> -> vector<8x192xf32>
    %c0_12 = arith.constant 0 : index
    %c0_13 = arith.constant 0 : index
    %c0_14 = arith.constant 0 : index
    %11 = vector.load %arg4[%c0_12, %c0_13, %c0_14] : memref<2x1x192xf32, #tpu.memory_space<vmem>>, vector<1x1x192xf32>
    %12 = vector.shape_cast %11 : vector<1x1x192xf32> to vector<1x192xf32>
    %13 = vector.broadcast %12 : vector<1x192xf32> to vector<8x192xf32>
    %14 = arith.addf %10, %13 : vector<8x192xf32>
    %15 = vector.extract_strided_slice %14 {offsets = [0, 0], sizes = [8, 64], strides = [1, 1]} : vector<8x192xf32> to vector<8x64xf32>
    %16 = vector.extract_strided_slice %14 {offsets = [0, 64], sizes = [8, 64], strides = [1, 1]} : vector<8x192xf32> to vector<8x64xf32>
    %17 = vector.extract_strided_slice %14 {offsets = [0, 128], sizes = [8, 64], strides = [1, 1]} : vector<8x192xf32> to vector<8x64xf32>
    %18 = arith.truncf %15 : vector<8x64xf32> to vector<8x64xbf16>
    %19 = arith.truncf %16 : vector<8x64xf32> to vector<8x64xbf16>
    %20 = arith.truncf %17 : vector<8x64xf32> to vector<8x64xbf16>
    %21 = vector.extract_strided_slice %18 {offsets = [0, 0], sizes = [8, 16], strides = [1, 1]} : vector<8x64xbf16> to vector<8x16xbf16>
    %22 = vector.extract_strided_slice %19 {offsets = [0, 0], sizes = [8, 16], strides = [1, 1]} : vector<8x64xbf16> to vector<8x16xbf16>
    %23 = vector.extract_strided_slice %20 {offsets = [0, 0], sizes = [8, 16], strides = [1, 1]} : vector<8x64xbf16> to vector<8x16xbf16>
    %cst_15 = arith.constant dense<0.000000e+00> : vector<8x8xf32>
    %24 = tpu.matmul %21, %22, %cst_15 {dimension_numbers = #tpu.dot_dimension_numbers<[1], [1], [0], [0], [0, 0, 1, 0], [], []>} : vector<8x16xbf16>, vector<8x16xbf16>, vector<8x8xf32> -> vector<8x8xf32>
    %cst_16 = arith.constant dense<0xFF800000> : vector<8xf32>
    %25 = vector.multi_reduction <maximumf>, %24, %cst_16 [1] : vector<8x8xf32> to vector<8xf32>
    %26 = vector.shape_cast %25 : vector<8xf32> to vector<8x1xf32>
    %27 = vector.broadcast %26 : vector<8x1xf32> to vector<8x8xf32>
    %28 = arith.subf %24, %27 : vector<8x8xf32>
    %29 = math.exp %28 : vector<8x8xf32>
    %cst_17 = arith.constant dense<0.000000e+00> : vector<8xf32>
    %30 = vector.multi_reduction <add>, %29, %cst_17 [1] : vector<8x8xf32> to vector<8xf32>
    %31 = vector.shape_cast %30 : vector<8xf32> to vector<8x1xf32>
    %32 = tpu.reciprocal %31 {approx = true} : vector<8x1xf32> -> vector<8x1xf32>
    %33 = vector.broadcast %32 : vector<8x1xf32> to vector<8x8xf32>
    %34 = arith.mulf %29, %33 : vector<8x8xf32>
    %35 = arith.truncf %34 : vector<8x8xf32> to vector<8x8xbf16>
    %cst_18 = arith.constant dense<0.000000e+00> : vector<8x16xf32>
    %36 = tpu.matmul %35, %23, %cst_18 {dimension_numbers = #tpu.dot_dimension_numbers<[1], [0], [0], [1], [0, 0, 1, 1], [], []>} : vector<8x8xbf16>, vector<8x16xbf16>, vector<8x16xf32> -> vector<8x16xf32>
    %37 = vector.extract_strided_slice %18 {offsets = [0, 16], sizes = [8, 16], strides = [1, 1]} : vector<8x64xbf16> to vector<8x16xbf16>
    %38 = vector.extract_strided_slice %19 {offsets = [0, 16], sizes = [8, 16], strides = [1, 1]} : vector<8x64xbf16> to vector<8x16xbf16>
    %39 = vector.extract_strided_slice %20 {offsets = [0, 16], sizes = [8, 16], strides = [1, 1]} : vector<8x64xbf16> to vector<8x16xbf16>
    %cst_19 = arith.constant dense<0.000000e+00> : vector<8x8xf32>
    %40 = tpu.matmul %37, %38, %cst_19 {dimension_numbers = #tpu.dot_dimension_numbers<[1], [1], [0], [0], [0, 0, 1, 0], [], []>} : vector<8x16xbf16>, vector<8x16xbf16>, vector<8x8xf32> -> vector<8x8xf32>
    %cst_20 = arith.constant dense<0xFF800000> : vector<8xf32>
    %41 = vector.multi_reduction <maximumf>, %40, %cst_20 [1] : vector<8x8xf32> to vector<8xf32>
    %42 = vector.shape_cast %41 : vector<8xf32> to vector<8x1xf32>
    %43 = vector.broadcast %42 : vector<8x1xf32> to vector<8x8xf32>
    %44 = arith.subf %40, %43 : vector<8x8xf32>
    %45 = math.exp %44 : vector<8x8xf32>
    %cst_21 = arith.constant dense<0.000000e+00> : vector<8xf32>
    %46 = vector.multi_reduction <add>, %45, %cst_21 [1] : vector<8x8xf32> to vector<8xf32>
    %47 = vector.shape_cast %46 : vector<8xf32> to vector<8x1xf32>
    %48 = tpu.reciprocal %47 {approx = true} : vector<8x1xf32> -> vector<8x1xf32>
    %49 = vector.broadcast %48 : vector<8x1xf32> to vector<8x8xf32>
    %50 = arith.mulf %45, %49 : vector<8x8xf32>
    %51 = arith.truncf %50 : vector<8x8xf32> to vector<8x8xbf16>
    %cst_22 = arith.constant dense<0.000000e+00> : vector<8x16xf32>
    %52 = tpu.matmul %51, %39, %cst_22 {dimension_numbers = #tpu.dot_dimension_numbers<[1], [0], [0], [1], [0, 0, 1, 1], [], []>} : vector<8x8xbf16>, vector<8x16xbf16>, vector<8x16xf32> -> vector<8x16xf32>
    %53 = vector.extract_strided_slice %18 {offsets = [0, 32], sizes = [8, 16], strides = [1, 1]} : vector<8x64xbf16> to vector<8x16xbf16>
    %54 = vector.extract_strided_slice %19 {offsets = [0, 32], sizes = [8, 16], strides = [1, 1]} : vector<8x64xbf16> to vector<8x16xbf16>
    %55 = vector.extract_strided_slice %20 {offsets = [0, 32], sizes = [8, 16], strides = [1, 1]} : vector<8x64xbf16> to vector<8x16xbf16>
    %cst_23 = arith.constant dense<0.000000e+00> : vector<8x8xf32>
    %56 = tpu.matmul %53, %54, %cst_23 {dimension_numbers = #tpu.dot_dimension_numbers<[1], [1], [0], [0], [0, 0, 1, 0], [], []>} : vector<8x16xbf16>, vector<8x16xbf16>, vector<8x8xf32> -> vector<8x8xf32>
    %cst_24 = arith.constant dense<0xFF800000> : vector<8xf32>
    %57 = vector.multi_reduction <maximumf>, %56, %cst_24 [1] : vector<8x8xf32> to vector<8xf32>
    %58 = vector.shape_cast %57 : vector<8xf32> to vector<8x1xf32>
    %59 = vector.broadcast %58 : vector<8x1xf32> to vector<8x8xf32>
    %60 = arith.subf %56, %59 : vector<8x8xf32>
    %61 = math.exp %60 : vector<8x8xf32>
    %cst_25 = arith.constant dense<0.000000e+00> : vector<8xf32>
    %62 = vector.multi_reduction <add>, %61, %cst_25 [1] : vector<8x8xf32> to vector<8xf32>
    %63 = vector.shape_cast %62 : vector<8xf32> to vector<8x1xf32>
    %64 = tpu.reciprocal %63 {approx = true} : vector<8x1xf32> -> vector<8x1xf32>
    %65 = vector.broadcast %64 : vector<8x1xf32> to vector<8x8xf32>
    %66 = arith.mulf %61, %65 : vector<8x8xf32>
    %67 = arith.truncf %66 : vector<8x8xf32> to vector<8x8xbf16>
    %cst_26 = arith.constant dense<0.000000e+00> : vector<8x16xf32>
    %68 = tpu.matmul %67, %55, %cst_26 {dimension_numbers = #tpu.dot_dimension_numbers<[1], [0], [0], [1], [0, 0, 1, 1], [], []>} : vector<8x8xbf16>, vector<8x16xbf16>, vector<8x16xf32> -> vector<8x16xf32>
    %69 = vector.extract_strided_slice %18 {offsets = [0, 48], sizes = [8, 16], strides = [1, 1]} : vector<8x64xbf16> to vector<8x16xbf16>
    %70 = vector.extract_strided_slice %19 {offsets = [0, 48], sizes = [8, 16], strides = [1, 1]} : vector<8x64xbf16> to vector<8x16xbf16>
    %71 = vector.extract_strided_slice %20 {offsets = [0, 48], sizes = [8, 16], strides = [1, 1]} : vector<8x64xbf16> to vector<8x16xbf16>
    %cst_27 = arith.constant dense<0.000000e+00> : vector<8x8xf32>
    %72 = tpu.matmul %69, %70, %cst_27 {dimension_numbers = #tpu.dot_dimension_numbers<[1], [1], [0], [0], [0, 0, 1, 0], [], []>} : vector<8x16xbf16>, vector<8x16xbf16>, vector<8x8xf32> -> vector<8x8xf32>
    %cst_28 = arith.constant dense<0xFF800000> : vector<8xf32>
    %73 = vector.multi_reduction <maximumf>, %72, %cst_28 [1] : vector<8x8xf32> to vector<8xf32>
    %74 = vector.shape_cast %73 : vector<8xf32> to vector<8x1xf32>
    %75 = vector.broadcast %74 : vector<8x1xf32> to vector<8x8xf32>
    %76 = arith.subf %72, %75 : vector<8x8xf32>
    %77 = math.exp %76 : vector<8x8xf32>
    %cst_29 = arith.constant dense<0.000000e+00> : vector<8xf32>
    %78 = vector.multi_reduction <add>, %77, %cst_29 [1] : vector<8x8xf32> to vector<8xf32>
    %79 = vector.shape_cast %78 : vector<8xf32> to vector<8x1xf32>
    %80 = tpu.reciprocal %79 {approx = true} : vector<8x1xf32> -> vector<8x1xf32>
    %81 = vector.broadcast %80 : vector<8x1xf32> to vector<8x8xf32>
    %82 = arith.mulf %77, %81 : vector<8x8xf32>
    %83 = arith.truncf %82 : vector<8x8xf32> to vector<8x8xbf16>
    %cst_30 = arith.constant dense<0.000000e+00> : vector<8x16xf32>
    %84 = tpu.matmul %83, %71, %cst_30 {dimension_numbers = #tpu.dot_dimension_numbers<[1], [0], [0], [1], [0, 0, 1, 1], [], []>} : vector<8x8xbf16>, vector<8x16xbf16>, vector<8x16xf32> -> vector<8x16xf32>
    %85 = tpu.concatenate %36, %52, %68, %84 in 1 : vector<8x16xf32>, vector<8x16xf32>, vector<8x16xf32>, vector<8x16xf32> -> vector<8x64xf32>
    %86 = arith.truncf %85 : vector<8x64xf32> to vector<8x64xbf16>
    %c0_31 = arith.constant 0 : index
    %c0_32 = arith.constant 0 : index
    %c0_33 = arith.constant 0 : index
    %87 = vector.load %arg5[%c0_31, %c0_32, %c0_33] : memref<2x64x64xbf16, #tpu.memory_space<vmem>>, vector<1x64x64xbf16>
    %88 = vector.shape_cast %87 : vector<1x64x64xbf16> to vector<64x64xbf16>
    %cst_34 = arith.constant dense<0.000000e+00> : vector<8x64xf32>
    %89 = tpu.matmul %86, %88, %cst_34 {dimension_numbers = #tpu.dot_dimension_numbers<[1], [0], [0], [1], [0, 0, 1, 1], [], []>} : vector<8x64xbf16>, vector<64x64xbf16>, vector<8x64xf32> -> vector<8x64xf32>
    %c0_35 = arith.constant 0 : index
    %c0_36 = arith.constant 0 : index
    %c0_37 = arith.constant 0 : index
    %90 = vector.load %arg6[%c0_35, %c0_36, %c0_37] : memref<2x1x64xf32, #tpu.memory_space<vmem>>, vector<1x1x64xf32>
    %91 = vector.shape_cast %90 : vector<1x1x64xf32> to vector<1x64xf32>
    %92 = vector.broadcast %91 : vector<1x64xf32> to vector<8x64xf32>
    %93 = arith.addf %89, %92 : vector<8x64xf32>
    %94 = arith.addf %0, %93 : vector<8x64xf32>
    %cst_38 = arith.constant dense<0.000000e+00> : vector<8xf32>
    %95 = vector.multi_reduction <add>, %94, %cst_38 [1] : vector<8x64xf32> to vector<8xf32>
    %96 = vector.shape_cast %95 : vector<8xf32> to vector<8x1xf32>
    %cst_39 = arith.constant 6.400000e+01 : f32
    %97 = vector.broadcast %cst_39 : f32 to vector<8x1xf32>
    %98 = arith.divf %96, %97 : vector<8x1xf32>
    %99 = vector.broadcast %98 : vector<8x1xf32> to vector<8x64xf32>
    %100 = arith.subf %94, %99 : vector<8x64xf32>
    %101 = arith.mulf %100, %100 : vector<8x64xf32>
    %cst_40 = arith.constant dense<0.000000e+00> : vector<8xf32>
    %102 = vector.multi_reduction <add>, %101, %cst_40 [1] : vector<8x64xf32> to vector<8xf32>
    %103 = vector.shape_cast %102 : vector<8xf32> to vector<8x1xf32>
    %cst_41 = arith.constant 6.400000e+01 : f32
    %104 = vector.broadcast %cst_41 : f32 to vector<8x1xf32>
    %105 = arith.divf %103, %104 : vector<8x1xf32>
    %106 = vector.broadcast %98 : vector<8x1xf32> to vector<8x64xf32>
    %107 = arith.subf %94, %106 : vector<8x64xf32>
    %cst_42 = arith.constant 9.99999974E-6 : f32
    %108 = vector.broadcast %cst_42 : f32 to vector<8x1xf32>
    %109 = arith.addf %105, %108 : vector<8x1xf32>
    %110 = math.rsqrt %109 : vector<8x1xf32>
    %111 = vector.broadcast %110 : vector<8x1xf32> to vector<8x64xf32>
    %112 = arith.mulf %107, %111 : vector<8x64xf32>
    %113 = vector.broadcast %4 : vector<1x64xf32> to vector<8x64xf32>
    %114 = arith.mulf %112, %113 : vector<8x64xf32>
    %115 = vector.broadcast %6 : vector<1x64xf32> to vector<8x64xf32>
    %116 = arith.addf %114, %115 : vector<8x64xf32>
    %117 = arith.truncf %116 : vector<8x64xf32> to vector<8x64xbf16>
    %c0_43 = arith.constant 0 : index
    %c0_44 = arith.constant 0 : index
    %c0_45 = arith.constant 0 : index
    %118 = vector.load %arg7[%c0_43, %c0_44, %c0_45] : memref<2x64x64xbf16, #tpu.memory_space<vmem>>, vector<1x64x64xbf16>
    %119 = vector.shape_cast %118 : vector<1x64x64xbf16> to vector<64x64xbf16>
    %cst_46 = arith.constant dense<0.000000e+00> : vector<8x64xf32>
    %120 = tpu.matmul %117, %119, %cst_46 {dimension_numbers = #tpu.dot_dimension_numbers<[1], [0], [0], [1], [0, 0, 1, 1], [], []>} : vector<8x64xbf16>, vector<64x64xbf16>, vector<8x64xf32> -> vector<8x64xf32>
    %c0_47 = arith.constant 0 : index
    %c0_48 = arith.constant 0 : index
    %c0_49 = arith.constant 0 : index
    %121 = vector.load %arg8[%c0_47, %c0_48, %c0_49] : memref<2x1x64xf32, #tpu.memory_space<vmem>>, vector<1x1x64xf32>
    %122 = vector.shape_cast %121 : vector<1x1x64xf32> to vector<1x64xf32>
    %123 = vector.broadcast %122 : vector<1x64xf32> to vector<8x64xf32>
    %124 = arith.addf %120, %123 : vector<8x64xf32>
    %c0_50 = arith.constant 0 : index
    %c0_51 = arith.constant 0 : index
    %c0_52 = arith.constant 0 : index
    %125 = vector.load %arg9[%c0_50, %c0_51, %c0_52] : memref<2x64x128xbf16, #tpu.memory_space<vmem>>, vector<1x64x128xbf16>
    %126 = vector.shape_cast %125 : vector<1x64x128xbf16> to vector<64x128xbf16>
    %cst_53 = arith.constant dense<0.000000e+00> : vector<16x128xf32>
    %127 = tpu.matmul %2, %126, %cst_53 {dimension_numbers = #tpu.dot_dimension_numbers<[1], [0], [0], [1], [0, 0, 1, 1], [], []>} : vector<16x64xbf16>, vector<64x128xbf16>, vector<16x128xf32> -> vector<16x128xf32>
    %c0_54 = arith.constant 0 : index
    %c0_55 = arith.constant 0 : index
    %c0_56 = arith.constant 0 : index
    %128 = vector.load %arg10[%c0_54, %c0_55, %c0_56] : memref<2x1x128xf32, #tpu.memory_space<vmem>>, vector<1x1x128xf32>
    %129 = vector.shape_cast %128 : vector<1x1x128xf32> to vector<1x128xf32>
    %130 = vector.broadcast %129 : vector<1x128xf32> to vector<16x128xf32>
    %131 = arith.addf %127, %130 : vector<16x128xf32>
    %132 = vector.extract_strided_slice %131 {offsets = [0, 0], sizes = [16, 64], strides = [1, 1]} : vector<16x128xf32> to vector<16x64xf32>
    %133 = vector.extract_strided_slice %131 {offsets = [0, 64], sizes = [16, 64], strides = [1, 1]} : vector<16x128xf32> to vector<16x64xf32>
    %134 = arith.truncf %124 : vector<8x64xf32> to vector<8x64xbf16>
    %135 = arith.truncf %132 : vector<16x64xf32> to vector<16x64xbf16>
    %136 = arith.truncf %133 : vector<16x64xf32> to vector<16x64xbf16>
    %137 = vector.extract_strided_slice %134 {offsets = [0, 0], sizes = [8, 16], strides = [1, 1]} : vector<8x64xbf16> to vector<8x16xbf16>
    %138 = vector.extract_strided_slice %135 {offsets = [0, 0], sizes = [16, 16], strides = [1, 1]} : vector<16x64xbf16> to vector<16x16xbf16>
    %139 = vector.extract_strided_slice %136 {offsets = [0, 0], sizes = [16, 16], strides = [1, 1]} : vector<16x64xbf16> to vector<16x16xbf16>
    %cst_57 = arith.constant dense<0.000000e+00> : vector<8x16xf32>
    %140 = tpu.matmul %137, %138, %cst_57 {dimension_numbers = #tpu.dot_dimension_numbers<[1], [1], [0], [0], [0, 0, 1, 0], [], []>} : vector<8x16xbf16>, vector<16x16xbf16>, vector<8x16xf32> -> vector<8x16xf32>
    %cst_58 = arith.constant dense<0xFF800000> : vector<8xf32>
    %141 = vector.multi_reduction <maximumf>, %140, %cst_58 [1] : vector<8x16xf32> to vector<8xf32>
    %142 = vector.shape_cast %141 : vector<8xf32> to vector<8x1xf32>
    %143 = vector.broadcast %142 : vector<8x1xf32> to vector<8x16xf32>
    %144 = arith.subf %140, %143 : vector<8x16xf32>
    %145 = math.exp %144 : vector<8x16xf32>
    %cst_59 = arith.constant dense<0.000000e+00> : vector<8xf32>
    %146 = vector.multi_reduction <add>, %145, %cst_59 [1] : vector<8x16xf32> to vector<8xf32>
    %147 = vector.shape_cast %146 : vector<8xf32> to vector<8x1xf32>
    %148 = tpu.reciprocal %147 {approx = true} : vector<8x1xf32> -> vector<8x1xf32>
    %149 = vector.broadcast %148 : vector<8x1xf32> to vector<8x16xf32>
    %150 = arith.mulf %145, %149 : vector<8x16xf32>
    %151 = arith.truncf %150 : vector<8x16xf32> to vector<8x16xbf16>
    %cst_60 = arith.constant dense<0.000000e+00> : vector<8x16xf32>
    %152 = tpu.matmul %151, %139, %cst_60 {dimension_numbers = #tpu.dot_dimension_numbers<[1], [0], [0], [1], [0, 0, 1, 1], [], []>} : vector<8x16xbf16>, vector<16x16xbf16>, vector<8x16xf32> -> vector<8x16xf32>
    %153 = vector.extract_strided_slice %134 {offsets = [0, 16], sizes = [8, 16], strides = [1, 1]} : vector<8x64xbf16> to vector<8x16xbf16>
    %154 = vector.extract_strided_slice %135 {offsets = [0, 16], sizes = [16, 16], strides = [1, 1]} : vector<16x64xbf16> to vector<16x16xbf16>
    %155 = vector.extract_strided_slice %136 {offsets = [0, 16], sizes = [16, 16], strides = [1, 1]} : vector<16x64xbf16> to vector<16x16xbf16>
    %cst_61 = arith.constant dense<0.000000e+00> : vector<8x16xf32>
    %156 = tpu.matmul %153, %154, %cst_61 {dimension_numbers = #tpu.dot_dimension_numbers<[1], [1], [0], [0], [0, 0, 1, 0], [], []>} : vector<8x16xbf16>, vector<16x16xbf16>, vector<8x16xf32> -> vector<8x16xf32>
    %cst_62 = arith.constant dense<0xFF800000> : vector<8xf32>
    %157 = vector.multi_reduction <maximumf>, %156, %cst_62 [1] : vector<8x16xf32> to vector<8xf32>
    %158 = vector.shape_cast %157 : vector<8xf32> to vector<8x1xf32>
    %159 = vector.broadcast %158 : vector<8x1xf32> to vector<8x16xf32>
    %160 = arith.subf %156, %159 : vector<8x16xf32>
    %161 = math.exp %160 : vector<8x16xf32>
    %cst_63 = arith.constant dense<0.000000e+00> : vector<8xf32>
    %162 = vector.multi_reduction <add>, %161, %cst_63 [1] : vector<8x16xf32> to vector<8xf32>
    %163 = vector.shape_cast %162 : vector<8xf32> to vector<8x1xf32>
    %164 = tpu.reciprocal %163 {approx = true} : vector<8x1xf32> -> vector<8x1xf32>
    %165 = vector.broadcast %164 : vector<8x1xf32> to vector<8x16xf32>
    %166 = arith.mulf %161, %165 : vector<8x16xf32>
    %167 = arith.truncf %166 : vector<8x16xf32> to vector<8x16xbf16>
    %cst_64 = arith.constant dense<0.000000e+00> : vector<8x16xf32>
    %168 = tpu.matmul %167, %155, %cst_64 {dimension_numbers = #tpu.dot_dimension_numbers<[1], [0], [0], [1], [0, 0, 1, 1], [], []>} : vector<8x16xbf16>, vector<16x16xbf16>, vector<8x16xf32> -> vector<8x16xf32>
    %169 = vector.extract_strided_slice %134 {offsets = [0, 32], sizes = [8, 16], strides = [1, 1]} : vector<8x64xbf16> to vector<8x16xbf16>
    %170 = vector.extract_strided_slice %135 {offsets = [0, 32], sizes = [16, 16], strides = [1, 1]} : vector<16x64xbf16> to vector<16x16xbf16>
    %171 = vector.extract_strided_slice %136 {offsets = [0, 32], sizes = [16, 16], strides = [1, 1]} : vector<16x64xbf16> to vector<16x16xbf16>
    %cst_65 = arith.constant dense<0.000000e+00> : vector<8x16xf32>
    %172 = tpu.matmul %169, %170, %cst_65 {dimension_numbers = #tpu.dot_dimension_numbers<[1], [1], [0], [0], [0, 0, 1, 0], [], []>} : vector<8x16xbf16>, vector<16x16xbf16>, vector<8x16xf32> -> vector<8x16xf32>
    %cst_66 = arith.constant dense<0xFF800000> : vector<8xf32>
    %173 = vector.multi_reduction <maximumf>, %172, %cst_66 [1] : vector<8x16xf32> to vector<8xf32>
    %174 = vector.shape_cast %173 : vector<8xf32> to vector<8x1xf32>
    %175 = vector.broadcast %174 : vector<8x1xf32> to vector<8x16xf32>
    %176 = arith.subf %172, %175 : vector<8x16xf32>
    %177 = math.exp %176 : vector<8x16xf32>
    %cst_67 = arith.constant dense<0.000000e+00> : vector<8xf32>
    %178 = vector.multi_reduction <add>, %177, %cst_67 [1] : vector<8x16xf32> to vector<8xf32>
    %179 = vector.shape_cast %178 : vector<8xf32> to vector<8x1xf32>
    %180 = tpu.reciprocal %179 {approx = true} : vector<8x1xf32> -> vector<8x1xf32>
    %181 = vector.broadcast %180 : vector<8x1xf32> to vector<8x16xf32>
    %182 = arith.mulf %177, %181 : vector<8x16xf32>
    %183 = arith.truncf %182 : vector<8x16xf32> to vector<8x16xbf16>
    %cst_68 = arith.constant dense<0.000000e+00> : vector<8x16xf32>
    %184 = tpu.matmul %183, %171, %cst_68 {dimension_numbers = #tpu.dot_dimension_numbers<[1], [0], [0], [1], [0, 0, 1, 1], [], []>} : vector<8x16xbf16>, vector<16x16xbf16>, vector<8x16xf32> -> vector<8x16xf32>
    %185 = vector.extract_strided_slice %134 {offsets = [0, 48], sizes = [8, 16], strides = [1, 1]} : vector<8x64xbf16> to vector<8x16xbf16>
    %186 = vector.extract_strided_slice %135 {offsets = [0, 48], sizes = [16, 16], strides = [1, 1]} : vector<16x64xbf16> to vector<16x16xbf16>
    %187 = vector.extract_strided_slice %136 {offsets = [0, 48], sizes = [16, 16], strides = [1, 1]} : vector<16x64xbf16> to vector<16x16xbf16>
    %cst_69 = arith.constant dense<0.000000e+00> : vector<8x16xf32>
    %188 = tpu.matmul %185, %186, %cst_69 {dimension_numbers = #tpu.dot_dimension_numbers<[1], [1], [0], [0], [0, 0, 1, 0], [], []>} : vector<8x16xbf16>, vector<16x16xbf16>, vector<8x16xf32> -> vector<8x16xf32>
    %cst_70 = arith.constant dense<0xFF800000> : vector<8xf32>
    %189 = vector.multi_reduction <maximumf>, %188, %cst_70 [1] : vector<8x16xf32> to vector<8xf32>
    %190 = vector.shape_cast %189 : vector<8xf32> to vector<8x1xf32>
    %191 = vector.broadcast %190 : vector<8x1xf32> to vector<8x16xf32>
    %192 = arith.subf %188, %191 : vector<8x16xf32>
    %193 = math.exp %192 : vector<8x16xf32>
    %cst_71 = arith.constant dense<0.000000e+00> : vector<8xf32>
    %194 = vector.multi_reduction <add>, %193, %cst_71 [1] : vector<8x16xf32> to vector<8xf32>
    %195 = vector.shape_cast %194 : vector<8xf32> to vector<8x1xf32>
    %196 = tpu.reciprocal %195 {approx = true} : vector<8x1xf32> -> vector<8x1xf32>
    %197 = vector.broadcast %196 : vector<8x1xf32> to vector<8x16xf32>
    %198 = arith.mulf %193, %197 : vector<8x16xf32>
    %199 = arith.truncf %198 : vector<8x16xf32> to vector<8x16xbf16>
    %cst_72 = arith.constant dense<0.000000e+00> : vector<8x16xf32>
    %200 = tpu.matmul %199, %187, %cst_72 {dimension_numbers = #tpu.dot_dimension_numbers<[1], [0], [0], [1], [0, 0, 1, 1], [], []>} : vector<8x16xbf16>, vector<16x16xbf16>, vector<8x16xf32> -> vector<8x16xf32>
    %201 = tpu.concatenate %152, %168, %184, %200 in 1 : vector<8x16xf32>, vector<8x16xf32>, vector<8x16xf32>, vector<8x16xf32> -> vector<8x64xf32>
    %202 = arith.truncf %201 : vector<8x64xf32> to vector<8x64xbf16>
    %c0_73 = arith.constant 0 : index
    %c0_74 = arith.constant 0 : index
    %c0_75 = arith.constant 0 : index
    %203 = vector.load %arg11[%c0_73, %c0_74, %c0_75] : memref<2x64x64xbf16, #tpu.memory_space<vmem>>, vector<1x64x64xbf16>
    %204 = vector.shape_cast %203 : vector<1x64x64xbf16> to vector<64x64xbf16>
    %cst_76 = arith.constant dense<0.000000e+00> : vector<8x64xf32>
    %205 = tpu.matmul %202, %204, %cst_76 {dimension_numbers = #tpu.dot_dimension_numbers<[1], [0], [0], [1], [0, 0, 1, 1], [], []>} : vector<8x64xbf16>, vector<64x64xbf16>, vector<8x64xf32> -> vector<8x64xf32>
    %c0_77 = arith.constant 0 : index
    %c0_78 = arith.constant 0 : index
    %c0_79 = arith.constant 0 : index
    %206 = vector.load %arg12[%c0_77, %c0_78, %c0_79] : memref<2x1x64xf32, #tpu.memory_space<vmem>>, vector<1x1x64xf32>
    %207 = vector.shape_cast %206 : vector<1x1x64xf32> to vector<1x64xf32>
    %208 = vector.broadcast %207 : vector<1x64xf32> to vector<8x64xf32>
    %209 = arith.addf %205, %208 : vector<8x64xf32>
    %210 = arith.addf %116, %209 : vector<8x64xf32>
    %cst_80 = arith.constant dense<0.000000e+00> : vector<8xf32>
    %211 = vector.multi_reduction <add>, %210, %cst_80 [1] : vector<8x64xf32> to vector<8xf32>
    %212 = vector.shape_cast %211 : vector<8xf32> to vector<8x1xf32>
    %cst_81 = arith.constant 6.400000e+01 : f32
    %213 = vector.broadcast %cst_81 : f32 to vector<8x1xf32>
    %214 = arith.divf %212, %213 : vector<8x1xf32>
    %215 = vector.broadcast %214 : vector<8x1xf32> to vector<8x64xf32>
    %216 = arith.subf %210, %215 : vector<8x64xf32>
    %217 = arith.mulf %216, %216 : vector<8x64xf32>
    %cst_82 = arith.constant dense<0.000000e+00> : vector<8xf32>
    %218 = vector.multi_reduction <add>, %217, %cst_82 [1] : vector<8x64xf32> to vector<8xf32>
    %219 = vector.shape_cast %218 : vector<8xf32> to vector<8x1xf32>
    %cst_83 = arith.constant 6.400000e+01 : f32
    %220 = vector.broadcast %cst_83 : f32 to vector<8x1xf32>
    %221 = arith.divf %219, %220 : vector<8x1xf32>
    %222 = vector.broadcast %214 : vector<8x1xf32> to vector<8x64xf32>
    %223 = arith.subf %210, %222 : vector<8x64xf32>
    %cst_84 = arith.constant 9.99999974E-6 : f32
    %224 = vector.broadcast %cst_84 : f32 to vector<8x1xf32>
    %225 = arith.addf %221, %224 : vector<8x1xf32>
    %226 = math.rsqrt %225 : vector<8x1xf32>
    %227 = vector.broadcast %226 : vector<8x1xf32> to vector<8x64xf32>
    %228 = arith.mulf %223, %227 : vector<8x64xf32>
    %229 = vector.broadcast %4 : vector<1x64xf32> to vector<8x64xf32>
    %230 = arith.mulf %228, %229 : vector<8x64xf32>
    %231 = vector.broadcast %6 : vector<1x64xf32> to vector<8x64xf32>
    %232 = arith.addf %230, %231 : vector<8x64xf32>
    %233 = arith.truncf %232 : vector<8x64xf32> to vector<8x64xbf16>
    %c0_85 = arith.constant 0 : index
    %c0_86 = arith.constant 0 : index
    %c0_87 = arith.constant 0 : index
    %234 = vector.load %arg13[%c0_85, %c0_86, %c0_87] : memref<2x64x128xbf16, #tpu.memory_space<vmem>>, vector<1x64x128xbf16>
    %235 = vector.shape_cast %234 : vector<1x64x128xbf16> to vector<64x128xbf16>
    %cst_88 = arith.constant dense<0.000000e+00> : vector<8x128xf32>
    %236 = tpu.matmul %233, %235, %cst_88 {dimension_numbers = #tpu.dot_dimension_numbers<[1], [0], [0], [1], [0, 0, 1, 1], [], []>} : vector<8x64xbf16>, vector<64x128xbf16>, vector<8x128xf32> -> vector<8x128xf32>
    %c0_89 = arith.constant 0 : index
    %c0_90 = arith.constant 0 : index
    %c0_91 = arith.constant 0 : index
    %237 = vector.load %arg14[%c0_89, %c0_90, %c0_91] : memref<2x1x128xf32, #tpu.memory_space<vmem>>, vector<1x1x128xf32>
    %238 = vector.shape_cast %237 : vector<1x1x128xf32> to vector<1x128xf32>
    %239 = vector.broadcast %238 : vector<1x128xf32> to vector<8x128xf32>
    %240 = arith.addf %236, %239 : vector<8x128xf32>
    %cst_92 = arith.constant 0.000000e+00 : f32
    %241 = vector.broadcast %cst_92 : f32 to vector<8x128xf32>
    %242 = arith.maximumf %240, %241 : vector<8x128xf32>
    %243 = arith.truncf %242 : vector<8x128xf32> to vector<8x128xbf16>
    %c0_93 = arith.constant 0 : index
    %c0_94 = arith.constant 0 : index
    %c0_95 = arith.constant 0 : index
    %244 = vector.load %arg15[%c0_93, %c0_94, %c0_95] : memref<2x128x64xbf16, #tpu.memory_space<vmem>>, vector<1x128x64xbf16>
    %245 = vector.shape_cast %244 : vector<1x128x64xbf16> to vector<128x64xbf16>
    %cst_96 = arith.constant dense<0.000000e+00> : vector<8x64xf32>
    %246 = tpu.matmul %243, %245, %cst_96 {dimension_numbers = #tpu.dot_dimension_numbers<[1], [0], [0], [1], [0, 0, 1, 1], [], []>} : vector<8x128xbf16>, vector<128x64xbf16>, vector<8x64xf32> -> vector<8x64xf32>
    %c0_97 = arith.constant 0 : index
    %c0_98 = arith.constant 0 : index
    %c0_99 = arith.constant 0 : index
    %247 = vector.load %arg16[%c0_97, %c0_98, %c0_99] : memref<2x1x64xf32, #tpu.memory_space<vmem>>, vector<1x1x64xf32>
    %248 = vector.shape_cast %247 : vector<1x1x64xf32> to vector<1x64xf32>
    %249 = vector.broadcast %248 : vector<1x64xf32> to vector<8x64xf32>
    %250 = arith.addf %246, %249 : vector<8x64xf32>
    %251 = arith.addf %232, %250 : vector<8x64xf32>
    %cst_100 = arith.constant dense<0.000000e+00> : vector<8xf32>
    %252 = vector.multi_reduction <add>, %251, %cst_100 [1] : vector<8x64xf32> to vector<8xf32>
    %253 = vector.shape_cast %252 : vector<8xf32> to vector<8x1xf32>
    %cst_101 = arith.constant 6.400000e+01 : f32
    %254 = vector.broadcast %cst_101 : f32 to vector<8x1xf32>
    %255 = arith.divf %253, %254 : vector<8x1xf32>
    %256 = vector.broadcast %255 : vector<8x1xf32> to vector<8x64xf32>
    %257 = arith.subf %251, %256 : vector<8x64xf32>
    %258 = arith.mulf %257, %257 : vector<8x64xf32>
    %cst_102 = arith.constant dense<0.000000e+00> : vector<8xf32>
    %259 = vector.multi_reduction <add>, %258, %cst_102 [1] : vector<8x64xf32> to vector<8xf32>
    %260 = vector.shape_cast %259 : vector<8xf32> to vector<8x1xf32>
    %cst_103 = arith.constant 6.400000e+01 : f32
    %261 = vector.broadcast %cst_103 : f32 to vector<8x1xf32>
    %262 = arith.divf %260, %261 : vector<8x1xf32>
    %263 = vector.broadcast %255 : vector<8x1xf32> to vector<8x64xf32>
    %264 = arith.subf %251, %263 : vector<8x64xf32>
    %cst_104 = arith.constant 9.99999974E-6 : f32
    %265 = vector.broadcast %cst_104 : f32 to vector<8x1xf32>
    %266 = arith.addf %262, %265 : vector<8x1xf32>
    %267 = math.rsqrt %266 : vector<8x1xf32>
    %268 = vector.broadcast %267 : vector<8x1xf32> to vector<8x64xf32>
    %269 = arith.mulf %264, %268 : vector<8x64xf32>
    %270 = vector.broadcast %4 : vector<1x64xf32> to vector<8x64xf32>
    %271 = arith.mulf %269, %270 : vector<8x64xf32>
    %272 = vector.broadcast %6 : vector<1x64xf32> to vector<8x64xf32>
    %273 = arith.addf %271, %272 : vector<8x64xf32>
    %c1 = arith.constant 1 : index
    %c0_105 = arith.constant 0 : index
    %c0_106 = arith.constant 0 : index
    %274 = vector.load %arg17[%c1, %c0_105, %c0_106] : memref<2x1x64xf32, #tpu.memory_space<vmem>>, vector<1x1x64xf32>
    %275 = vector.shape_cast %274 : vector<1x1x64xf32> to vector<1x64xf32>
    %c1_107 = arith.constant 1 : index
    %c0_108 = arith.constant 0 : index
    %c0_109 = arith.constant 0 : index
    %276 = vector.load %arg18[%c1_107, %c0_108, %c0_109] : memref<2x1x64xf32, #tpu.memory_space<vmem>>, vector<1x1x64xf32>
    %277 = vector.shape_cast %276 : vector<1x1x64xf32> to vector<1x64xf32>
    %278 = arith.truncf %273 : vector<8x64xf32> to vector<8x64xbf16>
    %c1_110 = arith.constant 1 : index
    %c0_111 = arith.constant 0 : index
    %c0_112 = arith.constant 0 : index
    %279 = vector.load %arg3[%c1_110, %c0_111, %c0_112] : memref<2x64x192xbf16, #tpu.memory_space<vmem>>, vector<1x64x192xbf16>
    %280 = vector.shape_cast %279 : vector<1x64x192xbf16> to vector<64x192xbf16>
    %cst_113 = arith.constant dense<0.000000e+00> : vector<8x192xf32>
    %281 = tpu.matmul %278, %280, %cst_113 {dimension_numbers = #tpu.dot_dimension_numbers<[1], [0], [0], [1], [0, 0, 1, 1], [], []>} : vector<8x64xbf16>, vector<64x192xbf16>, vector<8x192xf32> -> vector<8x192xf32>
    %c1_114 = arith.constant 1 : index
    %c0_115 = arith.constant 0 : index
    %c0_116 = arith.constant 0 : index
    %282 = vector.load %arg4[%c1_114, %c0_115, %c0_116] : memref<2x1x192xf32, #tpu.memory_space<vmem>>, vector<1x1x192xf32>
    %283 = vector.shape_cast %282 : vector<1x1x192xf32> to vector<1x192xf32>
    %284 = vector.broadcast %283 : vector<1x192xf32> to vector<8x192xf32>
    %285 = arith.addf %281, %284 : vector<8x192xf32>
    %286 = vector.extract_strided_slice %285 {offsets = [0, 0], sizes = [8, 64], strides = [1, 1]} : vector<8x192xf32> to vector<8x64xf32>
    %287 = vector.extract_strided_slice %285 {offsets = [0, 64], sizes = [8, 64], strides = [1, 1]} : vector<8x192xf32> to vector<8x64xf32>
    %288 = vector.extract_strided_slice %285 {offsets = [0, 128], sizes = [8, 64], strides = [1, 1]} : vector<8x192xf32> to vector<8x64xf32>
    %289 = arith.truncf %286 : vector<8x64xf32> to vector<8x64xbf16>
    %290 = arith.truncf %287 : vector<8x64xf32> to vector<8x64xbf16>
    %291 = arith.truncf %288 : vector<8x64xf32> to vector<8x64xbf16>
    %292 = vector.extract_strided_slice %289 {offsets = [0, 0], sizes = [8, 16], strides = [1, 1]} : vector<8x64xbf16> to vector<8x16xbf16>
    %293 = vector.extract_strided_slice %290 {offsets = [0, 0], sizes = [8, 16], strides = [1, 1]} : vector<8x64xbf16> to vector<8x16xbf16>
    %294 = vector.extract_strided_slice %291 {offsets = [0, 0], sizes = [8, 16], strides = [1, 1]} : vector<8x64xbf16> to vector<8x16xbf16>
    %cst_117 = arith.constant dense<0.000000e+00> : vector<8x8xf32>
    %295 = tpu.matmul %292, %293, %cst_117 {dimension_numbers = #tpu.dot_dimension_numbers<[1], [1], [0], [0], [0, 0, 1, 0], [], []>} : vector<8x16xbf16>, vector<8x16xbf16>, vector<8x8xf32> -> vector<8x8xf32>
    %cst_118 = arith.constant dense<0xFF800000> : vector<8xf32>
    %296 = vector.multi_reduction <maximumf>, %295, %cst_118 [1] : vector<8x8xf32> to vector<8xf32>
    %297 = vector.shape_cast %296 : vector<8xf32> to vector<8x1xf32>
    %298 = vector.broadcast %297 : vector<8x1xf32> to vector<8x8xf32>
    %299 = arith.subf %295, %298 : vector<8x8xf32>
    %300 = math.exp %299 : vector<8x8xf32>
    %cst_119 = arith.constant dense<0.000000e+00> : vector<8xf32>
    %301 = vector.multi_reduction <add>, %300, %cst_119 [1] : vector<8x8xf32> to vector<8xf32>
    %302 = vector.shape_cast %301 : vector<8xf32> to vector<8x1xf32>
    %303 = tpu.reciprocal %302 {approx = true} : vector<8x1xf32> -> vector<8x1xf32>
    %304 = vector.broadcast %303 : vector<8x1xf32> to vector<8x8xf32>
    %305 = arith.mulf %300, %304 : vector<8x8xf32>
    %306 = arith.truncf %305 : vector<8x8xf32> to vector<8x8xbf16>
    %cst_120 = arith.constant dense<0.000000e+00> : vector<8x16xf32>
    %307 = tpu.matmul %306, %294, %cst_120 {dimension_numbers = #tpu.dot_dimension_numbers<[1], [0], [0], [1], [0, 0, 1, 1], [], []>} : vector<8x8xbf16>, vector<8x16xbf16>, vector<8x16xf32> -> vector<8x16xf32>
    %308 = vector.extract_strided_slice %289 {offsets = [0, 16], sizes = [8, 16], strides = [1, 1]} : vector<8x64xbf16> to vector<8x16xbf16>
    %309 = vector.extract_strided_slice %290 {offsets = [0, 16], sizes = [8, 16], strides = [1, 1]} : vector<8x64xbf16> to vector<8x16xbf16>
    %310 = vector.extract_strided_slice %291 {offsets = [0, 16], sizes = [8, 16], strides = [1, 1]} : vector<8x64xbf16> to vector<8x16xbf16>
    %cst_121 = arith.constant dense<0.000000e+00> : vector<8x8xf32>
    %311 = tpu.matmul %308, %309, %cst_121 {dimension_numbers = #tpu.dot_dimension_numbers<[1], [1], [0], [0], [0, 0, 1, 0], [], []>} : vector<8x16xbf16>, vector<8x16xbf16>, vector<8x8xf32> -> vector<8x8xf32>
    %cst_122 = arith.constant dense<0xFF800000> : vector<8xf32>
    %312 = vector.multi_reduction <maximumf>, %311, %cst_122 [1] : vector<8x8xf32> to vector<8xf32>
    %313 = vector.shape_cast %312 : vector<8xf32> to vector<8x1xf32>
    %314 = vector.broadcast %313 : vector<8x1xf32> to vector<8x8xf32>
    %315 = arith.subf %311, %314 : vector<8x8xf32>
    %316 = math.exp %315 : vector<8x8xf32>
    %cst_123 = arith.constant dense<0.000000e+00> : vector<8xf32>
    %317 = vector.multi_reduction <add>, %316, %cst_123 [1] : vector<8x8xf32> to vector<8xf32>
    %318 = vector.shape_cast %317 : vector<8xf32> to vector<8x1xf32>
    %319 = tpu.reciprocal %318 {approx = true} : vector<8x1xf32> -> vector<8x1xf32>
    %320 = vector.broadcast %319 : vector<8x1xf32> to vector<8x8xf32>
    %321 = arith.mulf %316, %320 : vector<8x8xf32>
    %322 = arith.truncf %321 : vector<8x8xf32> to vector<8x8xbf16>
    %cst_124 = arith.constant dense<0.000000e+00> : vector<8x16xf32>
    %323 = tpu.matmul %322, %310, %cst_124 {dimension_numbers = #tpu.dot_dimension_numbers<[1], [0], [0], [1], [0, 0, 1, 1], [], []>} : vector<8x8xbf16>, vector<8x16xbf16>, vector<8x16xf32> -> vector<8x16xf32>
    %324 = vector.extract_strided_slice %289 {offsets = [0, 32], sizes = [8, 16], strides = [1, 1]} : vector<8x64xbf16> to vector<8x16xbf16>
    %325 = vector.extract_strided_slice %290 {offsets = [0, 32], sizes = [8, 16], strides = [1, 1]} : vector<8x64xbf16> to vector<8x16xbf16>
    %326 = vector.extract_strided_slice %291 {offsets = [0, 32], sizes = [8, 16], strides = [1, 1]} : vector<8x64xbf16> to vector<8x16xbf16>
    %cst_125 = arith.constant dense<0.000000e+00> : vector<8x8xf32>
    %327 = tpu.matmul %324, %325, %cst_125 {dimension_numbers = #tpu.dot_dimension_numbers<[1], [1], [0], [0], [0, 0, 1, 0], [], []>} : vector<8x16xbf16>, vector<8x16xbf16>, vector<8x8xf32> -> vector<8x8xf32>
    %cst_126 = arith.constant dense<0xFF800000> : vector<8xf32>
    %328 = vector.multi_reduction <maximumf>, %327, %cst_126 [1] : vector<8x8xf32> to vector<8xf32>
    %329 = vector.shape_cast %328 : vector<8xf32> to vector<8x1xf32>
    %330 = vector.broadcast %329 : vector<8x1xf32> to vector<8x8xf32>
    %331 = arith.subf %327, %330 : vector<8x8xf32>
    %332 = math.exp %331 : vector<8x8xf32>
    %cst_127 = arith.constant dense<0.000000e+00> : vector<8xf32>
    %333 = vector.multi_reduction <add>, %332, %cst_127 [1] : vector<8x8xf32> to vector<8xf32>
    %334 = vector.shape_cast %333 : vector<8xf32> to vector<8x1xf32>
    %335 = tpu.reciprocal %334 {approx = true} : vector<8x1xf32> -> vector<8x1xf32>
    %336 = vector.broadcast %335 : vector<8x1xf32> to vector<8x8xf32>
    %337 = arith.mulf %332, %336 : vector<8x8xf32>
    %338 = arith.truncf %337 : vector<8x8xf32> to vector<8x8xbf16>
    %cst_128 = arith.constant dense<0.000000e+00> : vector<8x16xf32>
    %339 = tpu.matmul %338, %326, %cst_128 {dimension_numbers = #tpu.dot_dimension_numbers<[1], [0], [0], [1], [0, 0, 1, 1], [], []>} : vector<8x8xbf16>, vector<8x16xbf16>, vector<8x16xf32> -> vector<8x16xf32>
    %340 = vector.extract_strided_slice %289 {offsets = [0, 48], sizes = [8, 16], strides = [1, 1]} : vector<8x64xbf16> to vector<8x16xbf16>
    %341 = vector.extract_strided_slice %290 {offsets = [0, 48], sizes = [8, 16], strides = [1, 1]} : vector<8x64xbf16> to vector<8x16xbf16>
    %342 = vector.extract_strided_slice %291 {offsets = [0, 48], sizes = [8, 16], strides = [1, 1]} : vector<8x64xbf16> to vector<8x16xbf16>
    %cst_129 = arith.constant dense<0.000000e+00> : vector<8x8xf32>
    %343 = tpu.matmul %340, %341, %cst_129 {dimension_numbers = #tpu.dot_dimension_numbers<[1], [1], [0], [0], [0, 0, 1, 0], [], []>} : vector<8x16xbf16>, vector<8x16xbf16>, vector<8x8xf32> -> vector<8x8xf32>
    %cst_130 = arith.constant dense<0xFF800000> : vector<8xf32>
    %344 = vector.multi_reduction <maximumf>, %343, %cst_130 [1] : vector<8x8xf32> to vector<8xf32>
    %345 = vector.shape_cast %344 : vector<8xf32> to vector<8x1xf32>
    %346 = vector.broadcast %345 : vector<8x1xf32> to vector<8x8xf32>
    %347 = arith.subf %343, %346 : vector<8x8xf32>
    %348 = math.exp %347 : vector<8x8xf32>
    %cst_131 = arith.constant dense<0.000000e+00> : vector<8xf32>
    %349 = vector.multi_reduction <add>, %348, %cst_131 [1] : vector<8x8xf32> to vector<8xf32>
    %350 = vector.shape_cast %349 : vector<8xf32> to vector<8x1xf32>
    %351 = tpu.reciprocal %350 {approx = true} : vector<8x1xf32> -> vector<8x1xf32>
    %352 = vector.broadcast %351 : vector<8x1xf32> to vector<8x8xf32>
    %353 = arith.mulf %348, %352 : vector<8x8xf32>
    %354 = arith.truncf %353 : vector<8x8xf32> to vector<8x8xbf16>
    %cst_132 = arith.constant dense<0.000000e+00> : vector<8x16xf32>
    %355 = tpu.matmul %354, %342, %cst_132 {dimension_numbers = #tpu.dot_dimension_numbers<[1], [0], [0], [1], [0, 0, 1, 1], [], []>} : vector<8x8xbf16>, vector<8x16xbf16>, vector<8x16xf32> -> vector<8x16xf32>
    %356 = tpu.concatenate %307, %323, %339, %355 in 1 : vector<8x16xf32>, vector<8x16xf32>, vector<8x16xf32>, vector<8x16xf32> -> vector<8x64xf32>
    %357 = arith.truncf %356 : vector<8x64xf32> to vector<8x64xbf16>
    %c1_133 = arith.constant 1 : index
    %c0_134 = arith.constant 0 : index
    %c0_135 = arith.constant 0 : index
    %358 = vector.load %arg5[%c1_133, %c0_134, %c0_135] : memref<2x64x64xbf16, #tpu.memory_space<vmem>>, vector<1x64x64xbf16>
    %359 = vector.shape_cast %358 : vector<1x64x64xbf16> to vector<64x64xbf16>
    %cst_136 = arith.constant dense<0.000000e+00> : vector<8x64xf32>
    %360 = tpu.matmul %357, %359, %cst_136 {dimension_numbers = #tpu.dot_dimension_numbers<[1], [0], [0], [1], [0, 0, 1, 1], [], []>} : vector<8x64xbf16>, vector<64x64xbf16>, vector<8x64xf32> -> vector<8x64xf32>
    %c1_137 = arith.constant 1 : index
    %c0_138 = arith.constant 0 : index
    %c0_139 = arith.constant 0 : index
    %361 = vector.load %arg6[%c1_137, %c0_138, %c0_139] : memref<2x1x64xf32, #tpu.memory_space<vmem>>, vector<1x1x64xf32>
    %362 = vector.shape_cast %361 : vector<1x1x64xf32> to vector<1x64xf32>
    %363 = vector.broadcast %362 : vector<1x64xf32> to vector<8x64xf32>
    %364 = arith.addf %360, %363 : vector<8x64xf32>
    %365 = arith.addf %273, %364 : vector<8x64xf32>
    %cst_140 = arith.constant dense<0.000000e+00> : vector<8xf32>
    %366 = vector.multi_reduction <add>, %365, %cst_140 [1] : vector<8x64xf32> to vector<8xf32>
    %367 = vector.shape_cast %366 : vector<8xf32> to vector<8x1xf32>
    %cst_141 = arith.constant 6.400000e+01 : f32
    %368 = vector.broadcast %cst_141 : f32 to vector<8x1xf32>
    %369 = arith.divf %367, %368 : vector<8x1xf32>
    %370 = vector.broadcast %369 : vector<8x1xf32> to vector<8x64xf32>
    %371 = arith.subf %365, %370 : vector<8x64xf32>
    %372 = arith.mulf %371, %371 : vector<8x64xf32>
    %cst_142 = arith.constant dense<0.000000e+00> : vector<8xf32>
    %373 = vector.multi_reduction <add>, %372, %cst_142 [1] : vector<8x64xf32> to vector<8xf32>
    %374 = vector.shape_cast %373 : vector<8xf32> to vector<8x1xf32>
    %cst_143 = arith.constant 6.400000e+01 : f32
    %375 = vector.broadcast %cst_143 : f32 to vector<8x1xf32>
    %376 = arith.divf %374, %375 : vector<8x1xf32>
    %377 = vector.broadcast %369 : vector<8x1xf32> to vector<8x64xf32>
    %378 = arith.subf %365, %377 : vector<8x64xf32>
    %cst_144 = arith.constant 9.99999974E-6 : f32
    %379 = vector.broadcast %cst_144 : f32 to vector<8x1xf32>
    %380 = arith.addf %376, %379 : vector<8x1xf32>
    %381 = math.rsqrt %380 : vector<8x1xf32>
    %382 = vector.broadcast %381 : vector<8x1xf32> to vector<8x64xf32>
    %383 = arith.mulf %378, %382 : vector<8x64xf32>
    %384 = vector.broadcast %275 : vector<1x64xf32> to vector<8x64xf32>
    %385 = arith.mulf %383, %384 : vector<8x64xf32>
    %386 = vector.broadcast %277 : vector<1x64xf32> to vector<8x64xf32>
    %387 = arith.addf %385, %386 : vector<8x64xf32>
    %388 = arith.truncf %387 : vector<8x64xf32> to vector<8x64xbf16>
    %c1_145 = arith.constant 1 : index
    %c0_146 = arith.constant 0 : index
    %c0_147 = arith.constant 0 : index
    %389 = vector.load %arg7[%c1_145, %c0_146, %c0_147] : memref<2x64x64xbf16, #tpu.memory_space<vmem>>, vector<1x64x64xbf16>
    %390 = vector.shape_cast %389 : vector<1x64x64xbf16> to vector<64x64xbf16>
    %cst_148 = arith.constant dense<0.000000e+00> : vector<8x64xf32>
    %391 = tpu.matmul %388, %390, %cst_148 {dimension_numbers = #tpu.dot_dimension_numbers<[1], [0], [0], [1], [0, 0, 1, 1], [], []>} : vector<8x64xbf16>, vector<64x64xbf16>, vector<8x64xf32> -> vector<8x64xf32>
    %c1_149 = arith.constant 1 : index
    %c0_150 = arith.constant 0 : index
    %c0_151 = arith.constant 0 : index
    %392 = vector.load %arg8[%c1_149, %c0_150, %c0_151] : memref<2x1x64xf32, #tpu.memory_space<vmem>>, vector<1x1x64xf32>
    %393 = vector.shape_cast %392 : vector<1x1x64xf32> to vector<1x64xf32>
    %394 = vector.broadcast %393 : vector<1x64xf32> to vector<8x64xf32>
    %395 = arith.addf %391, %394 : vector<8x64xf32>
    %c1_152 = arith.constant 1 : index
    %c0_153 = arith.constant 0 : index
    %c0_154 = arith.constant 0 : index
    %396 = vector.load %arg9[%c1_152, %c0_153, %c0_154] : memref<2x64x128xbf16, #tpu.memory_space<vmem>>, vector<1x64x128xbf16>
    %397 = vector.shape_cast %396 : vector<1x64x128xbf16> to vector<64x128xbf16>
    %cst_155 = arith.constant dense<0.000000e+00> : vector<16x128xf32>
    %398 = tpu.matmul %2, %397, %cst_155 {dimension_numbers = #tpu.dot_dimension_numbers<[1], [0], [0], [1], [0, 0, 1, 1], [], []>} : vector<16x64xbf16>, vector<64x128xbf16>, vector<16x128xf32> -> vector<16x128xf32>
    %c1_156 = arith.constant 1 : index
    %c0_157 = arith.constant 0 : index
    %c0_158 = arith.constant 0 : index
    %399 = vector.load %arg10[%c1_156, %c0_157, %c0_158] : memref<2x1x128xf32, #tpu.memory_space<vmem>>, vector<1x1x128xf32>
    %400 = vector.shape_cast %399 : vector<1x1x128xf32> to vector<1x128xf32>
    %401 = vector.broadcast %400 : vector<1x128xf32> to vector<16x128xf32>
    %402 = arith.addf %398, %401 : vector<16x128xf32>
    %403 = vector.extract_strided_slice %402 {offsets = [0, 0], sizes = [16, 64], strides = [1, 1]} : vector<16x128xf32> to vector<16x64xf32>
    %404 = vector.extract_strided_slice %402 {offsets = [0, 64], sizes = [16, 64], strides = [1, 1]} : vector<16x128xf32> to vector<16x64xf32>
    %405 = arith.truncf %395 : vector<8x64xf32> to vector<8x64xbf16>
    %406 = arith.truncf %403 : vector<16x64xf32> to vector<16x64xbf16>
    %407 = arith.truncf %404 : vector<16x64xf32> to vector<16x64xbf16>
    %408 = vector.extract_strided_slice %405 {offsets = [0, 0], sizes = [8, 16], strides = [1, 1]} : vector<8x64xbf16> to vector<8x16xbf16>
    %409 = vector.extract_strided_slice %406 {offsets = [0, 0], sizes = [16, 16], strides = [1, 1]} : vector<16x64xbf16> to vector<16x16xbf16>
    %410 = vector.extract_strided_slice %407 {offsets = [0, 0], sizes = [16, 16], strides = [1, 1]} : vector<16x64xbf16> to vector<16x16xbf16>
    %cst_159 = arith.constant dense<0.000000e+00> : vector<8x16xf32>
    %411 = tpu.matmul %408, %409, %cst_159 {dimension_numbers = #tpu.dot_dimension_numbers<[1], [1], [0], [0], [0, 0, 1, 0], [], []>} : vector<8x16xbf16>, vector<16x16xbf16>, vector<8x16xf32> -> vector<8x16xf32>
    %cst_160 = arith.constant dense<0xFF800000> : vector<8xf32>
    %412 = vector.multi_reduction <maximumf>, %411, %cst_160 [1] : vector<8x16xf32> to vector<8xf32>
    %413 = vector.shape_cast %412 : vector<8xf32> to vector<8x1xf32>
    %414 = vector.broadcast %413 : vector<8x1xf32> to vector<8x16xf32>
    %415 = arith.subf %411, %414 : vector<8x16xf32>
    %416 = math.exp %415 : vector<8x16xf32>
    %cst_161 = arith.constant dense<0.000000e+00> : vector<8xf32>
    %417 = vector.multi_reduction <add>, %416, %cst_161 [1] : vector<8x16xf32> to vector<8xf32>
    %418 = vector.shape_cast %417 : vector<8xf32> to vector<8x1xf32>
    %419 = tpu.reciprocal %418 {approx = true} : vector<8x1xf32> -> vector<8x1xf32>
    %420 = vector.broadcast %419 : vector<8x1xf32> to vector<8x16xf32>
    %421 = arith.mulf %416, %420 : vector<8x16xf32>
    %422 = arith.truncf %421 : vector<8x16xf32> to vector<8x16xbf16>
    %cst_162 = arith.constant dense<0.000000e+00> : vector<8x16xf32>
    %423 = tpu.matmul %422, %410, %cst_162 {dimension_numbers = #tpu.dot_dimension_numbers<[1], [0], [0], [1], [0, 0, 1, 1], [], []>} : vector<8x16xbf16>, vector<16x16xbf16>, vector<8x16xf32> -> vector<8x16xf32>
    %424 = vector.extract_strided_slice %405 {offsets = [0, 16], sizes = [8, 16], strides = [1, 1]} : vector<8x64xbf16> to vector<8x16xbf16>
    %425 = vector.extract_strided_slice %406 {offsets = [0, 16], sizes = [16, 16], strides = [1, 1]} : vector<16x64xbf16> to vector<16x16xbf16>
    %426 = vector.extract_strided_slice %407 {offsets = [0, 16], sizes = [16, 16], strides = [1, 1]} : vector<16x64xbf16> to vector<16x16xbf16>
    %cst_163 = arith.constant dense<0.000000e+00> : vector<8x16xf32>
    %427 = tpu.matmul %424, %425, %cst_163 {dimension_numbers = #tpu.dot_dimension_numbers<[1], [1], [0], [0], [0, 0, 1, 0], [], []>} : vector<8x16xbf16>, vector<16x16xbf16>, vector<8x16xf32> -> vector<8x16xf32>
    %cst_164 = arith.constant dense<0xFF800000> : vector<8xf32>
    %428 = vector.multi_reduction <maximumf>, %427, %cst_164 [1] : vector<8x16xf32> to vector<8xf32>
    %429 = vector.shape_cast %428 : vector<8xf32> to vector<8x1xf32>
    %430 = vector.broadcast %429 : vector<8x1xf32> to vector<8x16xf32>
    %431 = arith.subf %427, %430 : vector<8x16xf32>
    %432 = math.exp %431 : vector<8x16xf32>
    %cst_165 = arith.constant dense<0.000000e+00> : vector<8xf32>
    %433 = vector.multi_reduction <add>, %432, %cst_165 [1] : vector<8x16xf32> to vector<8xf32>
    %434 = vector.shape_cast %433 : vector<8xf32> to vector<8x1xf32>
    %435 = tpu.reciprocal %434 {approx = true} : vector<8x1xf32> -> vector<8x1xf32>
    %436 = vector.broadcast %435 : vector<8x1xf32> to vector<8x16xf32>
    %437 = arith.mulf %432, %436 : vector<8x16xf32>
    %438 = arith.truncf %437 : vector<8x16xf32> to vector<8x16xbf16>
    %cst_166 = arith.constant dense<0.000000e+00> : vector<8x16xf32>
    %439 = tpu.matmul %438, %426, %cst_166 {dimension_numbers = #tpu.dot_dimension_numbers<[1], [0], [0], [1], [0, 0, 1, 1], [], []>} : vector<8x16xbf16>, vector<16x16xbf16>, vector<8x16xf32> -> vector<8x16xf32>
    %440 = vector.extract_strided_slice %405 {offsets = [0, 32], sizes = [8, 16], strides = [1, 1]} : vector<8x64xbf16> to vector<8x16xbf16>
    %441 = vector.extract_strided_slice %406 {offsets = [0, 32], sizes = [16, 16], strides = [1, 1]} : vector<16x64xbf16> to vector<16x16xbf16>
    %442 = vector.extract_strided_slice %407 {offsets = [0, 32], sizes = [16, 16], strides = [1, 1]} : vector<16x64xbf16> to vector<16x16xbf16>
    %cst_167 = arith.constant dense<0.000000e+00> : vector<8x16xf32>
    %443 = tpu.matmul %440, %441, %cst_167 {dimension_numbers = #tpu.dot_dimension_numbers<[1], [1], [0], [0], [0, 0, 1, 0], [], []>} : vector<8x16xbf16>, vector<16x16xbf16>, vector<8x16xf32> -> vector<8x16xf32>
    %cst_168 = arith.constant dense<0xFF800000> : vector<8xf32>
    %444 = vector.multi_reduction <maximumf>, %443, %cst_168 [1] : vector<8x16xf32> to vector<8xf32>
    %445 = vector.shape_cast %444 : vector<8xf32> to vector<8x1xf32>
    %446 = vector.broadcast %445 : vector<8x1xf32> to vector<8x16xf32>
    %447 = arith.subf %443, %446 : vector<8x16xf32>
    %448 = math.exp %447 : vector<8x16xf32>
    %cst_169 = arith.constant dense<0.000000e+00> : vector<8xf32>
    %449 = vector.multi_reduction <add>, %448, %cst_169 [1] : vector<8x16xf32> to vector<8xf32>
    %450 = vector.shape_cast %449 : vector<8xf32> to vector<8x1xf32>
    %451 = tpu.reciprocal %450 {approx = true} : vector<8x1xf32> -> vector<8x1xf32>
    %452 = vector.broadcast %451 : vector<8x1xf32> to vector<8x16xf32>
    %453 = arith.mulf %448, %452 : vector<8x16xf32>
    %454 = arith.truncf %453 : vector<8x16xf32> to vector<8x16xbf16>
    %cst_170 = arith.constant dense<0.000000e+00> : vector<8x16xf32>
    %455 = tpu.matmul %454, %442, %cst_170 {dimension_numbers = #tpu.dot_dimension_numbers<[1], [0], [0], [1], [0, 0, 1, 1], [], []>} : vector<8x16xbf16>, vector<16x16xbf16>, vector<8x16xf32> -> vector<8x16xf32>
    %456 = vector.extract_strided_slice %405 {offsets = [0, 48], sizes = [8, 16], strides = [1, 1]} : vector<8x64xbf16> to vector<8x16xbf16>
    %457 = vector.extract_strided_slice %406 {offsets = [0, 48], sizes = [16, 16], strides = [1, 1]} : vector<16x64xbf16> to vector<16x16xbf16>
    %458 = vector.extract_strided_slice %407 {offsets = [0, 48], sizes = [16, 16], strides = [1, 1]} : vector<16x64xbf16> to vector<16x16xbf16>
    %cst_171 = arith.constant dense<0.000000e+00> : vector<8x16xf32>
    %459 = tpu.matmul %456, %457, %cst_171 {dimension_numbers = #tpu.dot_dimension_numbers<[1], [1], [0], [0], [0, 0, 1, 0], [], []>} : vector<8x16xbf16>, vector<16x16xbf16>, vector<8x16xf32> -> vector<8x16xf32>
    %cst_172 = arith.constant dense<0xFF800000> : vector<8xf32>
    %460 = vector.multi_reduction <maximumf>, %459, %cst_172 [1] : vector<8x16xf32> to vector<8xf32>
    %461 = vector.shape_cast %460 : vector<8xf32> to vector<8x1xf32>
    %462 = vector.broadcast %461 : vector<8x1xf32> to vector<8x16xf32>
    %463 = arith.subf %459, %462 : vector<8x16xf32>
    %464 = math.exp %463 : vector<8x16xf32>
    %cst_173 = arith.constant dense<0.000000e+00> : vector<8xf32>
    %465 = vector.multi_reduction <add>, %464, %cst_173 [1] : vector<8x16xf32> to vector<8xf32>
    %466 = vector.shape_cast %465 : vector<8xf32> to vector<8x1xf32>
    %467 = tpu.reciprocal %466 {approx = true} : vector<8x1xf32> -> vector<8x1xf32>
    %468 = vector.broadcast %467 : vector<8x1xf32> to vector<8x16xf32>
    %469 = arith.mulf %464, %468 : vector<8x16xf32>
    %470 = arith.truncf %469 : vector<8x16xf32> to vector<8x16xbf16>
    %cst_174 = arith.constant dense<0.000000e+00> : vector<8x16xf32>
    %471 = tpu.matmul %470, %458, %cst_174 {dimension_numbers = #tpu.dot_dimension_numbers<[1], [0], [0], [1], [0, 0, 1, 1], [], []>} : vector<8x16xbf16>, vector<16x16xbf16>, vector<8x16xf32> -> vector<8x16xf32>
    %472 = tpu.concatenate %423, %439, %455, %471 in 1 : vector<8x16xf32>, vector<8x16xf32>, vector<8x16xf32>, vector<8x16xf32> -> vector<8x64xf32>
    %473 = arith.truncf %472 : vector<8x64xf32> to vector<8x64xbf16>
    %c1_175 = arith.constant 1 : index
    %c0_176 = arith.constant 0 : index
    %c0_177 = arith.constant 0 : index
    %474 = vector.load %arg11[%c1_175, %c0_176, %c0_177] : memref<2x64x64xbf16, #tpu.memory_space<vmem>>, vector<1x64x64xbf16>
    %475 = vector.shape_cast %474 : vector<1x64x64xbf16> to vector<64x64xbf16>
    %cst_178 = arith.constant dense<0.000000e+00> : vector<8x64xf32>
    %476 = tpu.matmul %473, %475, %cst_178 {dimension_numbers = #tpu.dot_dimension_numbers<[1], [0], [0], [1], [0, 0, 1, 1], [], []>} : vector<8x64xbf16>, vector<64x64xbf16>, vector<8x64xf32> -> vector<8x64xf32>
    %c1_179 = arith.constant 1 : index
    %c0_180 = arith.constant 0 : index
    %c0_181 = arith.constant 0 : index
    %477 = vector.load %arg12[%c1_179, %c0_180, %c0_181] : memref<2x1x64xf32, #tpu.memory_space<vmem>>, vector<1x1x64xf32>
    %478 = vector.shape_cast %477 : vector<1x1x64xf32> to vector<1x64xf32>
    %479 = vector.broadcast %478 : vector<1x64xf32> to vector<8x64xf32>
    %480 = arith.addf %476, %479 : vector<8x64xf32>
    %481 = arith.addf %387, %480 : vector<8x64xf32>
    %cst_182 = arith.constant dense<0.000000e+00> : vector<8xf32>
    %482 = vector.multi_reduction <add>, %481, %cst_182 [1] : vector<8x64xf32> to vector<8xf32>
    %483 = vector.shape_cast %482 : vector<8xf32> to vector<8x1xf32>
    %cst_183 = arith.constant 6.400000e+01 : f32
    %484 = vector.broadcast %cst_183 : f32 to vector<8x1xf32>
    %485 = arith.divf %483, %484 : vector<8x1xf32>
    %486 = vector.broadcast %485 : vector<8x1xf32> to vector<8x64xf32>
    %487 = arith.subf %481, %486 : vector<8x64xf32>
    %488 = arith.mulf %487, %487 : vector<8x64xf32>
    %cst_184 = arith.constant dense<0.000000e+00> : vector<8xf32>
    %489 = vector.multi_reduction <add>, %488, %cst_184 [1] : vector<8x64xf32> to vector<8xf32>
    %490 = vector.shape_cast %489 : vector<8xf32> to vector<8x1xf32>
    %cst_185 = arith.constant 6.400000e+01 : f32
    %491 = vector.broadcast %cst_185 : f32 to vector<8x1xf32>
    %492 = arith.divf %490, %491 : vector<8x1xf32>
    %493 = vector.broadcast %485 : vector<8x1xf32> to vector<8x64xf32>
    %494 = arith.subf %481, %493 : vector<8x64xf32>
    %cst_186 = arith.constant 9.99999974E-6 : f32
    %495 = vector.broadcast %cst_186 : f32 to vector<8x1xf32>
    %496 = arith.addf %492, %495 : vector<8x1xf32>
    %497 = math.rsqrt %496 : vector<8x1xf32>
    %498 = vector.broadcast %497 : vector<8x1xf32> to vector<8x64xf32>
    %499 = arith.mulf %494, %498 : vector<8x64xf32>
    %500 = vector.broadcast %275 : vector<1x64xf32> to vector<8x64xf32>
    %501 = arith.mulf %499, %500 : vector<8x64xf32>
    %502 = vector.broadcast %277 : vector<1x64xf32> to vector<8x64xf32>
    %503 = arith.addf %501, %502 : vector<8x64xf32>
    %504 = arith.truncf %503 : vector<8x64xf32> to vector<8x64xbf16>
    %c1_187 = arith.constant 1 : index
    %c0_188 = arith.constant 0 : index
    %c0_189 = arith.constant 0 : index
    %505 = vector.load %arg13[%c1_187, %c0_188, %c0_189] : memref<2x64x128xbf16, #tpu.memory_space<vmem>>, vector<1x64x128xbf16>
    %506 = vector.shape_cast %505 : vector<1x64x128xbf16> to vector<64x128xbf16>
    %cst_190 = arith.constant dense<0.000000e+00> : vector<8x128xf32>
    %507 = tpu.matmul %504, %506, %cst_190 {dimension_numbers = #tpu.dot_dimension_numbers<[1], [0], [0], [1], [0, 0, 1, 1], [], []>} : vector<8x64xbf16>, vector<64x128xbf16>, vector<8x128xf32> -> vector<8x128xf32>
    %c1_191 = arith.constant 1 : index
    %c0_192 = arith.constant 0 : index
    %c0_193 = arith.constant 0 : index
    %508 = vector.load %arg14[%c1_191, %c0_192, %c0_193] : memref<2x1x128xf32, #tpu.memory_space<vmem>>, vector<1x1x128xf32>
    %509 = vector.shape_cast %508 : vector<1x1x128xf32> to vector<1x128xf32>
    %510 = vector.broadcast %509 : vector<1x128xf32> to vector<8x128xf32>
    %511 = arith.addf %507, %510 : vector<8x128xf32>
    %cst_194 = arith.constant 0.000000e+00 : f32
    %512 = vector.broadcast %cst_194 : f32 to vector<8x128xf32>
    %513 = arith.maximumf %511, %512 : vector<8x128xf32>
    %514 = arith.truncf %513 : vector<8x128xf32> to vector<8x128xbf16>
    %c1_195 = arith.constant 1 : index
    %c0_196 = arith.constant 0 : index
    %c0_197 = arith.constant 0 : index
    %515 = vector.load %arg15[%c1_195, %c0_196, %c0_197] : memref<2x128x64xbf16, #tpu.memory_space<vmem>>, vector<1x128x64xbf16>
    %516 = vector.shape_cast %515 : vector<1x128x64xbf16> to vector<128x64xbf16>
    %cst_198 = arith.constant dense<0.000000e+00> : vector<8x64xf32>
    %517 = tpu.matmul %514, %516, %cst_198 {dimension_numbers = #tpu.dot_dimension_numbers<[1], [0], [0], [1], [0, 0, 1, 1], [], []>} : vector<8x128xbf16>, vector<128x64xbf16>, vector<8x64xf32> -> vector<8x64xf32>
    %c1_199 = arith.constant 1 : index
    %c0_200 = arith.constant 0 : index
    %c0_201 = arith.constant 0 : index
    %518 = vector.load %arg16[%c1_199, %c0_200, %c0_201] : memref<2x1x64xf32, #tpu.memory_space<vmem>>, vector<1x1x64xf32>
    %519 = vector.shape_cast %518 : vector<1x1x64xf32> to vector<1x64xf32>
    %520 = vector.broadcast %519 : vector<1x64xf32> to vector<8x64xf32>
    %521 = arith.addf %517, %520 : vector<8x64xf32>
    %522 = arith.addf %503, %521 : vector<8x64xf32>
    %cst_202 = arith.constant dense<0.000000e+00> : vector<8xf32>
    %523 = vector.multi_reduction <add>, %522, %cst_202 [1] : vector<8x64xf32> to vector<8xf32>
    %524 = vector.shape_cast %523 : vector<8xf32> to vector<8x1xf32>
    %cst_203 = arith.constant 6.400000e+01 : f32
    %525 = vector.broadcast %cst_203 : f32 to vector<8x1xf32>
    %526 = arith.divf %524, %525 : vector<8x1xf32>
    %527 = vector.broadcast %526 : vector<8x1xf32> to vector<8x64xf32>
    %528 = arith.subf %522, %527 : vector<8x64xf32>
    %529 = arith.mulf %528, %528 : vector<8x64xf32>
    %cst_204 = arith.constant dense<0.000000e+00> : vector<8xf32>
    %530 = vector.multi_reduction <add>, %529, %cst_204 [1] : vector<8x64xf32> to vector<8xf32>
    %531 = vector.shape_cast %530 : vector<8xf32> to vector<8x1xf32>
    %cst_205 = arith.constant 6.400000e+01 : f32
    %532 = vector.broadcast %cst_205 : f32 to vector<8x1xf32>
    %533 = arith.divf %531, %532 : vector<8x1xf32>
    %534 = vector.broadcast %526 : vector<8x1xf32> to vector<8x64xf32>
    %535 = arith.subf %522, %534 : vector<8x64xf32>
    %cst_206 = arith.constant 9.99999974E-6 : f32
    %536 = vector.broadcast %cst_206 : f32 to vector<8x1xf32>
    %537 = arith.addf %533, %536 : vector<8x1xf32>
    %538 = math.rsqrt %537 : vector<8x1xf32>
    %539 = vector.broadcast %538 : vector<8x1xf32> to vector<8x64xf32>
    %540 = arith.mulf %535, %539 : vector<8x64xf32>
    %541 = vector.broadcast %275 : vector<1x64xf32> to vector<8x64xf32>
    %542 = arith.mulf %540, %541 : vector<8x64xf32>
    %543 = vector.broadcast %277 : vector<1x64xf32> to vector<8x64xf32>
    %544 = arith.addf %542, %543 : vector<8x64xf32>
    %c0_207 = arith.constant 0 : index
    %c0_208 = arith.constant 0 : index
    %545 = vector.load %arg19[%c0_207, %c0_208] : memref<24x64xf32, #tpu.memory_space<vmem>>, vector<8x64xf32>
    tpu.vector_store %arg19[%c0_207, %c0_208], %544 {strides = array<i32>} : memref<24x64xf32, #tpu.memory_space<vmem>>, vector<8x64xf32>,
    %c8 = arith.constant 8 : index
    %c0_209 = arith.constant 0 : index
    %546 = vector.load %arg19[%c8, %c0_209] : memref<24x64xf32, #tpu.memory_space<vmem>>, vector<16x64xf32>
    tpu.vector_store %arg19[%c8, %c0_209], %1 {strides = array<i32>} : memref<24x64xf32, #tpu.memory_space<vmem>>, vector<16x64xf32>,
    return
  }
  func.func @transform_0(%arg0: i32) -> (i32, i32) {
    %c0_i32 = arith.constant 0 : i32
    %c0_i32_0 = arith.constant 0 : i32
    return %arg0, %c0_i32 : i32, i32
  }
  func.func @transform_1(%arg0: i32) -> (i32, i32) {
    %c0_i32 = arith.constant 0 : i32
    %c0_i32_0 = arith.constant 0 : i32
    return %arg0, %c0_i32 : i32, i32
  }
  func.func @transform_2(%arg0: i32) -> (i32, i32, i32) {
    %c0_i32 = arith.constant 0 : i32
    %c0_i32_0 = arith.constant 0 : i32
    %c0_i32_1 = arith.constant 0 : i32
    %c0_i32_2 = arith.constant 0 : i32
    return %c0_i32, %c0_i32_0, %c0_i32_1 : i32, i32, i32
  }
  func.func @transform_3(%arg0: i32) -> (i32, i32, i32) {
    %c0_i32 = arith.constant 0 : i32
    %c0_i32_0 = arith.constant 0 : i32
    %c0_i32_1 = arith.constant 0 : i32
    %c0_i32_2 = arith.constant 0 : i32
    return %c0_i32, %c0_i32_0, %c0_i32_1 : i32, i32, i32
  }
  func.func @transform_4(%arg0: i32) -> (i32, i32, i32) {
    %c0_i32 = arith.constant 0 : i32
    %c0_i32_0 = arith.constant 0 : i32
    %c0_i32_1 = arith.constant 0 : i32
    %c0_i32_2 = arith.constant 0 : i32
    return %c0_i32, %c0_i32_0, %c0_i32_1 : i32, i32, i32
  }
  func.func @transform_5(%arg0: i32) -> (i32, i32, i32) {
    %c0_i32 = arith.constant 0 : i32
    %c0_i32_0 = arith.constant 0 : i32
    %c0_i32_1 = arith.constant 0 : i32
    %c0_i32_2 = arith.constant 0 : i32
    return %c0_i32, %c0_i32_0, %c0_i32_1 : i32, i32, i32
  }
  func.func @transform_6(%arg0: i32) -> (i32, i32, i32) {
    %c0_i32 = arith.constant 0 : i32
    %c0_i32_0 = arith.constant 0 : i32
    %c0_i32_1 = arith.constant 0 : i32
    %c0_i32_2 = arith.constant 0 : i32
    return %c0_i32, %c0_i32_0, %c0_i32_1 : i32, i32, i32
  }
  func.func @transform_7(%arg0: i32) -> (i32, i32, i32) {
    %c0_i32 = arith.constant 0 : i32
    %c0_i32_0 = arith.constant 0 : i32
    %c0_i32_1 = arith.constant 0 : i32
    %c0_i32_2 = arith.constant 0 : i32
    return %c0_i32, %c0_i32_0, %c0_i32_1 : i32, i32, i32
  }
  func.func @transform_8(%arg0: i32) -> (i32, i32, i32) {
    %c0_i32 = arith.constant 0 : i32
    %c0_i32_0 = arith.constant 0 : i32
    %c0_i32_1 = arith.constant 0 : i32
    %c0_i32_2 = arith.constant 0 : i32
    return %c0_i32, %c0_i32_0, %c0_i32_1 : i32, i32, i32
  }
  func.func @transform_9(%arg0: i32) -> (i32, i32, i32) {
    %c0_i32 = arith.constant 0 : i32
    %c0_i32_0 = arith.constant 0 : i32
    %c0_i32_1 = arith.constant 0 : i32
    %c0_i32_2 = arith.constant 0 : i32
    return %c0_i32, %c0_i32_0, %c0_i32_1 : i32, i32, i32
  }
  func.func @transform_10(%arg0: i32) -> (i32, i32, i32) {
    %c0_i32 = arith.constant 0 : i32
    %c0_i32_0 = arith.constant 0 : i32
    %c0_i32_1 = arith.constant 0 : i32
    %c0_i32_2 = arith.constant 0 : i32
    return %c0_i32, %c0_i32_0, %c0_i32_1 : i32, i32, i32
  }
  func.func @transform_11(%arg0: i32) -> (i32, i32, i32) {
    %c0_i32 = arith.constant 0 : i32
    %c0_i32_0 = arith.constant 0 : i32
    %c0_i32_1 = arith.constant 0 : i32
    %c0_i32_2 = arith.constant 0 : i32
    return %c0_i32, %c0_i32_0, %c0_i32_1 : i32, i32, i32
  }
  func.func @transform_12(%arg0: i32) -> (i32, i32, i32) {
    %c0_i32 = arith.constant 0 : i32
    %c0_i32_0 = arith.constant 0 : i32
    %c0_i32_1 = arith.constant 0 : i32
    %c0_i32_2 = arith.constant 0 : i32
    return %c0_i32, %c0_i32_0, %c0_i32_1 : i32, i32, i32
  }
  func.func @transform_13(%arg0: i32) -> (i32, i32, i32) {
    %c0_i32 = arith.constant 0 : i32
    %c0_i32_0 = arith.constant 0 : i32
    %c0_i32_1 = arith.constant 0 : i32
    %c0_i32_2 = arith.constant 0 : i32
    return %c0_i32, %c0_i32_0, %c0_i32_1 : i32, i32, i32
  }
  func.func @transform_14(%arg0: i32) -> (i32, i32, i32) {
    %c0_i32 = arith.constant 0 : i32
    %c0_i32_0 = arith.constant 0 : i32
    %c0_i32_1 = arith.constant 0 : i32
    %c0_i32_2 = arith.constant 0 : i32
    return %c0_i32, %c0_i32_0, %c0_i32_1 : i32, i32, i32
  }
  func.func @transform_15(%arg0: i32) -> (i32, i32, i32) {
    %c0_i32 = arith.constant 0 : i32
    %c0_i32_0 = arith.constant 0 : i32
    %c0_i32_1 = arith.constant 0 : i32
    %c0_i32_2 = arith.constant 0 : i32
    return %c0_i32, %c0_i32_0, %c0_i32_1 : i32, i32, i32
  }
  func.func @transform_16(%arg0: i32) -> (i32, i32, i32) {
    %c0_i32 = arith.constant 0 : i32
    %c0_i32_0 = arith.constant 0 : i32
    %c0_i32_1 = arith.constant 0 : i32
    %c0_i32_2 = arith.constant 0 : i32
    return %c0_i32, %c0_i32_0, %c0_i32_1 : i32, i32, i32
  }
  func.func @transform_17(%arg0: i32) -> (i32, i32, i32) {
    %c0_i32 = arith.constant 0 : i32
    %c0_i32_0 = arith.constant 0 : i32
    %c0_i32_1 = arith.constant 0 : i32
    %c0_i32_2 = arith.constant 0 : i32
    return %c0_i32, %c0_i32_0, %c0_i32_1 : i32, i32, i32
  }
  func.func @transform_18(%arg0: i32) -> (i32, i32) {
    %c0_i32 = arith.constant 0 : i32
    %c0_i32_0 = arith.constant 0 : i32
    return %arg0, %c0_i32 : i32, i32
  }
}

</mosaic_0001>

<llo_original>
// kernel: decoder_forward.1
$region0: #{decoder_forward.1}
  #allocation0 [shape = 'u32[]', space=smem, size = 0x4, offset = 0x4, fixed_abs, tag = 'smem constant byte address 0x4 - core index']
  #allocation1 [shape = 'u32[144,128]{1,0:T(1,128)}', space=vmem, size = 0x12000, scoped, tag = 'internal scratch']
  %s0 = inlined_call_operand.vmem [shape: f32[16,64], index: 0, kind: input, shape index: {}]
  %s1 = inlined_call_operand.vmem [shape: f32[32,64], index: 1, kind: input, shape index: {}]
  %s2 = inlined_call_operand.vmem [shape: bf16[2,64,192], index: 2, kind: input, shape index: {}]
  %s3 = inlined_call_operand.vmem [shape: f32[2,1,192], index: 3, kind: input, shape index: {}]
  %s4 = inlined_call_operand.vmem [shape: bf16[2,64,64], index: 4, kind: input, shape index: {}]
  %s5 = inlined_call_operand.vmem [shape: f32[2,1,64], index: 5, kind: input, shape index: {}]
  %s6 = inlined_call_operand.vmem [shape: bf16[2,64,64], index: 6, kind: input, shape index: {}]
  %s7 = inlined_call_operand.vmem [shape: f32[2,1,64], index: 7, kind: input, shape index: {}]
  %s8 = inlined_call_operand.vmem [shape: bf16[2,64,128], index: 8, kind: input, shape index: {}]
  %s9 = inlined_call_operand.vmem [shape: f32[2,1,128], index: 9, kind: input, shape index: {}]
  %s10 = inlined_call_operand.vmem [shape: bf16[2,64,64], index: 10, kind: input, shape index: {}]
  %s11 = inlined_call_operand.vmem [shape: f32[2,1,64], index: 11, kind: input, shape index: {}]
  %s12 = inlined_call_operand.vmem [shape: bf16[2,64,128], index: 12, kind: input, shape index: {}]
  %s13 = inlined_call_operand.vmem [shape: f32[2,1,128], index: 13, kind: input, shape index: {}]
  %s14 = inlined_call_operand.vmem [shape: bf16[2,128,64], index: 14, kind: input, shape index: {}]
  %s15 = inlined_call_operand.vmem [shape: f32[2,1,64], index: 15, kind: input, shape index: {}]
  %s16 = inlined_call_operand.vmem [shape: f32[2,1,64], index: 16, kind: input, shape index: {}]
  %s17 = inlined_call_operand.vmem [shape: f32[2,1,64], index: 17, kind: input, shape index: {}]
  %s18 = inlined_call_operand.hbm [shape: f32[48,64], index: 18, kind: output, shape index: {}]
  %s19 = sld [smem:[#allocation0]]
  $region105: #{decoder_forward.1} parent=0
    _
  %s21 = ssub.s32 1, %s19
  %s22 = scalar_select 0, %s21, %s19
  $region1: #{decoder_forward.1} parent=0
    #allocation2 [shape = 'u8[24576]{0}', space=vmem, size = 0x6000, scoped, tag = 'output window, operand 0']
    #allocation3 [shape = 's32[2]{0}', space=sflag, size = 0x8, scoped, tag = 'scoped memory for decoder_forward.1']
    %23 = vsyncpa [#allocation3], 0
    %s24 = scalar_lea.sflag [#allocation3], 1
    %25 = vsyncpa %s24, 0
    loop: start=0, step=1, limit=4
    $region2: #{decoder_forward.1} parent=1 // loop_pre_header
      _
    $region3: #{decoder_forward.1} parent=1 // loop_header
      %s27 = sphi 0, %s31
      %p28 = scmp.ge.s32.totalorder %s27, 4
      %s37 = sphi 0, %s39
      %s40 = sphi 0, %s37
      %s41 = sphi 0, %s40
      %s57 = sphi 0, %s41
      %s63 = sphi 0, %s65
      %s66 = sphi 0, %s63
      %s67 = sphi 0, %s66
      %s83 = sphi 0, %s67
      %s87 = sphi 0, %s87
      %s89 = sphi 0, %s87
      %s90 = sphi 0, %s89
      %s104 = sphi 0, %s90
      %s108 = sphi 0, %s108
      %s110 = sphi 0, %s108
      %s111 = sphi 0, %s110
      %s125 = sphi 0, %s111
      %s129 = sphi 0, %s129
      %s131 = sphi 0, %s129
      %s132 = sphi 0, %s131
      %s146 = sphi 0, %s132
      %s150 = sphi 0, %s150
      %s152 = sphi 0, %s150
      %s153 = sphi 0, %s152
      %s167 = sphi 0, %s153
      %s171 = sphi 0, %s171
      %s173 = sphi 0, %s171
      %s174 = sphi 0, %s173
      %s188 = sphi 0, %s174
      %s192 = sphi 0, %s192
      %s194 = sphi 0, %s192
      %s195 = sphi 0, %s194
      %s209 = sphi 0, %s195
      %s213 = sphi 0, %s213
      %s215 = sphi 0, %s213
      %s216 = sphi 0, %s215
      %s230 = sphi 0, %s216
      %s234 = sphi 0, %s234
      %s236 = sphi 0, %s234
      %s237 = sphi 0, %s236
      %s251 = sphi 0, %s237
      %s255 = sphi 0, %s255
      %s257 = sphi 0, %s255
      %s258 = sphi 0, %s257
      %s272 = sphi 0, %s258
      %s276 = sphi 0, %s276
      %s278 = sphi 0, %s276
      %s279 = sphi 0, %s278
      %s293 = sphi 0, %s279
      %s297 = sphi 0, %s297
      %s299 = sphi 0, %s297
      %s300 = sphi 0, %s299
      %s314 = sphi 0, %s300
      %s318 = sphi 0, %s318
      %s320 = sphi 0, %s318
      %s321 = sphi 0, %s320
      %s335 = sphi 0, %s321
      %s339 = sphi 0, %s339
      %s341 = sphi 0, %s339
      %s342 = sphi 0, %s341
      %s356 = sphi 0, %s342
      %s360 = sphi 0, %s360
      %s362 = sphi 0, %s360
      %s363 = sphi 0, %s362
      %s377 = sphi 0, %s363
      %s381 = sphi 0, %s381
      %s383 = sphi 0, %s381
      %s384 = sphi 0, %s383
      %s398 = sphi 0, %s384
      %s402 = sphi 0, %s402
      %s404 = sphi 0, %s402
      %s405 = sphi 0, %s404
      %s419 = sphi 0, %s405
      %s425 = sphi 0, %s427
      %s428 = sphi 0, %s425
      %s429 = sphi 0, %s428
      %s445 = sphi 0, %s429
    $region4: #{decoder_forward.1} parent=1 // loop_header_branch
      %30 = sbr.rel (%p28) target = $region8
    $region5: #{decoder_forward.1} parent=1 // loop_body
      %s32 = ssub.s32 %s27, 1
      %s33 = ssub.s32 %s27, 2
      %s34 = sadd.s32 %s27, 1
      %s35 = ssub.s32 %s27, %s34
      %p36 = scmp.eq.s32.totalorder %s35, 0
      %s38 = sadd.s32 %s37, 1
      %s39 = scalar_select %p36, %s37, %s38
      %p42 = pneg %p36
      %p43 = scmp.eq.s32.totalorder %s27, 1
      %p44 = por %p42, %p43
      %p45 = scmp.ne.s32.totalorder %s37, %s40
      %p46 = scmp.eq.s32.totalorder %s27, 0
      %p47 = por %p45, %p46
      %p48 = scmp.ne.s32.totalorder %s37, %s40
      %p49 = scmp.eq.s32.totalorder %s32, 1
      %p50 = por %p48, %p49
      %p51 = scmp.ne.s32.totalorder %s40, %s41
      %p52 = scmp.eq.s32.totalorder %s32, 0
      %p53 = por %p51, %p52
      %p54 = scmp.ne.s32.totalorder %s40, %s41
      %p55 = scmp.eq.s32.totalorder %s33, 1
      %p56 = por %p54, %p55
      %p58 = scmp.ne.s32.totalorder %s41, %s57
      %p59 = scmp.eq.s32.totalorder %s33, 0
      %p60 = por %p58, %p59
      %s61 = ssub.s32 %s27, %s34
      %p62 = scmp.eq.s32.totalorder %s61, 0
      %s64 = sadd.s32 %s63, 1
      %s65 = scalar_select %p62, %s63, %s64
      %p68 = pneg %p62
      %p69 = scmp.eq.s32.totalorder %s27, 1
      %p70 = por %p68, %p69
      %p71 = scmp.ne.s32.totalorder %s63, %s66
      %p72 = scmp.eq.s32.totalorder %s27, 0
      %p73 = por %p71, %p72
      %p74 = scmp.ne.s32.totalorder %s63, %s66
      %p75 = scmp.eq.s32.totalorder %s32, 1
      %p76 = por %p74, %p75
      %p77 = scmp.ne.s32.totalorder %s66, %s67
      %p78 = scmp.eq.s32.totalorder %s32, 0
      %p79 = por %p77, %p78
      %p80 = scmp.ne.s32.totalorder %s66, %s67
      %p81 = scmp.eq.s32.totalorder %s33, 1
      %p82 = por %p80, %p81
      %p84 = scmp.ne.s32.totalorder %s67, %s83
      %p85 = scmp.eq.s32.totalorder %s33, 0
      %p86 = por %p84, %p85
      %s88 = sadd.s32 %s87, 1
      %p91 = scmp.eq.s32.totalorder %s27, 1
      %p92 = scmp.ne.s32.totalorder %s87, %s89
      %p93 = scmp.eq.s32.totalorder %s27, 0
      %p94 = por %p92, %p93
      %p95 = scmp.ne.s32.totalorder %s87, %s89
      %p96 = scmp.eq.s32.totalorder %s32, 1
      %p97 = por %p95, %p96
      %p98 = scmp.ne.s32.totalorder %s89, %s90
      %p99 = scmp.eq.s32.totalorder %s32, 0
      %p100 = por %p98, %p99
      %p101 = scmp.ne.s32.totalorder %s89, %s90
      %p102 = scmp.eq.s32.totalorder %s33, 1
      %p103 = por %p101, %p102
      %p105 = scmp.ne.s32.totalorder %s90, %s104
      %p106 = scmp.eq.s32.totalorder %s33, 0
      %p107 = por %p105, %p106
      %s109 = sadd.s32 %s108, 1
      %p112 = scmp.eq.s32.totalorder %s27, 1
      %p113 = scmp.ne.s32.totalorder %s108, %s110
      %p114 = scmp.eq.s32.totalorder %s27, 0
      %p115 = por %p113, %p114
      %p116 = scmp.ne.s32.totalorder %s108, %s110
      %p117 = scmp.eq.s32.totalorder %s32, 1
      %p118 = por %p116, %p117
      %p119 = scmp.ne.s32.totalorder %s110, %s111
      %p120 = scmp.eq.s32.totalorder %s32, 0
      %p121 = por %p119, %p120
      %p122 = scmp.ne.s32.totalorder %s110, %s111
      %p123 = scmp.eq.s32.totalorder %s33, 1
      %p124 = por %p122, %p123
      %p126 = scmp.ne.s32.totalorder %s111, %s125
      %p127 = scmp.eq.s32.totalorder %s33, 0
      %p128 = por %p126, %p127
      %s130 = sadd.s32 %s129, 1
      %p133 = scmp.eq.s32.totalorder %s27, 1
      %p134 = scmp.ne.s32.totalorder %s129, %s131
      %p135 = scmp.eq.s32.totalorder %s27, 0
      %p136 = por %p134, %p135
      %p137 = scmp.ne.s32.totalorder %s129, %s131
      %p138 = scmp.eq.s32.totalorder %s32, 1
      %p139 = por %p137, %p138
      %p140 = scmp.ne.s32.totalorder %s131, %s132
      %p141 = scmp.eq.s32.totalorder %s32, 0
      %p142 = por %p140, %p141
      %p143 = scmp.ne.s32.totalorder %s131, %s132
      %p144 = scmp.eq.s32.totalorder %s33, 1
      %p145 = por %p143, %p144
      %p147 = scmp.ne.s32.totalorder %s132, %s146
      %p148 = scmp.eq.s32.totalorder %s33, 0
      %p149 = por %p147, %p148
      %s151 = sadd.s32 %s150, 1
      %p154 = scmp.eq.s32.totalorder %s27, 1
      %p155 = scmp.ne.s32.totalorder %s150, %s152
      %p156 = scmp.eq.s32.totalorder %s27, 0
      %p157 = por %p155, %p156
      %p158 = scmp.ne.s32.totalorder %s150, %s152
      %p159 = scmp.eq.s32.totalorder %s32, 1
      %p160 = por %p158, %p159
      %p161 = scmp.ne.s32.totalorder %s152, %s153
      %p162 = scmp.eq.s32.totalorder %s32, 0
      %p163 = por %p161, %p162
      %p164 = scmp.ne.s32.totalorder %s152, %s153
      %p165 = scmp.eq.s32.totalorder %s33, 1
      %p166 = por %p164, %p165
      %p168 = scmp.ne.s32.totalorder %s153, %s167
      %p169 = scmp.eq.s32.totalorder %s33, 0
      %p170 = por %p168, %p169
      %s172 = sadd.s32 %s171, 1
      %p175 = scmp.eq.s32.totalorder %s27, 1
      %p176 = scmp.ne.s32.totalorder %s171, %s173
      %p177 = scmp.eq.s32.totalorder %s27, 0
      %p178 = por %p176, %p177
      %p179 = scmp.ne.s32.totalorder %s171, %s173
      %p180 = scmp.eq.s32.totalorder %s32, 1
      %p181 = por %p179, %p180
      %p182 = scmp.ne.s32.totalorder %s173, %s174
      %p183 = scmp.eq.s32.totalorder %s32, 0
      %p184 = por %p182, %p183
      %p185 = scmp.ne.s32.totalorder %s173, %s174
      %p186 = scmp.eq.s32.totalorder %s33, 1
      %p187 = por %p185, %p186
      %p189 = scmp.ne.s32.totalorder %s174, %s188
      %p190 = scmp.eq.s32.totalorder %s33, 0
      %p191 = por %p189, %p190
      %s193 = sadd.s32 %s192, 1
      %p196 = scmp.eq.s32.totalorder %s27, 1
      %p197 = scmp.ne.s32.totalorder %s192, %s194
      %p198 = scmp.eq.s32.totalorder %s27, 0
      %p199 = por %p197, %p198
      %p200 = scmp.ne.s32.totalorder %s192, %s194
      %p201 = scmp.eq.s32.totalorder %s32, 1
      %p202 = por %p200, %p201
      %p203 = scmp.ne.s32.totalorder %s194, %s195
      %p204 = scmp.eq.s32.totalorder %s32, 0
      %p205 = por %p203, %p204
      %p206 = scmp.ne.s32.totalorder %s194, %s195
      %p207 = scmp.eq.s32.totalorder %s33, 1
      %p208 = por %p206, %p207
      %p210 = scmp.ne.s32.totalorder %s195, %s209
      %p211 = scmp.eq.s32.totalorder %s33, 0
      %p212 = por %p210, %p211
      %s214 = sadd.s32 %s213, 1
      %p217 = scmp.eq.s32.totalorder %s27, 1
      %p218 = scmp.ne.s32.totalorder %s213, %s215
      %p219 = scmp.eq.s32.totalorder %s27, 0
      %p220 = por %p218, %p219
      %p221 = scmp.ne.s32.totalorder %s213, %s215
      %p222 = scmp.eq.s32.totalorder %s32, 1
      %p223 = por %p221, %p222
      %p224 = scmp.ne.s32.totalorder %s215, %s216
      %p225 = scmp.eq.s32.totalorder %s32, 0
      %p226 = por %p224, %p225
      %p227 = scmp.ne.s32.totalorder %s215, %s216
      %p228 = scmp.eq.s32.totalorder %s33, 1
      %p229 = por %p227, %p228
      %p231 = scmp.ne.s32.totalorder %s216, %s230
      %p232 = scmp.eq.s32.totalorder %s33, 0
      %p233 = por %p231, %p232
      %s235 = sadd.s32 %s234, 1
      %p238 = scmp.eq.s32.totalorder %s27, 1
      %p239 = scmp.ne.s32.totalorder %s234, %s236
      %p240 = scmp.eq.s32.totalorder %s27, 0
      %p241 = por %p239, %p240
      %p242 = scmp.ne.s32.totalorder %s234, %s236
      %p243 = scmp.eq.s32.totalorder %s32, 1
      %p244 = por %p242, %p243
      %p245 = scmp.ne.s32.totalorder %s236, %s237
      %p246 = scmp.eq.s32.totalorder %s32, 0
      %p247 = por %p245, %p246
      %p248 = scmp.ne.s32.totalorder %s236, %s237
      %p249 = scmp.eq.s32.totalorder %s33, 1
      %p250 = por %p248, %p249
      %p252 = scmp.ne.s32.totalorder %s237, %s251
      %p253 = scmp.eq.s32.totalorder %s33, 0
      %p254 = por %p252, %p253
      %s256 = sadd.s32 %s255, 1
      %p259 = scmp.eq.s32.totalorder %s27, 1
      %p260 = scmp.ne.s32.totalorder %s255, %s257
      %p261 = scmp.eq.s32.totalorder %s27, 0
      %p262 = por %p260, %p261
      %p263 = scmp.ne.s32.totalorder %s255, %s257
      %p264 = scmp.eq.s32.totalorder %s32, 1
      %p265 = por %p263, %p264
      %p266 = scmp.ne.s32.totalorder %s257, %s258
      %p267 = scmp.eq.s32.totalorder %s32, 0
      %p268 = por %p266, %p267
      %p269 = scmp.ne.s32.totalorder %s257, %s258
      %p270 = scmp.eq.s32.totalorder %s33, 1
      %p271 = por %p269, %p270
      %p273 = scmp.ne.s32.totalorder %s258, %s272
      %p274 = scmp.eq.s32.totalorder %s33, 0
      %p275 = por %p273, %p274
      %s277 = sadd.s32 %s276, 1
      %p280 = scmp.eq.s32.totalorder %s27, 1
      %p281 = scmp.ne.s32.totalorder %s276, %s278
      %p282 = scmp.eq.s32.totalorder %s27, 0
      %p283 = por %p281, %p282
      %p284 = scmp.ne.s32.totalorder %s276, %s278
      %p285 = scmp.eq.s32.totalorder %s32, 1
      %p286 = por %p284, %p285
      %p287 = scmp.ne.s32.totalorder %s278, %s279
      %p288 = scmp.eq.s32.totalorder %s32, 0
      %p289 = por %p287, %p288
      %p290 = scmp.ne.s32.totalorder %s278, %s279
      %p291 = scmp.eq.s32.totalorder %s33, 1
      %p292 = por %p290, %p291
      %p294 = scmp.ne.s32.totalorder %s279, %s293
      %p295 = scmp.eq.s32.totalorder %s33, 0
      %p296 = por %p294, %p295
      %s298 = sadd.s32 %s297, 1
      %p301 = scmp.eq.s32.totalorder %s27, 1
      %p302 = scmp.ne.s32.totalorder %s297, %s299
      %p303 = scmp.eq.s32.totalorder %s27, 0
      %p304 = por %p302, %p303
      %p305 = scmp.ne.s32.totalorder %s297, %s299
      %p306 = scmp.eq.s32.totalorder %s32, 1
      %p307 = por %p305, %p306
      %p308 = scmp.ne.s32.totalorder %s299, %s300
      %p309 = scmp.eq.s32.totalorder %s32, 0
      %p310 = por %p308, %p309
      %p311 = scmp.ne.s32.totalorder %s299, %s300
      %p312 = scmp.eq.s32.totalorder %s33, 1
      %p313 = por %p311, %p312
      %p315 = scmp.ne.s32.totalorder %s300, %s314
      %p316 = scmp.eq.s32.totalorder %s33, 0
      %p317 = por %p315, %p316
      %s319 = sadd.s32 %s318, 1
      %p322 = scmp.eq.s32.totalorder %s27, 1
      %p323 = scmp.ne.s32.totalorder %s318, %s320
      %p324 = scmp.eq.s32.totalorder %s27, 0
      %p325 = por %p323, %p324
      %p326 = scmp.ne.s32.totalorder %s318, %s320
      %p327 = scmp.eq.s32.totalorder %s32, 1
      %p328 = por %p326, %p327
      %p329 = scmp.ne.s32.totalorder %s320, %s321
      %p330 = scmp.eq.s32.totalorder %s32, 0
      %p331 = por %p329, %p330
      %p332 = scmp.ne.s32.totalorder %s320, %s321
      %p333 = scmp.eq.s32.totalorder %s33, 1
      %p334 = por %p332, %p333
      %p336 = scmp.ne.s32.totalorder %s321, %s335
      %p337 = scmp.eq.s32.totalorder %s33, 0
      %p338 = por %p336, %p337
      %s340 = sadd.s32 %s339, 1
      %p343 = scmp.eq.s32.totalorder %s27, 1
      %p344 = scmp.ne.s32.totalorder %s339, %s341
      %p345 = scmp.eq.s32.totalorder %s27, 0
      %p346 = por %p344, %p345
      %p347 = scmp.ne.s32.totalorder %s339, %s341
      %p348 = scmp.eq.s32.totalorder %s32, 1
      %p349 = por %p347, %p348
      %p350 = scmp.ne.s32.totalorder %s341, %s342
      %p351 = scmp.eq.s32.totalorder %s32, 0
      %p352 = por %p350, %p351
      %p353 = scmp.ne.s32.totalorder %s341, %s342
      %p354 = scmp.eq.s32.totalorder %s33, 1
      %p355 = por %p353, %p354
      %p357 = scmp.ne.s32.totalorder %s342, %s356
      %p358 = scmp.eq.s32.totalorder %s33, 0
      %p359 = por %p357, %p358
      %s361 = sadd.s32 %s360, 1
      %p364 = scmp.eq.s32.totalorder %s27, 1
      %p365 = scmp.ne.s32.totalorder %s360, %s362
      %p366 = scmp.eq.s32.totalorder %s27, 0
      %p367 = por %p365, %p366
      %p368 = scmp.ne.s32.totalorder %s360, %s362
      %p369 = scmp.eq.s32.totalorder %s32, 1
      %p370 = por %p368, %p369
      %p371 = scmp.ne.s32.totalorder %s362, %s363
      %p372 = scmp.eq.s32.totalorder %s32, 0
      %p373 = por %p371, %p372
      %p374 = scmp.ne.s32.totalorder %s362, %s363
      %p375 = scmp.eq.s32.totalorder %s33, 1
      %p376 = por %p374, %p375
      %p378 = scmp.ne.s32.totalorder %s363, %s377
      %p379 = scmp.eq.s32.totalorder %s33, 0
      %p380 = por %p378, %p379
      %s382 = sadd.s32 %s381, 1
      %p385 = scmp.eq.s32.totalorder %s27, 1
      %p386 = scmp.ne.s32.totalorder %s381, %s383
      %p387 = scmp.eq.s32.totalorder %s27, 0
      %p388 = por %p386, %p387
      %p389 = scmp.ne.s32.totalorder %s381, %s383
      %p390 = scmp.eq.s32.totalorder %s32, 1
      %p391 = por %p389, %p390
      %p392 = scmp.ne.s32.totalorder %s383, %s384
      %p393 = scmp.eq.s32.totalorder %s32, 0
      %p394 = por %p392, %p393
      %p395 = scmp.ne.s32.totalorder %s383, %s384
      %p396 = scmp.eq.s32.totalorder %s33, 1
      %p397 = por %p395, %p396
      %p399 = scmp.ne.s32.totalorder %s384, %s398
      %p400 = scmp.eq.s32.totalorder %s33, 0
      %p401 = por %p399, %p400
      %s403 = sadd.s32 %s402, 1
      %p406 = scmp.eq.s32.totalorder %s27, 1
      %p407 = scmp.ne.s32.totalorder %s402, %s404
      %p408 = scmp.eq.s32.totalorder %s27, 0
      %p409 = por %p407, %p408
      %p410 = scmp.ne.s32.totalorder %s402, %s404
      %p411 = scmp.eq.s32.totalorder %s32, 1
      %p412 = por %p410, %p411
      %p413 = scmp.ne.s32.totalorder %s404, %s405
      %p414 = scmp.eq.s32.totalorder %s32, 0
      %p415 = por %p413, %p414
      %p416 = scmp.ne.s32.totalorder %s404, %s405
      %p417 = scmp.eq.s32.totalorder %s33, 1
      %p418 = por %p416, %p417
      %p420 = scmp.ne.s32.totalorder %s405, %s419
      %p421 = scmp.eq.s32.totalorder %s33, 0
      %p422 = por %p420, %p421
      %s423 = ssub.s32 %s27, %s34
      %p424 = scmp.eq.s32.totalorder %s423, 0
      %s426 = sadd.s32 %s425, 1
      %s427 = scalar_select %p424, %s425, %s426
      %p430 = pneg %p424
      %p431 = scmp.eq.s32.totalorder %s27, 1
      %p432 = por %p430, %p431
      %p433 = scmp.ne.s32.totalorder %s425, %s428
      %p434 = scmp.eq.s32.totalorder %s27, 0
      %p435 = por %p433, %p434
      %p436 = scmp.ne.s32.totalorder %s425, %s428
      %p437 = scmp.eq.s32.totalorder %s32, 1
      %p438 = por %p436, %p437
      %p439 = scmp.ne.s32.totalorder %s428, %s429
      %p440 = scmp.eq.s32.totalorder %s32, 0
      %p441 = por %p439, %p440
      %p442 = scmp.ne.s32.totalorder %s428, %s429
      %p443 = scmp.eq.s32.totalorder %s33, 1
      %p444 = por %p442, %p443
      %p446 = scmp.ne.s32.totalorder %s429, %s445
      %p447 = scmp.eq.s32.totalorder %s33, 0
      %p448 = por %p446, %p447
      %p449 = scmp.le.s32.totalorder 1, %s27
      %p450 = scmp.lt.s32.totalorder %s27, 3
      %p451 = pnand %p449, %p450
      %p452 = pneg %p451
      // Predicated region
      $region9: #{decoder_forward.1} parent=5 // pred_check
        _
      $region10: #{decoder_forward.1} parent=5 // pred_check_branch
        %454 = sbr.rel (%p451) target = $region12
      $region11: #{decoder_forward.1} parent=5 // pred_region
        %s455 = ssub.s32 %s27, 1
        // Predicated region
        $region13: #{decoder_forward.1} parent=11 // pred_check
          %p456 = pneg %p100
        $region14: #{decoder_forward.1} parent=11 // pred_check_branch
          %458 = sbr.rel (%p456) target = $region16
        $region15: #{decoder_forward.1} parent=11 // pred_region
          _
        $region16: #{decoder_forward.1} parent=11 // pred_fallthru
          _
        // Predicated region
        $region17: #{decoder_forward.1} parent=11 // pred_check
          %p459 = pneg %p121
        $region18: #{decoder_forward.1} parent=11 // pred_check_branch
          %461 = sbr.rel (%p459) target = $region20
        $region19: #{decoder_forward.1} parent=11 // pred_region
          _
        $region20: #{decoder_forward.1} parent=11 // pred_fallthru
          _
        // Predicated region
        $region21: #{decoder_forward.1} parent=11 // pred_check
          %p462 = pneg %p142
        $region22: #{decoder_forward.1} parent=11 // pred_check_branch
          %464 = sbr.rel (%p462) target = $region24
        $region23: #{decoder_forward.1} parent=11 // pred_region
          _
        $region24: #{decoder_forward.1} parent=11 // pred_fallthru
          _
        // Predicated region
        $region25: #{decoder_forward.1} parent=11 // pred_check
          %p465 = pneg %p163
        $region26: #{decoder_forward.1} parent=11 // pred_check_branch
          %467 = sbr.rel (%p465) target = $region28
        $region27: #{decoder_forward.1} parent=11 // pred_region
          _
        $region28: #{decoder_forward.1} parent=11 // pred_fallthru
          _
        // Predicated region
        $region29: #{decoder_forward.1} parent=11 // pred_check
          %p468 = pneg %p184
        $region30: #{decoder_forward.1} parent=11 // pred_check_branch
          %470 = sbr.rel (%p468) target = $region32
        $region31: #{decoder_forward.1} parent=11 // pred_region
          _
        $region32: #{decoder_forward.1} parent=11 // pred_fallthru
          _
        // Predicated region
        $region33: #{decoder_forward.1} parent=11 // pred_check
          %p471 = pneg %p205
        $region34: #{decoder_forward.1} parent=11 // pred_check_branch
          %473 = sbr.rel (%p471) target = $region36
        $region35: #{decoder_forward.1} parent=11 // pred_region
          _
        $region36: #{decoder_forward.1} parent=11 // pred_fallthru
          _
        // Predicated region
        $region37: #{decoder_forward.1} parent=11 // pred_check
          %p474 = pneg %p226
        $region38: #{decoder_forward.1} parent=11 // pred_check_branch
          %476 = sbr.rel (%p474) target = $region40
        $region39: #{decoder_forward.1} parent=11 // pred_region
          _
        $region40: #{decoder_forward.1} parent=11 // pred_fallthru
          _
        // Predicated region
        $region41: #{decoder_forward.1} parent=11 // pred_check
          %p477 = pneg %p247
        $region42: #{decoder_forward.1} parent=11 // pred_check_branch
          %479 = sbr.rel (%p477) target = $region44
        $region43: #{decoder_forward.1} parent=11 // pred_region
          _
        $region44: #{decoder_forward.1} parent=11 // pred_fallthru
          _
        // Predicated region
        $region45: #{decoder_forward.1} parent=11 // pred_check
          %p480 = pneg %p268
        $region46: #{decoder_forward.1} parent=11 // pred_check_branch
          %482 = sbr.rel (%p480) target = $region48
        $region47: #{decoder_forward.1} parent=11 // pred_region
          _
        $region48: #{decoder_forward.1} parent=11 // pred_fallthru
          _
        // Predicated region
        $region49: #{decoder_forward.1} parent=11 // pred_check
          %p483 = pneg %p289
        $region50: #{decoder_forward.1} parent=11 // pred_check_branch
          %485 = sbr.rel (%p483) target = $region52
        $region51: #{decoder_forward.1} parent=11 // pred_region
          _
        $region52: #{decoder_forward.1} parent=11 // pred_fallthru
          _
        // Predicated region
        $region53: #{decoder_forward.1} parent=11 // pred_check
          %p486 = pneg %p310
        $region54: #{decoder_forward.1} parent=11 // pred_check_branch
          %488 = sbr.rel (%p486) target = $region56
        $region55: #{decoder_forward.1} parent=11 // pred_region
          _
        $region56: #{decoder_forward.1} parent=11 // pred_fallthru
          _
        // Predicated region
        $region57: #{decoder_forward.1} parent=11 // pred_check
          %p489 = pneg %p331
        $region58: #{decoder_forward.1} parent=11 // pred_check_branch
          %491 = sbr.rel (%p489) target = $region60
        $region59: #{decoder_forward.1} parent=11 // pred_region
          _
        $region60: #{decoder_forward.1} parent=11 // pred_fallthru
          _
        // Predicated region
        $region61: #{decoder_forward.1} parent=11 // pred_check
          %p492 = pneg %p352
        $region62: #{decoder_forward.1} parent=11 // pred_check_branch
          %494 = sbr.rel (%p492) target = $region64
        $region63: #{decoder_forward.1} parent=11 // pred_region
          _
        $region64: #{decoder_forward.1} parent=11 // pred_fallthru
          _
        // Predicated region
        $region65: #{decoder_forward.1} parent=11 // pred_check
          %p495 = pneg %p373
        $region66: #{decoder_forward.1} parent=11 // pred_check_branch
          %497 = sbr.rel (%p495) target = $region68
        $region67: #{decoder_forward.1} parent=11 // pred_region
          _
        $region68: #{decoder_forward.1} parent=11 // pred_fallthru
          _
        // Predicated region
        $region69: #{decoder_forward.1} parent=11 // pred_check
          %p498 = pneg %p394
        $region70: #{decoder_forward.1} parent=11 // pred_check_branch
          %500 = sbr.rel (%p498) target = $region72
        $region71: #{decoder_forward.1} parent=11 // pred_region
          _
        $region72: #{decoder_forward.1} parent=11 // pred_fallthru
          _
        // Predicated region
        $region73: #{decoder_forward.1} parent=11 // pred_check
          %p501 = pneg %p415
        $region74: #{decoder_forward.1} parent=11 // pred_check_branch
          %503 = sbr.rel (%p501) target = $region76
        $region75: #{decoder_forward.1} parent=11 // pred_region
          _
        $region76: #{decoder_forward.1} parent=11 // pred_fallthru
          _
      $region12: #{decoder_forward.1} parent=5 // pred_fallthru
        _
      %p504 = scmp.lt.s32.totalorder %s27, 2
      // Predicated region
      $region77: #{decoder_forward.1} parent=5 // pred_check
        %p505 = pneg %p504
      $region78: #{decoder_forward.1} parent=5 // pred_check_branch
        %507 = sbr.rel (%p505) target = $region80
      $region79: #{decoder_forward.1} parent=5 // pred_region
        // Predicated region
        $region81: #{decoder_forward.1} parent=79 // pred_check
          %p508 = pneg %p47
        $region82: #{decoder_forward.1} parent=79 // pred_check_branch
          %510 = sbr.rel (%p508) target = $region84
        $region83: #{decoder_forward.1} parent=79 // pred_region
          %p511 = scmp.lt.s32.totalorder %s27, 1
          %s512 = scalar_select %p511, %s27, 1
          %s513 = smul.addr %s512, 8
          %s514 = scalar_lea.vmem %s0, %s513
        $region84: #{decoder_forward.1} parent=79 // pred_fallthru
          _
        // Predicated region
        $region85: #{decoder_forward.1} parent=79 // pred_check
          %p515 = pneg %p73
        $region86: #{decoder_forward.1} parent=79 // pred_check_branch
          %517 = sbr.rel (%p515) target = $region88
        $region87: #{decoder_forward.1} parent=79 // pred_region
          %s518 = smul.u32 2, %s27
          %p519 = scmp.lt.s32.totalorder %s518, 3
          %s520 = scalar_select %p519, %s518, 3
          %s521 = smul.addr %s520, 8
          %s522 = scalar_lea.vmem %s1, %s521
          %s523 = smul.u32 2, %s27
        $region88: #{decoder_forward.1} parent=79 // pred_fallthru
          _
      $region80: #{decoder_forward.1} parent=5 // pred_fallthru
        _
      %p524 = scmp.le.s32.totalorder 1, %s27
      %p525 = scmp.lt.s32.totalorder %s27, 3
      %p526 = pnand %p524, %p525
      %p527 = pneg %p526
      // Predicated region
      $region89: #{decoder_forward.1} parent=5 // pred_check
        _
      $region90: #{decoder_forward.1} parent=5 // pred_check_branch
        %529 = sbr.rel (%p526) target = $region92
      $region91: #{decoder_forward.1} parent=5 // pred_region
        %s530 = ssub.s32 %s27, 1
        %p531 = scmp.lt.s32.totalorder %s32, 1
        %s532 = scalar_select %p531, %s32, 1
        %s533 = smul.addr %s532, 8
        %s534 = scalar_lea.vmem %s0, %s533
        %p535 = pneg %p53
        %p536 = pneg %p50
        %s537 = smul.u32 2, %s32
        %p538 = scmp.lt.s32.totalorder %s537, 3
        %s539 = scalar_select %p538, %s537, 3
        %s540 = smul.addr %s539, 8
        %s541 = scalar_lea.vmem %s1, %s540
        %p542 = pneg %p79
        %p543 = pneg %p76
        %p544 = pneg %p100
        %p545 = pneg %p97
        %p546 = pneg %p121
        %p547 = pneg %p118
        %p548 = pneg %p142
        %p549 = pneg %p139
        %p550 = pneg %p163
        %p551 = pneg %p160
        %p552 = pneg %p184
        %p553 = pneg %p181
        %p554 = pneg %p205
        %p555 = pneg %p202
        %p556 = pneg %p226
        %p557 = pneg %p223
        %p558 = pneg %p247
        %p559 = pneg %p244
        %p560 = pneg %p268
        %p561 = pneg %p265
        %p562 = pneg %p289
        %p563 = pneg %p286
        %p564 = pneg %p310
        %p565 = pneg %p307
        %p566 = pneg %p331
        %p567 = pneg %p328
        %p568 = pneg %p352
        %p569 = pneg %p349
        %p570 = pneg %p373
        %p571 = pneg %p370
        %p572 = pneg %p394
        %p573 = pneg %p391
        %p574 = pneg %p415
        %p575 = pneg %p412
        %p576 = pneg %p441
        %p577 = pneg %p438
        %s578 = sand.u32 %s428, 1
        %s579 = scalar_lea.sflag [#allocation3], %s578
        %s580 = sand.u32 %s428, 1
        %s581 = smul.addr %s580, 24
        %s582 = scalar_lea.vmem [#allocation2], %s581
        %p583 = scmp.lt.s32.totalorder %s32, 1
        %s584 = scalar_select %p583, %s32, 1
        %s585 = smul.addr %s584, 8
        %s586 = scalar_lea.vmem %s0, %s585
        %s587 = smul.u32 2, %s32
        %p588 = scmp.lt.s32.totalorder %s587, 3
        %s589 = scalar_select %p588, %s587, 3
        %s590 = smul.addr %s589, 8
        %s591 = scalar_lea.vmem %s1, %s590
        %s592 = smul.u32 2, %s32
        %s593 = smul.u32 3, %s32
        %v595 = vld [vmem:[%s586] sm:$0xff]
        %v596 = vld [vmem:[%s591] sm:$0xff]
        %v597 = vld [vmem:[%s591 + $0x8] sm:$0xff]
        %v598 = vpack.c.bf16 %v597, %v596
        %v599 = vld [vmem:[%s16] sm:$0x1]
        %v600 = vld [vmem:[%s17] sm:$0x1]
        %v601 = vpack.c.bf16 %v595, %v595
        %v602 = vld [vmem:[%s2] sm:$0xff]
        %v603 = vld [vmem:[%s2 + $0x8] sm:$0xff]
        %v604 = vld [vmem:[%s2 + $0x10] sm:$0xff]
        %v605 = vld [vmem:[%s2 + $0x18] sm:$0xff]
        %v606 = vld [vmem:[%s2 + $0x20] sm:$0xff]
        %v607 = vld [vmem:[%s2 + $0x28] sm:$0xff]
        %v608 = vld [vmem:[%s2 + $0x30] sm:$0xff]
        %v609 = vld [vmem:[%s2 + $0x38] sm:$0xff]
        %v610 = vld [vmem:[%s3] sm:$0x3]
        %v612 = vlaneseq
        %v613 = vshrl.u32 %v612, 7
        %v614 = vsub.s32 0, %v613
        %v615 = vrot.slane %v610, %v614
        %v616 = vlaneseq
        %v617 = vshrl.u32 %v616, 7
        %v618 = vsub.s32 1, %v617
        %v619 = vrot.slane %v610, %v618
        %v630 = vunpack.c.l.b16 %v602
        %v631 = vunpack.c.h.b16 %v602
        %v632 = vunpack.c.l.b16 %v603
        %v633 = vunpack.c.h.b16 %v603
        %v634 = vunpack.c.l.b16 %v604
        %v635 = vunpack.c.h.b16 %v604
        %v636 = vunpack.c.l.b16 %v605
        %v637 = vunpack.c.h.b16 %v605
        %v638 = vunpack.c.l.b16 %v606
        %v639 = vunpack.c.h.b16 %v606
        %v640 = vunpack.c.l.b16 %v607
        %v641 = vunpack.c.h.b16 %v607
        %v642 = vunpack.c.l.b16 %v608
        %v643 = vunpack.c.h.b16 %v608
        %v644 = vunpack.c.l.b16 %v609
        %v645 = vunpack.c.h.b16 %v609
        %v646 = vpack.c.b16 %v632, %v630
        %v647 = vpack.c.b16 %v633, %v631
        %v648 = vpack.c.b16 %v636, %v634
        %v649 = vpack.c.b16 %v637, %v635
        %v650 = vpack.c.b16 %v640, %v638
        %v651 = vpack.c.b16 %v641, %v639
        %v652 = vpack.c.b16 %v644, %v642
        %v653 = vpack.c.b16 %v645, %v643
        %vm662 = vcmask 523264
        %v664 = vsel %vm662, %v601, 0
        %666 = vmatprep.subr.bf16.mxu0 0
        %667 = vmatpush1.bf16.msra.mxu0 0
        %668 = vmatprep.subr.bf16.mxu0 0
        %669 = vmatpush1.bf16.msra.mxu0 0
        %670 = vmatprep.subr.bf16.mxu0 0
        %671 = vmatpush1.bf16.msra.mxu0 0
        %672 = vmatprep.subr.bf16.mxu0 0
        %673 = vmatpush1.bf16.msra.mxu0 0
        %674 = vmatprep.subr.bf16.mxu0 %v653
        %675 = vmatpush1.bf16.msra.mxu0 %v652
        %676 = vmatprep.subr.bf16.mxu0 %v651
        %677 = vmatpush1.bf16.msra.mxu0 %v650
        %678 = vmatprep.subr.bf16.mxu0 %v649
        %679 = vmatpush1.bf16.msra.mxu0 %v648
        %680 = vmatprep.subr.bf16.mxu0 %v647
        %681 = vmatpush1.bf16.msra.mxu0 %v646
        %682 = vmatprep.subr.bf16.mxu0 0
        %683 = vmatpush2.bf16.msra.mxu0 0
        %684 = vmatprep.subr.bf16.mxu0 0
        %685 = vmatpush2.bf16.msra.mxu0 0
        %686 = vmatprep.subr.bf16.mxu0 0
        %687 = vmatpush2.bf16.msra.mxu0 0
        %688 = vmatprep.subr.bf16.mxu0 0
        %689 = vmatpush2.bf16.msra.mxu0 0
        %690 = vmatprep.subr.bf16.mxu0 0
        %691 = vmatpush2.bf16.msra.mxu0 0
        %692 = vmatprep.subr.bf16.mxu0 0
        %693 = vmatpush2.bf16.msra.mxu0 0
        %694 = vmatprep.subr.bf16.mxu0 0
        %695 = vmatpush2.bf16.msra.mxu0 0
        %696 = vmatprep.subr.bf16.mxu0 0
        %697 = vmatpush2.bf16.msra.mxu0 0
        %698 = vmatprep.mubr.bf16.mxu0 0
        %699 = vmatmul.mubr.bf16.gmra.mxu0 %v664
        %v700 = vpop.f32.mrf.mxu0
        %v701 = vadd.f32 %v615, %v700
        %v702 = vpop.f32.mrf.mxu0
        %v703 = vadd.f32 %v619, %v702
        %v704 = vpop.f32.mrf.mxu0
        %v705 = vpop.f32.mrf.mxu0
        %706 = vdwg.mxu0
        %v707 = vpack.c.bf16 %v701, %v701
        %v708 = vpack.c.bf16 %v703, %v703
        %710 = vrot.lane.b32.xlu0 %v707, 64
        %v711 = vpop.permute.xlu0 %710
        %vm712 = vcmask 130048
        %v714 = vsel %vm712, %v707, 0
        %v717 = vsel %vm712, %v711, 0
        %719 = vmatprep.subr.bf16.mxu0 0
        %720 = vmatpush1.bf16.xpose.msra.mxu0 0
        %721 = vmatprep.subr.bf16.mxu0 0
        %722 = vmatpush1.bf16.xpose.msra.mxu0 0
        %723 = vmatprep.subr.bf16.mxu0 0
        %724 = vmatpush1.bf16.xpose.msra.mxu0 0
        %725 = vmatprep.subr.bf16.mxu0 0
        %726 = vmatpush1.bf16.xpose.msra.mxu0 0
        %727 = vmatprep.subr.bf16.mxu0 0
        %728 = vmatpush1.bf16.xpose.msra.mxu0 0
        %729 = vmatprep.subr.bf16.mxu0 0
        %730 = vmatpush1.bf16.xpose.msra.mxu0 0
        %731 = vmatprep.subr.bf16.mxu0 0
        %732 = vmatpush1.bf16.xpose.msra.mxu0 0
        %733 = vmatprep.subr.bf16.mxu0 0
        %734 = vmatpush1.bf16.xpose.msra.mxu0 %v717
        %735 = vmatprep.subr.bf16.mxu0 0
        %736 = vmatpush2.bf16.xpose.msra.mxu0 0
        %737 = vmatprep.subr.bf16.mxu0 0
        %738 = vmatpush2.bf16.xpose.msra.mxu0 0
        %739 = vmatprep.subr.bf16.mxu0 0
        %740 = vmatpush2.bf16.xpose.msra.mxu0 0
        %741 = vmatprep.subr.bf16.mxu0 0
        %742 = vmatpush2.bf16.xpose.msra.mxu0 0
        %743 = vmatprep.subr.bf16.mxu0 0
        %744 = vmatpush2.bf16.xpose.msra.mxu0 0
        %745 = vmatprep.subr.bf16.mxu0 0
        %746 = vmatpush2.bf16.xpose.msra.mxu0 0
        %747 = vmatprep.subr.bf16.mxu0 0
        %748 = vmatpush2.bf16.xpose.msra.mxu0 0
        %749 = vmatprep.subr.bf16.mxu0 0
        %750 = vmatpush2.bf16.xpose.msra.mxu0 0
        %751 = vmatprep.mubr.bf16.mxu0 0
        %752 = vmatmul.mubr.bf16.gmra.mxu0 %v714
        %v753 = vpop.f32.mrf.mxu0
        %v754 = vadd.f32 0.0, %v753
        %v755 = vpop.f32.mrf.mxu0
        %v756 = vpop.f32.mrf.mxu0
        %v757 = vpop.f32.mrf.mxu0
        %758 = vdwg.mxu0
        %vm759 = vcmask 64512
        %v760 = vsel %vm759, %v754, -inf
        %761 = vmax.xlane.f32.xlu0 %v760
        %v762 = vpop.xlane.xlu0 %761
        %v763 = vsub.f32 %v754, %v762
        %v764 = vmul.f32 %v763, 1.442695
        %v765 = vpow.pop %v764
        %v766 = vsel %vm759, %v765, 0.0
        %767 = vadd.xlane.f32.xlu0 %v766
        %v768 = vpop.xlane.xlu0 %767
        %v769 = vrcp.pop %v768
        %v770 = vmul.f32 %v765, %v769
        %v771 = vpack.c.bf16 %v770, %v770
        %v773 = vsel %vm759, %v771, 0
        %vm775 = vcmask 1043456
        %v777 = vsel %vm775, %v708, 0
        %779 = vmatprep.subr.bf16.mxu0 0
        %780 = vmatpush1.bf16.msra.mxu0 0
        %781 = vmatprep.subr.bf16.mxu0 0
        %782 = vmatpush1.bf16.msra.mxu0 0
        %783 = vmatprep.subr.bf16.mxu0 0
        %784 = vmatpush1.bf16.msra.mxu0 0
        %785 = vmatprep.subr.bf16.mxu0 0
        %786 = vmatpush1.bf16.msra.mxu0 0
        %787 = vmatprep.subr.bf16.mxu0 0
        %788 = vmatpush1.bf16.msra.mxu0 0
        %789 = vmatprep.subr.bf16.mxu0 0
        %790 = vmatpush1.bf16.msra.mxu0 0
        %791 = vmatprep.subr.bf16.mxu0 0
        %792 = vmatpush1.bf16.msra.mxu0 0
        %793 = vmatprep.subr.bf16.mxu0 0
        %794 = vmatpush1.bf16.msra.mxu0 %v777
        %795 = vmatprep.subr.bf16.mxu0 0
        %796 = vmatpush2.bf16.msra.mxu0 0
        %797 = vmatprep.subr.bf16.mxu0 0
        %798 = vmatpush2.bf16.msra.mxu0 0
        %799 = vmatprep.subr.bf16.mxu0 0
        %800 = vmatpush2.bf16.msra.mxu0 0
        %801 = vmatprep.subr.bf16.mxu0 0
        %802 = vmatpush2.bf16.msra.mxu0 0
        %803 = vmatprep.subr.bf16.mxu0 0
        %804 = vmatpush2.bf16.msra.mxu0 0
        %805 = vmatprep.subr.bf16.mxu0 0
        %806 = vmatpush2.bf16.msra.mxu0 0
        %807 = vmatprep.subr.bf16.mxu0 0
        %808 = vmatpush2.bf16.msra.mxu0 0
        %809 = vmatprep.subr.bf16.mxu0 0
        %810 = vmatpush2.bf16.msra.mxu0 0
        %811 = vmatprep.mubr.bf16.mxu0 0
        %812 = vmatmul.mubr.bf16.gmra.mxu0 %v773
        %v813 = vpop.f32.mrf.mxu0
        %v814 = vadd.f32 0.0, %v813
        %v815 = vpop.f32.mrf.mxu0
        %v816 = vpop.f32.mrf.mxu0
        %v817 = vpop.f32.mrf.mxu0
        %818 = vdwg.mxu0
        %819 = vrot.lane.b32.xlu0 %v707, 112
        %v820 = vpop.permute.xlu0 %819
        %821 = vrot.lane.b32.xlu0 %v707, 48
        %v822 = vpop.permute.xlu0 %821
        %v824 = vsel %vm712, %v820, 0
        %v827 = vsel %vm712, %v822, 0
        %829 = vmatprep.subr.bf16.mxu0 0
        %830 = vmatpush1.bf16.xpose.msra.mxu0 0
        %831 = vmatprep.subr.bf16.mxu0 0
        %832 = vmatpush1.bf16.xpose.msra.mxu0 0
        %833 = vmatprep.subr.bf16.mxu0 0
        %834 = vmatpush1.bf16.xpose.msra.mxu0 0
        %835 = vmatprep.subr.bf16.mxu0 0
        %836 = vmatpush1.bf16.xpose.msra.mxu0 0
        %837 = vmatprep.subr.bf16.mxu0 0
        %838 = vmatpush1.bf16.xpose.msra.mxu0 0
        %839 = vmatprep.subr.bf16.mxu0 0
        %840 = vmatpush1.bf16.xpose.msra.mxu0 0
        %841 = vmatprep.subr.bf16.mxu0 0
        %842 = vmatpush1.bf16.xpose.msra.mxu0 0
        %843 = vmatprep.subr.bf16.mxu0 0
        %844 = vmatpush1.bf16.xpose.msra.mxu0 %v827
        %845 = vmatprep.subr.bf16.mxu0 0
        %846 = vmatpush2.bf16.xpose.msra.mxu0 0
        %847 = vmatprep.subr.bf16.mxu0 0
        %848 = vmatpush2.bf16.xpose.msra.mxu0 0
        %849 = vmatprep.subr.bf16.mxu0 0
        %850 = vmatpush2.bf16.xpose.msra.mxu0 0
        %851 = vmatprep.subr.bf16.mxu0 0
        %852 = vmatpush2.bf16.xpose.msra.mxu0 0
        %853 = vmatprep.subr.bf16.mxu0 0
        %854 = vmatpush2.bf16.xpose.msra.mxu0 0
        %855 = vmatprep.subr.bf16.mxu0 0
        %856 = vmatpush2.bf16.xpose.msra.mxu0 0
        %857 = vmatprep.subr.bf16.mxu0 0
        %858 = vmatpush2.bf16.xpose.msra.mxu0 0
        %859 = vmatprep.subr.bf16.mxu0 0
        %860 = vmatpush2.bf16.xpose.msra.mxu0 0
        %861 = vmatprep.mubr.bf16.mxu0 0
        %862 = vmatmul.mubr.bf16.gmra.mxu0 %v824
        %v863 = vpop.f32.mrf.mxu0
        %v864 = vadd.f32 0.0, %v863
        %v865 = vpop.f32.mrf.mxu0
        %v866 = vpop.f32.mrf.mxu0
        %v867 = vpop.f32.mrf.mxu0
        %868 = vdwg.mxu0
        %v869 = vsel %vm759, %v864, -inf
        %870 = vmax.xlane.f32.xlu0 %v869
        %v871 = vpop.xlane.xlu0 %870
        %v872 = vsub.f32 %v864, %v871
        %v873 = vmul.f32 %v872, 1.442695
        %v874 = vpow.pop %v873
        %v875 = vsel %vm759, %v874, 0.0
        %876 = vadd.xlane.f32.xlu0 %v875
        %v877 = vpop.xlane.xlu0 %876
        %v878 = vrcp.pop %v877
        %v879 = vmul.f32 %v874, %v878
        %v880 = vpack.c.bf16 %v879, %v879
        %882 = vrot.lane.b32.xlu0 %v708, 112
        %v883 = vpop.permute.xlu0 %882
        %v885 = vsel %vm759, %v880, 0
        %v888 = vsel %vm775, %v883, 0
        %890 = vmatprep.subr.bf16.mxu0 0
        %891 = vmatpush1.bf16.msra.mxu0 0
        %892 = vmatprep.subr.bf16.mxu0 0
        %893 = vmatpush1.bf16.msra.mxu0 0
        %894 = vmatprep.subr.bf16.mxu0 0
        %895 = vmatpush1.bf16.msra.mxu0 0
        %896 = vmatprep.subr.bf16.mxu0 0
        %897 = vmatpush1.bf16.msra.mxu0 0
        %898 = vmatprep.subr.bf16.mxu0 0
        %899 = vmatpush1.bf16.msra.mxu0 0
        %900 = vmatprep.subr.bf16.mxu0 0
        %901 = vmatpush1.bf16.msra.mxu0 0
        %902 = vmatprep.subr.bf16.mxu0 0
        %903 = vmatpush1.bf16.msra.mxu0 0
        %904 = vmatprep.subr.bf16.mxu0 0
        %905 = vmatpush1.bf16.msra.mxu0 %v888
        %906 = vmatprep.subr.bf16.mxu0 0
        %907 = vmatpush2.bf16.msra.mxu0 0
        %908 = vmatprep.subr.bf16.mxu0 0
        %909 = vmatpush2.bf16.msra.mxu0 0
        %910 = vmatprep.subr.bf16.mxu0 0
        %911 = vmatpush2.bf16.msra.mxu0 0
        %912 = vmatprep.subr.bf16.mxu0 0
        %913 = vmatpush2.bf16.msra.mxu0 0
        %914 = vmatprep.subr.bf16.mxu0 0
        %915 = vmatpush2.bf16.msra.mxu0 0
        %916 = vmatprep.subr.bf16.mxu0 0
        %917 = vmatpush2.bf16.msra.mxu0 0
        %918 = vmatprep.subr.bf16.mxu0 0
        %919 = vmatpush2.bf16.msra.mxu0 0
        %920 = vmatprep.subr.bf16.mxu0 0
        %921 = vmatpush2.bf16.msra.mxu0 0
        %922 = vmatprep.mubr.bf16.mxu0 0
        %923 = vmatmul.mubr.bf16.gmra.mxu0 %v885
        %v924 = vpop.f32.mrf.mxu0
        %v925 = vadd.f32 0.0, %v924
        %v926 = vpop.f32.mrf.mxu0
        %v927 = vpop.f32.mrf.mxu0
        %v928 = vpop.f32.mrf.mxu0
        %929 = vdwg.mxu0
        %930 = vrot.lane.b32.xlu0 %v707, 96
        %v931 = vpop.permute.xlu0 %930
        %932 = vrot.lane.b32.xlu0 %v707, 32
        %v933 = vpop.permute.xlu0 %932
        %v935 = vsel %vm712, %v931, 0
        %v938 = vsel %vm712, %v933, 0
        %940 = vmatprep.subr.bf16.mxu0 0
        %941 = vmatpush1.bf16.xpose.msra.mxu0 0
        %942 = vmatprep.subr.bf16.mxu0 0
        %943 = vmatpush1.bf16.xpose.msra.mxu0 0
        %944 = vmatprep.subr.bf16.mxu0 0
        %945 = vmatpush1.bf16.xpose.msra.mxu0 0
        %946 = vmatprep.subr.bf16.mxu0 0
        %947 = vmatpush1.bf16.xpose.msra.mxu0 0
        %948 = vmatprep.subr.bf16.mxu0 0
        %949 = vmatpush1.bf16.xpose.msra.mxu0 0
        %950 = vmatprep.subr.bf16.mxu0 0
        %951 = vmatpush1.bf16.xpose.msra.mxu0 0
        %952 = vmatprep.subr.bf16.mxu0 0
        %953 = vmatpush1.bf16.xpose.msra.mxu0 0
        %954 = vmatprep.subr.bf16.mxu0 0
        %955 = vmatpush1.bf16.xpose.msra.mxu0 %v938
        %956 = vmatprep.subr.bf16.mxu0 0
        %957 = vmatpush2.bf16.xpose.msra.mxu0 0
        %958 = vmatprep.subr.bf16.mxu0 0
        %959 = vmatpush2.bf16.xpose.msra.mxu0 0
        %960 = vmatprep.subr.bf16.mxu0 0
        %961 = vmatpush2.bf16.xpose.msra.mxu0 0
        %962 = vmatprep.subr.bf16.mxu0 0
        %963 = vmatpush2.bf16.xpose.msra.mxu0 0
        %964 = vmatprep.subr.bf16.mxu0 0
        %965 = vmatpush2.bf16.xpose.msra.mxu0 0
        %966 = vmatprep.subr.bf16.mxu0 0
        %967 = vmatpush2.bf16.xpose.msra.mxu0 0
        %968 = vmatprep.subr.bf16.mxu0 0
        %969 = vmatpush2.bf16.xpose.msra.mxu0 0
        %970 = vmatprep.subr.bf16.mxu0 0
        %971 = vmatpush2.bf16.xpose.msra.mxu0 0
        %972 = vmatprep.mubr.bf16.mxu0 0
        %973 = vmatmul.mubr.bf16.gmra.mxu0 %v935
        %v974 = vpop.f32.mrf.mxu0
        %v975 = vadd.f32 0.0, %v974
        %v976 = vpop.f32.mrf.mxu0
        %v977 = vpop.f32.mrf.mxu0
        %v978 = vpop.f32.mrf.mxu0
        %979 = vdwg.mxu0
        %v980 = vsel %vm759, %v975, -inf
        %981 = vmax.xlane.f32.xlu0 %v980
        %v982 = vpop.xlane.xlu0 %981
        %v983 = vsub.f32 %v975, %v982
        %v984 = vmul.f32 %v983, 1.442695
        %v985 = vpow.pop %v984
        %v986 = vsel %vm759, %v985, 0.0
        %987 = vadd.xlane.f32.xlu0 %v986
        %v988 = vpop.xlane.xlu0 %987
        %v989 = vrcp.pop %v988
        %v990 = vmul.f32 %v985, %v989
        %v991 = vpack.c.bf16 %v990, %v990
        %992 = vrot.lane.b32.xlu0 %v708, 96
        %v993 = vpop.permute.xlu0 %992
        %v995 = vsel %vm759, %v991, 0
        %v998 = vsel %vm775, %v993, 0
        %1000 = vmatprep.subr.bf16.mxu0 0
        %1001 = vmatpush1.bf16.msra.mxu0 0
        %1002 = vmatprep.subr.bf16.mxu0 0
        %1003 = vmatpush1.bf16.msra.mxu0 0
        %1004 = vmatprep.subr.bf16.mxu0 0
        %1005 = vmatpush1.bf16.msra.mxu0 0
        %1006 = vmatprep.subr.bf16.mxu0 0
        %1007 = vmatpush1.bf16.msra.mxu0 0
        %1008 = vmatprep.subr.bf16.mxu0 0
        %1009 = vmatpush1.bf16.msra.mxu0 0
        %1010 = vmatprep.subr.bf16.mxu0 0
        %1011 = vmatpush1.bf16.msra.mxu0 0
        %1012 = vmatprep.subr.bf16.mxu0 0
        %1013 = vmatpush1.bf16.msra.mxu0 0
        %1014 = vmatprep.subr.bf16.mxu0 0
        %1015 = vmatpush1.bf16.msra.mxu0 %v998
        %1016 = vmatprep.subr.bf16.mxu0 0
        %1017 = vmatpush2.bf16.msra.mxu0 0
        %1018 = vmatprep.subr.bf16.mxu0 0
        %1019 = vmatpush2.bf16.msra.mxu0 0
        %1020 = vmatprep.subr.bf16.mxu0 0
        %1021 = vmatpush2.bf16.msra.mxu0 0
        %1022 = vmatprep.subr.bf16.mxu0 0
        %1023 = vmatpush2.bf16.msra.mxu0 0
        %1024 = vmatprep.subr.bf16.mxu0 0
        %1025 = vmatpush2.bf16.msra.mxu0 0
        %1026 = vmatprep.subr.bf16.mxu0 0
        %1027 = vmatpush2.bf16.msra.mxu0 0
        %1028 = vmatprep.subr.bf16.mxu0 0
        %1029 = vmatpush2.bf16.msra.mxu0 0
        %1030 = vmatprep.subr.bf16.mxu0 0
        %1031 = vmatpush2.bf16.msra.mxu0 0
        %1032 = vmatprep.mubr.bf16.mxu0 0
        %1033 = vmatmul.mubr.bf16.gmra.mxu0 %v995
        %v1034 = vpop.f32.mrf.mxu0
        %v1035 = vadd.f32 0.0, %v1034
        %v1036 = vpop.f32.mrf.mxu0
        %v1037 = vpop.f32.mrf.mxu0
        %v1038 = vpop.f32.mrf.mxu0
        %1039 = vdwg.mxu0
        %1040 = vrot.lane.b32.xlu0 %v707, 80
        %v1041 = vpop.permute.xlu0 %1040
        %1042 = vrot.lane.b32.xlu0 %v707, 16
        %v1043 = vpop.permute.xlu0 %1042
        %v1045 = vsel %vm712, %v1041, 0
        %v1048 = vsel %vm712, %v1043, 0
        %1050 = vmatprep.subr.bf16.mxu0 0
        %1051 = vmatpush1.bf16.xpose.msra.mxu0 0
        %1052 = vmatprep.subr.bf16.mxu0 0
        %1053 = vmatpush1.bf16.xpose.msra.mxu0 0
        %1054 = vmatprep.subr.bf16.mxu0 0
        %1055 = vmatpush1.bf16.xpose.msra.mxu0 0
        %1056 = vmatprep.subr.bf16.mxu0 0
        %1057 = vmatpush1.bf16.xpose.msra.mxu0 0
        %1058 = vmatprep.subr.bf16.mxu0 0
        %1059 = vmatpush1.bf16.xpose.msra.mxu0 0
        %1060 = vmatprep.subr.bf16.mxu0 0
        %1061 = vmatpush1.bf16.xpose.msra.mxu0 0
        %1062 = vmatprep.subr.bf16.mxu0 0
        %1063 = vmatpush1.bf16.xpose.msra.mxu0 0
        %1064 = vmatprep.subr.bf16.mxu0 0
        %1065 = vmatpush1.bf16.xpose.msra.mxu0 %v1048
        %1066 = vmatprep.subr.bf16.mxu0 0
        %1067 = vmatpush2.bf16.xpose.msra.mxu0 0
        %1068 = vmatprep.subr.bf16.mxu0 0
        %1069 = vmatpush2.bf16.xpose.msra.mxu0 0
        %1070 = vmatprep.subr.bf16.mxu0 0
        %1071 = vmatpush2.bf16.xpose.msra.mxu0 0
        %1072 = vmatprep.subr.bf16.mxu0 0
        %1073 = vmatpush2.bf16.xpose.msra.mxu0 0
        %1074 = vmatprep.subr.bf16.mxu0 0
        %1075 = vmatpush2.bf16.xpose.msra.mxu0 0
        %1076 = vmatprep.subr.bf16.mxu0 0
        %1077 = vmatpush2.bf16.xpose.msra.mxu0 0
        %1078 = vmatprep.subr.bf16.mxu0 0
        %1079 = vmatpush2.bf16.xpose.msra.mxu0 0
        %1080 = vmatprep.subr.bf16.mxu0 0
        %1081 = vmatpush2.bf16.xpose.msra.mxu0 0
        %1082 = vmatprep.mubr.bf16.mxu0 0
        %1083 = vmatmul.mubr.bf16.gmra.mxu0 %v1045
        %v1084 = vpop.f32.mrf.mxu0
        %v1085 = vadd.f32 0.0, %v1084
        %v1086 = vpop.f32.mrf.mxu0
        %v1087 = vpop.f32.mrf.mxu0
        %v1088 = vpop.f32.mrf.mxu0
        %1089 = vdwg.mxu0
        %v1090 = vsel %vm759, %v1085, -inf
        %1091 = vmax.xlane.f32.xlu0 %v1090
        %v1092 = vpop.xlane.xlu0 %1091
        %v1093 = vsub.f32 %v1085, %v1092
        %v1094 = vmul.f32 %v1093, 1.442695
        %v1095 = vpow.pop %v1094
        %v1096 = vsel %vm759, %v1095, 0.0
        %1097 = vadd.xlane.f32.xlu0 %v1096
        %v1098 = vpop.xlane.xlu0 %1097
        %v1099 = vrcp.pop %v1098
        %v1100 = vmul.f32 %v1095, %v1099
        %v1101 = vpack.c.bf16 %v1100, %v1100
        %1102 = vrot.lane.b32.xlu0 %v708, 80
        %v1103 = vpop.permute.xlu0 %1102
        %v1105 = vsel %vm759, %v1101, 0
        %v1108 = vsel %vm775, %v1103, 0
        %1110 = vmatprep.subr.bf16.mxu0 0
        %1111 = vmatpush1.bf16.msra.mxu0 0
        %1112 = vmatprep.subr.bf16.mxu0 0
        %1113 = vmatpush1.bf16.msra.mxu0 0
        %1114 = vmatprep.subr.bf16.mxu0 0
        %1115 = vmatpush1.bf16.msra.mxu0 0
        %1116 = vmatprep.subr.bf16.mxu0 0
        %1117 = vmatpush1.bf16.msra.mxu0 0
        %1118 = vmatprep.subr.bf16.mxu0 0
        %1119 = vmatpush1.bf16.msra.mxu0 0
        %1120 = vmatprep.subr.bf16.mxu0 0
        %1121 = vmatpush1.bf16.msra.mxu0 0
        %1122 = vmatprep.subr.bf16.mxu0 0
        %1123 = vmatpush1.bf16.msra.mxu0 0
        %1124 = vmatprep.subr.bf16.mxu0 0
        %1125 = vmatpush1.bf16.msra.mxu0 %v1108
        %1126 = vmatprep.subr.bf16.mxu0 0
        %1127 = vmatpush2.bf16.msra.mxu0 0
        %1128 = vmatprep.subr.bf16.mxu0 0
        %1129 = vmatpush2.bf16.msra.mxu0 0
        %1130 = vmatprep.subr.bf16.mxu0 0
        %1131 = vmatpush2.bf16.msra.mxu0 0
        %1132 = vmatprep.subr.bf16.mxu0 0
        %1133 = vmatpush2.bf16.msra.mxu0 0
        %1134 = vmatprep.subr.bf16.mxu0 0
        %1135 = vmatpush2.bf16.msra.mxu0 0
        %1136 = vmatprep.subr.bf16.mxu0 0
        %1137 = vmatpush2.bf16.msra.mxu0 0
        %1138 = vmatprep.subr.bf16.mxu0 0
        %1139 = vmatpush2.bf16.msra.mxu0 0
        %1140 = vmatprep.subr.bf16.mxu0 0
        %1141 = vmatpush2.bf16.msra.mxu0 0
        %1142 = vmatprep.mubr.bf16.mxu0 0
        %1143 = vmatmul.mubr.bf16.gmra.mxu0 %v1105
        %v1144 = vpop.f32.mrf.mxu0
        %v1145 = vadd.f32 0.0, %v1144
        %v1146 = vpop.f32.mrf.mxu0
        %v1147 = vpop.f32.mrf.mxu0
        %v1148 = vpop.f32.mrf.mxu0
        %1149 = vdwg.mxu0
        %1151 = vrot.lane.b32.xlu0 %v925, 16
        %v1152 = vpop.permute.xlu0 %1151
        %1155 = vrot.lane.b32.xlu0 %v1035, 32
        %v1156 = vpop.permute.xlu0 %1155
        %1159 = vrot.lane.b32.xlu0 %v1145, 48
        %v1160 = vpop.permute.xlu0 %1159
        %v1162 = vsel %vm712, %v814, %v1152
        %vm1163 = vcmask 261120
        %v1164 = vsel %vm1163, %v1162, %v1156
        %vm1165 = vcmask 392192
        %v1166 = vsel %vm1165, %v1164, %v1160
        %v1167 = vpack.c.bf16 %v1166, %v1166
        %v1168 = vld [vmem:[%s4] sm:$0xf]
        %v1169 = vld [vmem:[%s4 + $0x4] sm:$0xf]
        %v1170 = vld [vmem:[%s4 + $0x8] sm:$0xf]
        %v1171 = vld [vmem:[%s4 + $0xc] sm:$0xf]
        %v1172 = vld [vmem:[%s4 + $0x10] sm:$0xf]
        %v1173 = vld [vmem:[%s4 + $0x14] sm:$0xf]
        %v1174 = vld [vmem:[%s4 + $0x18] sm:$0xf]
        %v1175 = vld [vmem:[%s4 + $0x1c] sm:$0xf]
        %v1176 = vld [vmem:[%s5] sm:$0x1]
        %v1178 = vlaneseq
        %v1179 = vshrl.u32 %v1178, 7
        %v1180 = vsub.s32 0, %v1179
        %v1181 = vrot.slane %v1176, %v1180
        %v1191 = vunpack.c.l.b16 %v1168
        %v1192 = vunpack.c.l.b16 %v1169
        %v1193 = vunpack.c.l.b16 %v1170
        %v1194 = vunpack.c.l.b16 %v1171
        %v1195 = vunpack.c.l.b16 %v1172
        %v1196 = vunpack.c.l.b16 %v1173
        %v1197 = vunpack.c.l.b16 %v1174
        %v1198 = vunpack.c.l.b16 %v1175
        %v1199 = vpack.c.b16 %v1192, %v1191
        %v1200 = vpack.c.b16 %v1194, %v1193
        %v1201 = vpack.c.b16 %v1196, %v1195
        %v1202 = vpack.c.b16 %v1198, %v1197
        %v1208 = vsel %vm662, %v1167, 0
        %1210 = vmatprep.subr.bf16.mxu0 0
        %1211 = vmatpush1.bf16.msra.mxu0 0
        %1212 = vmatprep.subr.bf16.mxu0 0
        %1213 = vmatpush1.bf16.msra.mxu0 0
        %1214 = vmatprep.subr.bf16.mxu0 0
        %1215 = vmatpush1.bf16.msra.mxu0 0
        %1216 = vmatprep.subr.bf16.mxu0 0
        %1217 = vmatpush1.bf16.msra.mxu0 0
        %1218 = vmatprep.subr.bf16.mxu0 0
        %1219 = vmatpush1.bf16.msra.mxu0 %v1202
        %1220 = vmatprep.subr.bf16.mxu0 0
        %1221 = vmatpush1.bf16.msra.mxu0 %v1201
        %1222 = vmatprep.subr.bf16.mxu0 0
        %1223 = vmatpush1.bf16.msra.mxu0 %v1200
        %1224 = vmatprep.subr.bf16.mxu0 0
        %1225 = vmatpush1.bf16.msra.mxu0 %v1199
        %1226 = vmatprep.subr.bf16.mxu0 0
        %1227 = vmatpush2.bf16.msra.mxu0 0
        %1228 = vmatprep.subr.bf16.mxu0 0
        %1229 = vmatpush2.bf16.msra.mxu0 0
        %1230 = vmatprep.subr.bf16.mxu0 0
        %1231 = vmatpush2.bf16.msra.mxu0 0
        %1232 = vmatprep.subr.bf16.mxu0 0
        %1233 = vmatpush2.bf16.msra.mxu0 0
        %1234 = vmatprep.subr.bf16.mxu0 0
        %1235 = vmatpush2.bf16.msra.mxu0 0
        %1236 = vmatprep.subr.bf16.mxu0 0
        %1237 = vmatpush2.bf16.msra.mxu0 0
        %1238 = vmatprep.subr.bf16.mxu0 0
        %1239 = vmatpush2.bf16.msra.mxu0 0
        %1240 = vmatprep.subr.bf16.mxu0 0
        %1241 = vmatpush2.bf16.msra.mxu0 0
        %1242 = vmatprep.mubr.bf16.mxu0 0
        %1243 = vmatmul.mubr.bf16.gmra.mxu0 %v1208
        %v1244 = vpop.f32.mrf.mxu0
        %v1245 = vadd.f32 %v1181, %v1244
        %v1246 = vpop.f32.mrf.mxu0
        %v1247 = vpop.f32.mrf.mxu0
        %v1248 = vpop.f32.mrf.mxu0
        %1249 = vdwg.mxu0
        %v1250 = vadd.f32 %v595, %v1245
        %v1251 = vsel %vm662, %v1250, 0.0
        %1252 = vadd.xlane.f32.xlu0 %v1251
        %v1253 = vpop.xlane.xlu0 %1252
        %v1254 = vrcp.pop 64.0
        %v1255 = vmul.f32 %v1253, %v1254
        %v1256 = vsub.f32 %v1250, %v1255
        %v1257 = vmul.f32 %v1256, %v1256
        %v1258 = vsel %vm662, %v1257, 0.0
        %1259 = vadd.xlane.f32.xlu0 %v1258
        %v1260 = vpop.xlane.xlu0 %1259
        %v1261 = vmul.f32 %v1260, %v1254
        %v1262 = vadd.f32 %v1261, 1e-05
        %v1263 = vrsqrt.pop %v1262
        %v1264 = vmul.f32 %v1256, %v1263
        %v1266 = vlaneseq
        %v1267 = vshrl.u32 %v1266, 7
        %v1268 = vsub.s32 0, %v1267
        %v1269 = vrot.slane %v599, %v1268
        %v1271 = vmul.f32 %v1264, %v1269
        %v1273 = vlaneseq
        %v1274 = vshrl.u32 %v1273, 7
        %v1275 = vsub.s32 0, %v1274
        %v1276 = vrot.slane %v600, %v1275
        %v1278 = vadd.f32 %v1271, %v1276
        %v1279 = vpack.c.bf16 %v1278, %v1278
        %v1280 = vld [vmem:[%s6] sm:$0xf]
        %v1281 = vld [vmem:[%s6 + $0x4] sm:$0xf]
        %v1282 = vld [vmem:[%s6 + $0x8] sm:$0xf]
        %v1283 = vld [vmem:[%s6 + $0xc] sm:$0xf]
        %v1284 = vld [vmem:[%s6 + $0x10] sm:$0xf]
        %v1285 = vld [vmem:[%s6 + $0x14] sm:$0xf]
        %v1286 = vld [vmem:[%s6 + $0x18] sm:$0xf]
        %v1287 = vld [vmem:[%s6 + $0x1c] sm:$0xf]
        %v1288 = vld [vmem:[%s7] sm:$0x1]
        %v1290 = vlaneseq
        %v1291 = vshrl.u32 %v1290, 7
        %v1292 = vsub.s32 0, %v1291
        %v1293 = vrot.slane %v1288, %v1292
        %v1303 = vunpack.c.l.b16 %v1280
        %v1304 = vunpack.c.l.b16 %v1281
        %v1305 = vunpack.c.l.b16 %v1282
        %v1306 = vunpack.c.l.b16 %v1283
        %v1307 = vunpack.c.l.b16 %v1284
        %v1308 = vunpack.c.l.b16 %v1285
        %v1309 = vunpack.c.l.b16 %v1286
        %v1310 = vunpack.c.l.b16 %v1287
        %v1311 = vpack.c.b16 %v1304, %v1303
        %v1312 = vpack.c.b16 %v1306, %v1305
        %v1313 = vpack.c.b16 %v1308, %v1307
        %v1314 = vpack.c.b16 %v1310, %v1309
        %v1320 = vsel %vm662, %v1279, 0
        %1322 = vmatprep.subr.bf16.mxu0 0
        %1323 = vmatpush1.bf16.msra.mxu0 0
        %1324 = vmatprep.subr.bf16.mxu0 0
        %1325 = vmatpush1.bf16.msra.mxu0 0
        %1326 = vmatprep.subr.bf16.mxu0 0
        %1327 = vmatpush1.bf16.msra.mxu0 0
        %1328 = vmatprep.subr.bf16.mxu0 0
        %1329 = vmatpush1.bf16.msra.mxu0 0
        %1330 = vmatprep.subr.bf16.mxu0 0
        %1331 = vmatpush1.bf16.msra.mxu0 %v1314
        %1332 = vmatprep.subr.bf16.mxu0 0
        %1333 = vmatpush1.bf16.msra.mxu0 %v1313
        %1334 = vmatprep.subr.bf16.mxu0 0
        %1335 = vmatpush1.bf16.msra.mxu0 %v1312
        %1336 = vmatprep.subr.bf16.mxu0 0
        %1337 = vmatpush1.bf16.msra.mxu0 %v1311
        %1338 = vmatprep.subr.bf16.mxu0 0
        %1339 = vmatpush2.bf16.msra.mxu0 0
        %1340 = vmatprep.subr.bf16.mxu0 0
        %1341 = vmatpush2.bf16.msra.mxu0 0
        %1342 = vmatprep.subr.bf16.mxu0 0
        %1343 = vmatpush2.bf16.msra.mxu0 0
        %1344 = vmatprep.subr.bf16.mxu0 0
        %1345 = vmatpush2.bf16.msra.mxu0 0
        %1346 = vmatprep.subr.bf16.mxu0 0
        %1347 = vmatpush2.bf16.msra.mxu0 0
        %1348 = vmatprep.subr.bf16.mxu0 0
        %1349 = vmatpush2.bf16.msra.mxu0 0
        %1350 = vmatprep.subr.bf16.mxu0 0
        %1351 = vmatpush2.bf16.msra.mxu0 0
        %1352 = vmatprep.subr.bf16.mxu0 0
        %1353 = vmatpush2.bf16.msra.mxu0 0
        %1354 = vmatprep.mubr.bf16.mxu0 0
        %1355 = vmatmul.mubr.bf16.gmra.mxu0 %v1320
        %v1356 = vpop.f32.mrf.mxu0
        %v1357 = vadd.f32 %v1293, %v1356
        %v1358 = vpop.f32.mrf.mxu0
        %v1359 = vpop.f32.mrf.mxu0
        %v1360 = vpop.f32.mrf.mxu0
        %1361 = vdwg.mxu0
        %v1362 = vld [vmem:[%s8] sm:$0xf]
        %v1363 = vld [vmem:[%s8 + $0x4] sm:$0xf]
        %v1364 = vld [vmem:[%s8 + $0x8] sm:$0xf]
        %v1365 = vld [vmem:[%s8 + $0xc] sm:$0xf]
        %v1366 = vld [vmem:[%s8 + $0x10] sm:$0xf]
        %v1367 = vld [vmem:[%s8 + $0x14] sm:$0xf]
        %v1368 = vld [vmem:[%s8 + $0x18] sm:$0xf]
        %v1369 = vld [vmem:[%s8 + $0x1c] sm:$0xf]
        %v1370 = vld [vmem:[%s9] sm:$0x1]
        %v1372 = vlaneseq
        %v1373 = vshrl.u32 %v1372, 7
        %v1374 = vsub.s32 0, %v1373
        %v1375 = vrot.slane %v1370, %v1374
        %v1385 = vunpack.c.l.b16 %v1362
        %v1386 = vunpack.c.l.b16 %v1363
        %v1387 = vunpack.c.l.b16 %v1364
        %v1388 = vunpack.c.l.b16 %v1365
        %v1389 = vunpack.c.l.b16 %v1366
        %v1390 = vunpack.c.l.b16 %v1367
        %v1391 = vunpack.c.l.b16 %v1368
        %v1392 = vunpack.c.l.b16 %v1369
        %v1393 = vpack.c.b16 %v1386, %v1385
        %v1394 = vpack.c.b16 %v1388, %v1387
        %v1395 = vpack.c.b16 %v1390, %v1389
        %v1396 = vpack.c.b16 %v1392, %v1391
        %v1402 = vsel %vm662, %v598, 0
        %1404 = vmatprep.subr.bf16.mxu0 0
        %1405 = vmatpush1.bf16.msra.mxu0 0
        %1406 = vmatprep.subr.bf16.mxu0 0
        %1407 = vmatpush1.bf16.msra.mxu0 0
        %1408 = vmatprep.subr.bf16.mxu0 0
        %1409 = vmatpush1.bf16.msra.mxu0 0
        %1410 = vmatprep.subr.bf16.mxu0 0
        %1411 = vmatpush1.bf16.msra.mxu0 0
        %1412 = vmatprep.subr.bf16.mxu0 0
        %1413 = vmatpush1.bf16.msra.mxu0 %v1396
        %1414 = vmatprep.subr.bf16.mxu0 0
        %1415 = vmatpush1.bf16.msra.mxu0 %v1395
        %1416 = vmatprep.subr.bf16.mxu0 0
        %1417 = vmatpush1.bf16.msra.mxu0 %v1394
        %1418 = vmatprep.subr.bf16.mxu0 0
        %1419 = vmatpush1.bf16.msra.mxu0 %v1393
        %1420 = vmatprep.subr.bf16.mxu0 0
        %1421 = vmatpush2.bf16.msra.mxu0 0
        %1422 = vmatprep.subr.bf16.mxu0 0
        %1423 = vmatpush2.bf16.msra.mxu0 0
        %1424 = vmatprep.subr.bf16.mxu0 0
        %1425 = vmatpush2.bf16.msra.mxu0 0
        %1426 = vmatprep.subr.bf16.mxu0 0
        %1427 = vmatpush2.bf16.msra.mxu0 0
        %1428 = vmatprep.subr.bf16.mxu0 0
        %1429 = vmatpush2.bf16.msra.mxu0 0
        %1430 = vmatprep.subr.bf16.mxu0 0
        %1431 = vmatpush2.bf16.msra.mxu0 0
        %1432 = vmatprep.subr.bf16.mxu0 0
        %1433 = vmatpush2.bf16.msra.mxu0 0
        %1434 = vmatprep.subr.bf16.mxu0 0
        %1435 = vmatpush2.bf16.msra.mxu0 0
        %1436 = vmatprep.mubr.bf16.mxu0 0
        %1437 = vmatmul.mubr.bf16.gmra.mxu0 %v1402
        %v1438 = vpop.f32.mrf.mxu0
        %v1439 = vadd.f32 %v1375, %v1438
        %v1440 = vpop.f32.mrf.mxu0
        %v1441 = vpop.f32.mrf.mxu0
        %v1442 = vadd.f32 %v1375, %v1441
        %v1443 = vpop.f32.mrf.mxu0
        %1444 = vdwg.mxu0
        %v1445 = vpack.c.bf16 %v1357, %v1357
        %v1446 = vpack.c.bf16 %v1442, %v1439
        %v1448 = vsel %vm712, %v1445, 0
        %v1451 = vsel %vm712, %v1446, 0
        %1453 = vmatprep.subr.bf16.mxu0 0
        %1454 = vmatpush1.bf16.xpose.msra.mxu0 0
        %1455 = vmatprep.subr.bf16.mxu0 0
        %1456 = vmatpush1.bf16.xpose.msra.mxu0 0
        %1457 = vmatprep.subr.bf16.mxu0 0
        %1458 = vmatpush1.bf16.xpose.msra.mxu0 0
        %1459 = vmatprep.subr.bf16.mxu0 0
        %1460 = vmatpush1.bf16.xpose.msra.mxu0 0
        %1461 = vmatprep.subr.bf16.mxu0 0
        %1462 = vmatpush1.bf16.xpose.msra.mxu0 0
        %1463 = vmatprep.subr.bf16.mxu0 0
        %1464 = vmatpush1.bf16.xpose.msra.mxu0 0
        %1465 = vmatprep.subr.bf16.mxu0 0
        %1466 = vmatpush1.bf16.xpose.msra.mxu0 0
        %1467 = vmatprep.subr.bf16.mxu0 0
        %1468 = vmatpush1.bf16.xpose.msra.mxu0 %v1451
        %1469 = vmatprep.subr.bf16.mxu0 0
        %1470 = vmatpush2.bf16.xpose.msra.mxu0 0
        %1471 = vmatprep.subr.bf16.mxu0 0
        %1472 = vmatpush2.bf16.xpose.msra.mxu0 0
        %1473 = vmatprep.subr.bf16.mxu0 0
        %1474 = vmatpush2.bf16.xpose.msra.mxu0 0
        %1475 = vmatprep.subr.bf16.mxu0 0
        %1476 = vmatpush2.bf16.xpose.msra.mxu0 0
        %1477 = vmatprep.subr.bf16.mxu0 0
        %1478 = vmatpush2.bf16.xpose.msra.mxu0 0
        %1479 = vmatprep.subr.bf16.mxu0 0
        %1480 = vmatpush2.bf16.xpose.msra.mxu0 0
        %1481 = vmatprep.subr.bf16.mxu0 0
        %1482 = vmatpush2.bf16.xpose.msra.mxu0 0
        %1483 = vmatprep.subr.bf16.mxu0 0
        %1484 = vmatpush2.bf16.xpose.msra.mxu0 0
        %1485 = vmatprep.mubr.bf16.mxu0 0
        %1486 = vmatmul.mubr.bf16.gmra.mxu0 %v1448
        %v1487 = vpop.f32.mrf.mxu0
        %v1488 = vadd.f32 0.0, %v1487
        %v1489 = vpop.f32.mrf.mxu0
        %v1490 = vpop.f32.mrf.mxu0
        %v1491 = vpop.f32.mrf.mxu0
        %1492 = vdwg.mxu0
        %v1493 = vsel %vm712, %v1488, -inf
        %1494 = vmax.xlane.f32.xlu0 %v1493
        %v1495 = vpop.xlane.xlu0 %1494
        %v1496 = vsub.f32 %v1488, %v1495
        %v1497 = vmul.f32 %v1496, 1.442695
        %v1498 = vpow.pop %v1497
        %v1499 = vsel %vm712, %v1498, 0.0
        %1500 = vadd.xlane.f32.xlu0 %v1499
        %v1501 = vpop.xlane.xlu0 %1500
        %v1502 = vrcp.pop %v1501
        %v1503 = vmul.f32 %v1498, %v1502
        %v1504 = vpack.c.bf16 %v1503, %v1503
        %1506 = vrot.lane.b32.xlu0 %v1446, 64
        %v1507 = vpop.permute.xlu0 %1506
        %v1510 = vsel %vm712, %v1504, 0
        %1512 = vmatprep.subr.bf16.mxu0 0
        %1513 = vmatpush1.bf16.msra.mxu0 0
        %1514 = vmatprep.subr.bf16.mxu0 0
        %1515 = vmatpush1.bf16.msra.mxu0 0
        %1516 = vmatprep.subr.bf16.mxu0 0
        %1517 = vmatpush1.bf16.msra.mxu0 0
        %1518 = vmatprep.subr.bf16.mxu0 0
        %1519 = vmatpush1.bf16.msra.mxu0 0
        %1520 = vmatprep.subr.bf16.mxu0 0
        %1521 = vmatpush1.bf16.msra.mxu0 0
        %1522 = vmatprep.subr.bf16.mxu0 0
        %1523 = vmatpush1.bf16.msra.mxu0 0
        %1524 = vmatprep.subr.bf16.mxu0 0
        %1525 = vmatpush1.bf16.msra.mxu0 0
        %1526 = vmatprep.subr.bf16.mxu0 0
        %1527 = vmatpush1.bf16.msra.mxu0 %v1507
        %1528 = vmatprep.subr.bf16.mxu0 0
        %1529 = vmatpush2.bf16.msra.mxu0 0
        %1530 = vmatprep.subr.bf16.mxu0 0
        %1531 = vmatpush2.bf16.msra.mxu0 0
        %1532 = vmatprep.subr.bf16.mxu0 0
        %1533 = vmatpush2.bf16.msra.mxu0 0
        %1534 = vmatprep.subr.bf16.mxu0 0
        %1535 = vmatpush2.bf16.msra.mxu0 0
        %1536 = vmatprep.subr.bf16.mxu0 0
        %1537 = vmatpush2.bf16.msra.mxu0 0
        %1538 = vmatprep.subr.bf16.mxu0 0
        %1539 = vmatpush2.bf16.msra.mxu0 0
        %1540 = vmatprep.subr.bf16.mxu0 0
        %1541 = vmatpush2.bf16.msra.mxu0 0
        %1542 = vmatprep.subr.bf16.mxu0 0
        %1543 = vmatpush2.bf16.msra.mxu0 0
        %1544 = vmatprep.mubr.bf16.mxu0 0
        %1545 = vmatmul.mubr.bf16.gmra.mxu0 %v1510
        %v1546 = vpop.f32.mrf.mxu0
        %v1547 = vadd.f32 0.0, %v1546
        %v1548 = vpop.f32.mrf.mxu0
        %v1549 = vpop.f32.mrf.mxu0
        %v1550 = vpop.f32.mrf.mxu0
        %1551 = vdwg.mxu0
        %1553 = vrot.lane.b32.xlu0 %v1445, 112
        %v1554 = vpop.permute.xlu0 %1553
        %1555 = vrot.lane.b32.xlu0 %v1446, 112
        %v1556 = vpop.permute.xlu0 %1555
        %v1558 = vsel %vm712, %v1554, 0
        %v1561 = vsel %vm712, %v1556, 0
        %1563 = vmatprep.subr.bf16.mxu0 0
        %1564 = vmatpush1.bf16.xpose.msra.mxu0 0
        %1565 = vmatprep.subr.bf16.mxu0 0
        %1566 = vmatpush1.bf16.xpose.msra.mxu0 0
        %1567 = vmatprep.subr.bf16.mxu0 0
        %1568 = vmatpush1.bf16.xpose.msra.mxu0 0
        %1569 = vmatprep.subr.bf16.mxu0 0
        %1570 = vmatpush1.bf16.xpose.msra.mxu0 0
        %1571 = vmatprep.subr.bf16.mxu0 0
        %1572 = vmatpush1.bf16.xpose.msra.mxu0 0
        %1573 = vmatprep.subr.bf16.mxu0 0
        %1574 = vmatpush1.bf16.xpose.msra.mxu0 0
        %1575 = vmatprep.subr.bf16.mxu0 0
        %1576 = vmatpush1.bf16.xpose.msra.mxu0 0
        %1577 = vmatprep.subr.bf16.mxu0 0
        %1578 = vmatpush1.bf16.xpose.msra.mxu0 %v1561
        %1579 = vmatprep.subr.bf16.mxu0 0
        %1580 = vmatpush2.bf16.xpose.msra.mxu0 0
        %1581 = vmatprep.subr.bf16.mxu0 0
        %1582 = vmatpush2.bf16.xpose.msra.mxu0 0
        %1583 = vmatprep.subr.bf16.mxu0 0
        %1584 = vmatpush2.bf16.xpose.msra.mxu0 0
        %1585 = vmatprep.subr.bf16.mxu0 0
        %1586 = vmatpush2.bf16.xpose.msra.mxu0 0
        %1587 = vmatprep.subr.bf16.mxu0 0
        %1588 = vmatpush2.bf16.xpose.msra.mxu0 0
        %1589 = vmatprep.subr.bf16.mxu0 0
        %1590 = vmatpush2.bf16.xpose.msra.mxu0 0
        %1591 = vmatprep.subr.bf16.mxu0 0
        %1592 = vmatpush2.bf16.xpose.msra.mxu0 0
        %1593 = vmatprep.subr.bf16.mxu0 0
        %1594 = vmatpush2.bf16.xpose.msra.mxu0 0
        %1595 = vmatprep.mubr.bf16.mxu0 0
        %1596 = vmatmul.mubr.bf16.gmra.mxu0 %v1558
        %v1597 = vpop.f32.mrf.mxu0
        %v1598 = vadd.f32 0.0, %v1597
        %v1599 = vpop.f32.mrf.mxu0
        %v1600 = vpop.f32.mrf.mxu0
        %v1601 = vpop.f32.mrf.mxu0
        %1602 = vdwg.mxu0
        %v1603 = vsel %vm712, %v1598, -inf
        %1604 = vmax.xlane.f32.xlu0 %v1603
        %v1605 = vpop.xlane.xlu0 %1604
        %v1606 = vsub.f32 %v1598, %v1605
        %v1607 = vmul.f32 %v1606, 1.442695
        %v1608 = vpow.pop %v1607
        %v1609 = vsel %vm712, %v1608, 0.0
        %1610 = vadd.xlane.f32.xlu0 %v1609
        %v1611 = vpop.xlane.xlu0 %1610
        %v1612 = vrcp.pop %v1611
        %v1613 = vmul.f32 %v1608, %v1612
        %v1614 = vpack.c.bf16 %v1613, %v1613
        %1615 = vrot.lane.b32.xlu0 %v1446, 48
        %v1616 = vpop.permute.xlu0 %1615
        %v1619 = vsel %vm712, %v1614, 0
        %1621 = vmatprep.subr.bf16.mxu0 0
        %1622 = vmatpush1.bf16.msra.mxu0 0
        %1623 = vmatprep.subr.bf16.mxu0 0
        %1624 = vmatpush1.bf16.msra.mxu0 0
        %1625 = vmatprep.subr.bf16.mxu0 0
        %1626 = vmatpush1.bf16.msra.mxu0 0
        %1627 = vmatprep.subr.bf16.mxu0 0
        %1628 = vmatpush1.bf16.msra.mxu0 0
        %1629 = vmatprep.subr.bf16.mxu0 0
        %1630 = vmatpush1.bf16.msra.mxu0 0
        %1631 = vmatprep.subr.bf16.mxu0 0
        %1632 = vmatpush1.bf16.msra.mxu0 0
        %1633 = vmatprep.subr.bf16.mxu0 0
        %1634 = vmatpush1.bf16.msra.mxu0 0
        %1635 = vmatprep.subr.bf16.mxu0 0
        %1636 = vmatpush1.bf16.msra.mxu0 %v1616
        %1637 = vmatprep.subr.bf16.mxu0 0
        %1638 = vmatpush2.bf16.msra.mxu0 0
        %1639 = vmatprep.subr.bf16.mxu0 0
        %1640 = vmatpush2.bf16.msra.mxu0 0
        %1641 = vmatprep.subr.bf16.mxu0 0
        %1642 = vmatpush2.bf16.msra.mxu0 0
        %1643 = vmatprep.subr.bf16.mxu0 0
        %1644 = vmatpush2.bf16.msra.mxu0 0
        %1645 = vmatprep.subr.bf16.mxu0 0
        %1646 = vmatpush2.bf16.msra.mxu0 0
        %1647 = vmatprep.subr.bf16.mxu0 0
        %1648 = vmatpush2.bf16.msra.mxu0 0
        %1649 = vmatprep.subr.bf16.mxu0 0
        %1650 = vmatpush2.bf16.msra.mxu0 0
        %1651 = vmatprep.subr.bf16.mxu0 0
        %1652 = vmatpush2.bf16.msra.mxu0 0
        %1653 = vmatprep.mubr.bf16.mxu0 0
        %1654 = vmatmul.mubr.bf16.gmra.mxu0 %v1619
        %v1655 = vpop.f32.mrf.mxu0
        %v1656 = vadd.f32 0.0, %v1655
        %v1657 = vpop.f32.mrf.mxu0
        %v1658 = vpop.f32.mrf.mxu0
        %v1659 = vpop.f32.mrf.mxu0
        %1660 = vdwg.mxu0
        %1661 = vrot.lane.b32.xlu0 %v1445, 96
        %v1662 = vpop.permute.xlu0 %1661
        %1663 = vrot.lane.b32.xlu0 %v1446, 96
        %v1664 = vpop.permute.xlu0 %1663
        %v1666 = vsel %vm712, %v1662, 0
        %v1669 = vsel %vm712, %v1664, 0
        %1671 = vmatprep.subr.bf16.mxu0 0
        %1672 = vmatpush1.bf16.xpose.msra.mxu0 0
        %1673 = vmatprep.subr.bf16.mxu0 0
        %1674 = vmatpush1.bf16.xpose.msra.mxu0 0
        %1675 = vmatprep.subr.bf16.mxu0 0
        %1676 = vmatpush1.bf16.xpose.msra.mxu0 0
        %1677 = vmatprep.subr.bf16.mxu0 0
        %1678 = vmatpush1.bf16.xpose.msra.mxu0 0
        %1679 = vmatprep.subr.bf16.mxu0 0
        %1680 = vmatpush1.bf16.xpose.msra.mxu0 0
        %1681 = vmatprep.subr.bf16.mxu0 0
        %1682 = vmatpush1.bf16.xpose.msra.mxu0 0
        %1683 = vmatprep.subr.bf16.mxu0 0
        %1684 = vmatpush1.bf16.xpose.msra.mxu0 0
        %1685 = vmatprep.subr.bf16.mxu0 0
        %1686 = vmatpush1.bf16.xpose.msra.mxu0 %v1669
        %1687 = vmatprep.subr.bf16.mxu0 0
        %1688 = vmatpush2.bf16.xpose.msra.mxu0 0
        %1689 = vmatprep.subr.bf16.mxu0 0
        %1690 = vmatpush2.bf16.xpose.msra.mxu0 0
        %1691 = vmatprep.subr.bf16.mxu0 0
        %1692 = vmatpush2.bf16.xpose.msra.mxu0 0
        %1693 = vmatprep.subr.bf16.mxu0 0
        %1694 = vmatpush2.bf16.xpose.msra.mxu0 0
        %1695 = vmatprep.subr.bf16.mxu0 0
        %1696 = vmatpush2.bf16.xpose.msra.mxu0 0
        %1697 = vmatprep.subr.bf16.mxu0 0
        %1698 = vmatpush2.bf16.xpose.msra.mxu0 0
        %1699 = vmatprep.subr.bf16.mxu0 0
        %1700 = vmatpush2.bf16.xpose.msra.mxu0 0
        %1701 = vmatprep.subr.bf16.mxu0 0
        %1702 = vmatpush2.bf16.xpose.msra.mxu0 0
        %1703 = vmatprep.mubr.bf16.mxu0 0
        %1704 = vmatmul.mubr.bf16.gmra.mxu0 %v1666
        %v1705 = vpop.f32.mrf.mxu0
        %v1706 = vadd.f32 0.0, %v1705
        %v1707 = vpop.f32.mrf.mxu0
        %v1708 = vpop.f32.mrf.mxu0
        %v1709 = vpop.f32.mrf.mxu0
        %1710 = vdwg.mxu0
        %v1711 = vsel %vm712, %v1706, -inf
        %1712 = vmax.xlane.f32.xlu0 %v1711
        %v1713 = vpop.xlane.xlu0 %1712
        %v1714 = vsub.f32 %v1706, %v1713
        %v1715 = vmul.f32 %v1714, 1.442695
        %v1716 = vpow.pop %v1715
        %v1717 = vsel %vm712, %v1716, 0.0
        %1718 = vadd.xlane.f32.xlu0 %v1717
        %v1719 = vpop.xlane.xlu0 %1718
        %v1720 = vrcp.pop %v1719
        %v1721 = vmul.f32 %v1716, %v1720
        %v1722 = vpack.c.bf16 %v1721, %v1721
        %1723 = vrot.lane.b32.xlu0 %v1446, 32
        %v1724 = vpop.permute.xlu0 %1723
        %v1727 = vsel %vm712, %v1722, 0
        %1729 = vmatprep.subr.bf16.mxu0 0
        %1730 = vmatpush1.bf16.msra.mxu0 0
        %1731 = vmatprep.subr.bf16.mxu0 0
        %1732 = vmatpush1.bf16.msra.mxu0 0
        %1733 = vmatprep.subr.bf16.mxu0 0
        %1734 = vmatpush1.bf16.msra.mxu0 0
        %1735 = vmatprep.subr.bf16.mxu0 0
        %1736 = vmatpush1.bf16.msra.mxu0 0
        %1737 = vmatprep.subr.bf16.mxu0 0
        %1738 = vmatpush1.bf16.msra.mxu0 0
        %1739 = vmatprep.subr.bf16.mxu0 0
        %1740 = vmatpush1.bf16.msra.mxu0 0
        %1741 = vmatprep.subr.bf16.mxu0 0
        %1742 = vmatpush1.bf16.msra.mxu0 0
        %1743 = vmatprep.subr.bf16.mxu0 0
        %1744 = vmatpush1.bf16.msra.mxu0 %v1724
        %1745 = vmatprep.subr.bf16.mxu0 0
        %1746 = vmatpush2.bf16.msra.mxu0 0
        %1747 = vmatprep.subr.bf16.mxu0 0
        %1748 = vmatpush2.bf16.msra.mxu0 0
        %1749 = vmatprep.subr.bf16.mxu0 0
        %1750 = vmatpush2.bf16.msra.mxu0 0
        %1751 = vmatprep.subr.bf16.mxu0 0
        %1752 = vmatpush2.bf16.msra.mxu0 0
        %1753 = vmatprep.subr.bf16.mxu0 0
        %1754 = vmatpush2.bf16.msra.mxu0 0
        %1755 = vmatprep.subr.bf16.mxu0 0
        %1756 = vmatpush2.bf16.msra.mxu0 0
        %1757 = vmatprep.subr.bf16.mxu0 0
        %1758 = vmatpush2.bf16.msra.mxu0 0
        %1759 = vmatprep.subr.bf16.mxu0 0
        %1760 = vmatpush2.bf16.msra.mxu0 0
        %1761 = vmatprep.mubr.bf16.mxu0 0
        %1762 = vmatmul.mubr.bf16.gmra.mxu0 %v1727
        %v1763 = vpop.f32.mrf.mxu0
        %v1764 = vadd.f32 0.0, %v1763
        %v1765 = vpop.f32.mrf.mxu0
        %v1766 = vpop.f32.mrf.mxu0
        %v1767 = vpop.f32.mrf.mxu0
        %1768 = vdwg.mxu0
        %1769 = vrot.lane.b32.xlu0 %v1445, 80
        %v1770 = vpop.permute.xlu0 %1769
        %1771 = vrot.lane.b32.xlu0 %v1446, 80
        %v1772 = vpop.permute.xlu0 %1771
        %v1774 = vsel %vm712, %v1770, 0
        %v1777 = vsel %vm712, %v1772, 0
        %1779 = vmatprep.subr.bf16.mxu0 0
        %1780 = vmatpush1.bf16.xpose.msra.mxu0 0
        %1781 = vmatprep.subr.bf16.mxu0 0
        %1782 = vmatpush1.bf16.xpose.msra.mxu0 0
        %1783 = vmatprep.subr.bf16.mxu0 0
        %1784 = vmatpush1.bf16.xpose.msra.mxu0 0
        %1785 = vmatprep.subr.bf16.mxu0 0
        %1786 = vmatpush1.bf16.xpose.msra.mxu0 0
        %1787 = vmatprep.subr.bf16.mxu0 0
        %1788 = vmatpush1.bf16.xpose.msra.mxu0 0
        %1789 = vmatprep.subr.bf16.mxu0 0
        %1790 = vmatpush1.bf16.xpose.msra.mxu0 0
        %1791 = vmatprep.subr.bf16.mxu0 0
        %1792 = vmatpush1.bf16.xpose.msra.mxu0 0
        %1793 = vmatprep.subr.bf16.mxu0 0
        %1794 = vmatpush1.bf16.xpose.msra.mxu0 %v1777
        %1795 = vmatprep.subr.bf16.mxu0 0
        %1796 = vmatpush2.bf16.xpose.msra.mxu0 0
        %1797 = vmatprep.subr.bf16.mxu0 0
        %1798 = vmatpush2.bf16.xpose.msra.mxu0 0
        %1799 = vmatprep.subr.bf16.mxu0 0
        %1800 = vmatpush2.bf16.xpose.msra.mxu0 0
        %1801 = vmatprep.subr.bf16.mxu0 0
        %1802 = vmatpush2.bf16.xpose.msra.mxu0 0
        %1803 = vmatprep.subr.bf16.mxu0 0
        %1804 = vmatpush2.bf16.xpose.msra.mxu0 0
        %1805 = vmatprep.subr.bf16.mxu0 0
        %1806 = vmatpush2.bf16.xpose.msra.mxu0 0
        %1807 = vmatprep.subr.bf16.mxu0 0
        %1808 = vmatpush2.bf16.xpose.msra.mxu0 0
        %1809 = vmatprep.subr.bf16.mxu0 0
        %1810 = vmatpush2.bf16.xpose.msra.mxu0 0
        %1811 = vmatprep.mubr.bf16.mxu0 0
        %1812 = vmatmul.mubr.bf16.gmra.mxu0 %v1774
        %v1813 = vpop.f32.mrf.mxu0
        %v1814 = vadd.f32 0.0, %v1813
        %v1815 = vpop.f32.mrf.mxu0
        %v1816 = vpop.f32.mrf.mxu0
        %v1817 = vpop.f32.mrf.mxu0
        %1818 = vdwg.mxu0
        %v1819 = vsel %vm712, %v1814, -inf
        %1820 = vmax.xlane.f32.xlu0 %v1819
        %v1821 = vpop.xlane.xlu0 %1820
        %v1822 = vsub.f32 %v1814, %v1821
        %v1823 = vmul.f32 %v1822, 1.442695
        %v1824 = vpow.pop %v1823
        %v1825 = vsel %vm712, %v1824, 0.0
        %1826 = vadd.xlane.f32.xlu0 %v1825
        %v1827 = vpop.xlane.xlu0 %1826
        %v1828 = vrcp.pop %v1827
        %v1829 = vmul.f32 %v1824, %v1828
        %v1830 = vpack.c.bf16 %v1829, %v1829
        %1831 = vrot.lane.b32.xlu0 %v1446, 16
        %v1832 = vpop.permute.xlu0 %1831
        %v1835 = vsel %vm712, %v1830, 0
        %1837 = vmatprep.subr.bf16.mxu0 0
        %1838 = vmatpush1.bf16.msra.mxu0 0
        %1839 = vmatprep.subr.bf16.mxu0 0
        %1840 = vmatpush1.bf16.msra.mxu0 0
        %1841 = vmatprep.subr.bf16.mxu0 0
        %1842 = vmatpush1.bf16.msra.mxu0 0
        %1843 = vmatprep.subr.bf16.mxu0 0
        %1844 = vmatpush1.bf16.msra.mxu0 0
        %1845 = vmatprep.subr.bf16.mxu0 0
        %1846 = vmatpush1.bf16.msra.mxu0 0
        %1847 = vmatprep.subr.bf16.mxu0 0
        %1848 = vmatpush1.bf16.msra.mxu0 0
        %1849 = vmatprep.subr.bf16.mxu0 0
        %1850 = vmatpush1.bf16.msra.mxu0 0
        %1851 = vmatprep.subr.bf16.mxu0 0
        %1852 = vmatpush1.bf16.msra.mxu0 %v1832
        %1853 = vmatprep.subr.bf16.mxu0 0
        %1854 = vmatpush2.bf16.msra.mxu0 0
        %1855 = vmatprep.subr.bf16.mxu0 0
        %1856 = vmatpush2.bf16.msra.mxu0 0
        %1857 = vmatprep.subr.bf16.mxu0 0
        %1858 = vmatpush2.bf16.msra.mxu0 0
        %1859 = vmatprep.subr.bf16.mxu0 0
        %1860 = vmatpush2.bf16.msra.mxu0 0
        %1861 = vmatprep.subr.bf16.mxu0 0
        %1862 = vmatpush2.bf16.msra.mxu0 0
        %1863 = vmatprep.subr.bf16.mxu0 0
        %1864 = vmatpush2.bf16.msra.mxu0 0
        %1865 = vmatprep.subr.bf16.mxu0 0
        %1866 = vmatpush2.bf16.msra.mxu0 0
        %1867 = vmatprep.subr.bf16.mxu0 0
        %1868 = vmatpush2.bf16.msra.mxu0 0
        %1869 = vmatprep.mubr.bf16.mxu0 0
        %1870 = vmatmul.mubr.bf16.gmra.mxu0 %v1835
        %v1871 = vpop.f32.mrf.mxu0
        %v1872 = vadd.f32 0.0, %v1871
        %v1873 = vpop.f32.mrf.mxu0
        %v1874 = vpop.f32.mrf.mxu0
        %v1875 = vpop.f32.mrf.mxu0
        %1876 = vdwg.mxu0
        %1878 = vrot.lane.b32.xlu0 %v1656, 16
        %v1879 = vpop.permute.xlu0 %1878
        %1882 = vrot.lane.b32.xlu0 %v1764, 32
        %v1883 = vpop.permute.xlu0 %1882
        %1886 = vrot.lane.b32.xlu0 %v1872, 48
        %v1887 = vpop.permute.xlu0 %1886
        %v1889 = vsel %vm712, %v1547, %v1879
        %v1890 = vsel %vm1163, %v1889, %v1883
        %v1891 = vsel %vm1165, %v1890, %v1887
        %v1892 = vpack.c.bf16 %v1891, %v1891
        %v1893 = vld [vmem:[%s10] sm:$0xf]
        %v1894 = vld [vmem:[%s10 + $0x4] sm:$0xf]
        %v1895 = vld [vmem:[%s10 + $0x8] sm:$0xf]
        %v1896 = vld [vmem:[%s10 + $0xc] sm:$0xf]
        %v1897 = vld [vmem:[%s10 + $0x10] sm:$0xf]
        %v1898 = vld [vmem:[%s10 + $0x14] sm:$0xf]
        %v1899 = vld [vmem:[%s10 + $0x18] sm:$0xf]
        %v1900 = vld [vmem:[%s10 + $0x1c] sm:$0xf]
        %v1901 = vld [vmem:[%s11] sm:$0x1]
        %v1903 = vlaneseq
        %v1904 = vshrl.u32 %v1903, 7
        %v1905 = vsub.s32 0, %v1904
        %v1906 = vrot.slane %v1901, %v1905
        %v1916 = vunpack.c.l.b16 %v1893
        %v1917 = vunpack.c.l.b16 %v1894
        %v1918 = vunpack.c.l.b16 %v1895
        %v1919 = vunpack.c.l.b16 %v1896
        %v1920 = vunpack.c.l.b16 %v1897
        %v1921 = vunpack.c.l.b16 %v1898
        %v1922 = vunpack.c.l.b16 %v1899
        %v1923 = vunpack.c.l.b16 %v1900
        %v1924 = vpack.c.b16 %v1917, %v1916
        %v1925 = vpack.c.b16 %v1919, %v1918
        %v1926 = vpack.c.b16 %v1921, %v1920
        %v1927 = vpack.c.b16 %v1923, %v1922
        %v1933 = vsel %vm662, %v1892, 0
        %1935 = vmatprep.subr.bf16.mxu0 0
        %1936 = vmatpush1.bf16.msra.mxu0 0
        %1937 = vmatprep.subr.bf16.mxu0 0
        %1938 = vmatpush1.bf16.msra.mxu0 0
        %1939 = vmatprep.subr.bf16.mxu0 0
        %1940 = vmatpush1.bf16.msra.mxu0 0
        %1941 = vmatprep.subr.bf16.mxu0 0
        %1942 = vmatpush1.bf16.msra.mxu0 0
        %1943 = vmatprep.subr.bf16.mxu0 0
        %1944 = vmatpush1.bf16.msra.mxu0 %v1927
        %1945 = vmatprep.subr.bf16.mxu0 0
        %1946 = vmatpush1.bf16.msra.mxu0 %v1926
        %1947 = vmatprep.subr.bf16.mxu0 0
        %1948 = vmatpush1.bf16.msra.mxu0 %v1925
        %1949 = vmatprep.subr.bf16.mxu0 0
        %1950 = vmatpush1.bf16.msra.mxu0 %v1924
        %1951 = vmatprep.subr.bf16.mxu0 0
        %1952 = vmatpush2.bf16.msra.mxu0 0
        %1953 = vmatprep.subr.bf16.mxu0 0
        %1954 = vmatpush2.bf16.msra.mxu0 0
        %1955 = vmatprep.subr.bf16.mxu0 0
        %1956 = vmatpush2.bf16.msra.mxu0 0
        %1957 = vmatprep.subr.bf16.mxu0 0
        %1958 = vmatpush2.bf16.msra.mxu0 0
        %1959 = vmatprep.subr.bf16.mxu0 0
        %1960 = vmatpush2.bf16.msra.mxu0 0
        %1961 = vmatprep.subr.bf16.mxu0 0
        %1962 = vmatpush2.bf16.msra.mxu0 0
        %1963 = vmatprep.subr.bf16.mxu0 0
        %1964 = vmatpush2.bf16.msra.mxu0 0
        %1965 = vmatprep.subr.bf16.mxu0 0
        %1966 = vmatpush2.bf16.msra.mxu0 0
        %1967 = vmatprep.mubr.bf16.mxu0 0
        %1968 = vmatmul.mubr.bf16.gmra.mxu0 %v1933
        %v1969 = vpop.f32.mrf.mxu0
        %v1970 = vadd.f32 %v1906, %v1969
        %v1971 = vpop.f32.mrf.mxu0
        %v1972 = vpop.f32.mrf.mxu0
        %v1973 = vpop.f32.mrf.mxu0
        %1974 = vdwg.mxu0
        %v1975 = vadd.f32 %v1278, %v1970
        %v1976 = vsel %vm662, %v1975, 0.0
        %1977 = vadd.xlane.f32.xlu0 %v1976
        %v1978 = vpop.xlane.xlu0 %1977
        %v1979 = vmul.f32 %v1978, %v1254
        %v1980 = vsub.f32 %v1975, %v1979
        %v1981 = vmul.f32 %v1980, %v1980
        %v1982 = vsel %vm662, %v1981, 0.0
        %1983 = vadd.xlane.f32.xlu0 %v1982
        %v1984 = vpop.xlane.xlu0 %1983
        %v1985 = vmul.f32 %v1984, %v1254
        %v1986 = vadd.f32 %v1985, 1e-05
        %v1987 = vrsqrt.pop %v1986
        %v1988 = vmul.f32 %v1980, %v1987
        %v1989 = vmul.f32 %v1988, %v1269
        %v1990 = vadd.f32 %v1989, %v1276
        %v1991 = vpack.c.bf16 %v1990, %v1990
        %v1992 = vld [vmem:[%s12] sm:$0xf]
        %v1993 = vld [vmem:[%s12 + $0x4] sm:$0xf]
        %v1994 = vld [vmem:[%s12 + $0x8] sm:$0xf]
        %v1995 = vld [vmem:[%s12 + $0xc] sm:$0xf]
        %v1996 = vld [vmem:[%s12 + $0x10] sm:$0xf]
        %v1997 = vld [vmem:[%s12 + $0x14] sm:$0xf]
        %v1998 = vld [vmem:[%s12 + $0x18] sm:$0xf]
        %v1999 = vld [vmem:[%s12 + $0x1c] sm:$0xf]
        %v2000 = vld [vmem:[%s13] sm:$0x1]
        %v2002 = vlaneseq
        %v2003 = vshrl.u32 %v2002, 7
        %v2004 = vsub.s32 0, %v2003
        %v2005 = vrot.slane %v2000, %v2004
        %v2015 = vunpack.c.l.b16 %v1992
        %v2016 = vunpack.c.l.b16 %v1993
        %v2017 = vunpack.c.l.b16 %v1994
        %v2018 = vunpack.c.l.b16 %v1995
        %v2019 = vunpack.c.l.b16 %v1996
        %v2020 = vunpack.c.l.b16 %v1997
        %v2021 = vunpack.c.l.b16 %v1998
        %v2022 = vunpack.c.l.b16 %v1999
        %v2023 = vpack.c.b16 %v2016, %v2015
        %v2024 = vpack.c.b16 %v2018, %v2017
        %v2025 = vpack.c.b16 %v2020, %v2019
        %v2026 = vpack.c.b16 %v2022, %v2021
        %v2032 = vsel %vm662, %v1991, 0
        %2034 = vmatprep.subr.bf16.mxu0 0
        %2035 = vmatpush1.bf16.msra.mxu0 0
        %2036 = vmatprep.subr.bf16.mxu0 0
        %2037 = vmatpush1.bf16.msra.mxu0 0
        %2038 = vmatprep.subr.bf16.mxu0 0
        %2039 = vmatpush1.bf16.msra.mxu0 0
        %2040 = vmatprep.subr.bf16.mxu0 0
        %2041 = vmatpush1.bf16.msra.mxu0 0
        %2042 = vmatprep.subr.bf16.mxu0 0
        %2043 = vmatpush1.bf16.msra.mxu0 %v2026
        %2044 = vmatprep.subr.bf16.mxu0 0
        %2045 = vmatpush1.bf16.msra.mxu0 %v2025
        %2046 = vmatprep.subr.bf16.mxu0 0
        %2047 = vmatpush1.bf16.msra.mxu0 %v2024
        %2048 = vmatprep.subr.bf16.mxu0 0
        %2049 = vmatpush1.bf16.msra.mxu0 %v2023
        %2050 = vmatprep.subr.bf16.mxu0 0
        %2051 = vmatpush2.bf16.msra.mxu0 0
        %2052 = vmatprep.subr.bf16.mxu0 0
        %2053 = vmatpush2.bf16.msra.mxu0 0
        %2054 = vmatprep.subr.bf16.mxu0 0
        %2055 = vmatpush2.bf16.msra.mxu0 0
        %2056 = vmatprep.subr.bf16.mxu0 0
        %2057 = vmatpush2.bf16.msra.mxu0 0
        %2058 = vmatprep.subr.bf16.mxu0 0
        %2059 = vmatpush2.bf16.msra.mxu0 0
        %2060 = vmatprep.subr.bf16.mxu0 0
        %2061 = vmatpush2.bf16.msra.mxu0 0
        %2062 = vmatprep.subr.bf16.mxu0 0
        %2063 = vmatpush2.bf16.msra.mxu0 0
        %2064 = vmatprep.subr.bf16.mxu0 0
        %2065 = vmatpush2.bf16.msra.mxu0 0
        %2066 = vmatprep.mubr.bf16.mxu0 0
        %2067 = vmatmul.mubr.bf16.gmra.mxu0 %v2032
        %v2068 = vpop.f32.mrf.mxu0
        %v2069 = vadd.f32 %v2005, %v2068
        %v2070 = vpop.f32.mrf.mxu0
        %v2071 = vpop.f32.mrf.mxu0
        %v2072 = vpop.f32.mrf.mxu0
        %2073 = vdwg.mxu0
        %v2074 = vmax.f32 %v2069, 0.0
        %v2075 = vpack.c.bf16 %v2074, %v2074
        %v2076 = vld [vmem:[%s14] sm:$0xf]
        %v2077 = vld [vmem:[%s14 + $0x4] sm:$0xf]
        %v2078 = vld [vmem:[%s14 + $0x8] sm:$0xf]
        %v2079 = vld [vmem:[%s14 + $0xc] sm:$0xf]
        %v2080 = vld [vmem:[%s14 + $0x10] sm:$0xf]
        %v2081 = vld [vmem:[%s14 + $0x14] sm:$0xf]
        %v2082 = vld [vmem:[%s14 + $0x18] sm:$0xf]
        %v2083 = vld [vmem:[%s14 + $0x1c] sm:$0xf]
        %v2084 = vld [vmem:[%s14 + $0x20] sm:$0xf]
        %v2085 = vld [vmem:[%s14 + $0x24] sm:$0xf]
        %v2086 = vld [vmem:[%s14 + $0x28] sm:$0xf]
        %v2087 = vld [vmem:[%s14 + $0x2c] sm:$0xf]
        %v2088 = vld [vmem:[%s14 + $0x30] sm:$0xf]
        %v2089 = vld [vmem:[%s14 + $0x34] sm:$0xf]
        %v2090 = vld [vmem:[%s14 + $0x38] sm:$0xf]
        %v2091 = vld [vmem:[%s14 + $0x3c] sm:$0xf]
        %v2092 = vld [vmem:[%s15] sm:$0x1]
        %v2094 = vlaneseq
        %v2095 = vshrl.u32 %v2094, 7
        %v2096 = vsub.s32 0, %v2095
        %v2097 = vrot.slane %v2092, %v2096
        %v2115 = vunpack.c.l.b16 %v2076
        %v2116 = vunpack.c.l.b16 %v2077
        %v2117 = vunpack.c.l.b16 %v2078
        %v2118 = vunpack.c.l.b16 %v2079
        %v2119 = vunpack.c.l.b16 %v2080
        %v2120 = vunpack.c.l.b16 %v2081
        %v2121 = vunpack.c.l.b16 %v2082
        %v2122 = vunpack.c.l.b16 %v2083
        %v2123 = vunpack.c.l.b16 %v2084
        %v2124 = vunpack.c.l.b16 %v2085
        %v2125 = vunpack.c.l.b16 %v2086
        %v2126 = vunpack.c.l.b16 %v2087
        %v2127 = vunpack.c.l.b16 %v2088
        %v2128 = vunpack.c.l.b16 %v2089
        %v2129 = vunpack.c.l.b16 %v2090
        %v2130 = vunpack.c.l.b16 %v2091
        %v2131 = vpack.c.b16 %v2116, %v2115
        %v2132 = vpack.c.b16 %v2118, %v2117
        %v2133 = vpack.c.b16 %v2120, %v2119
        %v2134 = vpack.c.b16 %v2122, %v2121
        %v2135 = vpack.c.b16 %v2124, %v2123
        %v2136 = vpack.c.b16 %v2126, %v2125
        %v2137 = vpack.c.b16 %v2128, %v2127
        %v2138 = vpack.c.b16 %v2130, %v2129
        %2147 = vmatprep.subr.bf16.mxu0 0
        %2148 = vmatpush1.bf16.msra.mxu0 %v2138
        %2149 = vmatprep.subr.bf16.mxu0 0
        %2150 = vmatpush1.bf16.msra.mxu0 %v2137
        %2151 = vmatprep.subr.bf16.mxu0 0
        %2152 = vmatpush1.bf16.msra.mxu0 %v2136
        %2153 = vmatprep.subr.bf16.mxu0 0
        %2154 = vmatpush1.bf16.msra.mxu0 %v2135
        %2155 = vmatprep.subr.bf16.mxu0 0
        %2156 = vmatpush1.bf16.msra.mxu0 %v2134
        %2157 = vmatprep.subr.bf16.mxu0 0
        %2158 = vmatpush1.bf16.msra.mxu0 %v2133
        %2159 = vmatprep.subr.bf16.mxu0 0
        %2160 = vmatpush1.bf16.msra.mxu0 %v2132
        %2161 = vmatprep.subr.bf16.mxu0 0
        %2162 = vmatpush1.bf16.msra.mxu0 %v2131
        %2163 = vmatprep.subr.bf16.mxu0 0
        %2164 = vmatpush2.bf16.msra.mxu0 0
        %2165 = vmatprep.subr.bf16.mxu0 0
        %2166 = vmatpush2.bf16.msra.mxu0 0
        %2167 = vmatprep.subr.bf16.mxu0 0
        %2168 = vmatpush2.bf16.msra.mxu0 0
        %2169 = vmatprep.subr.bf16.mxu0 0
        %2170 = vmatpush2.bf16.msra.mxu0 0
        %2171 = vmatprep.subr.bf16.mxu0 0
        %2172 = vmatpush2.bf16.msra.mxu0 0
        %2173 = vmatprep.subr.bf16.mxu0 0
        %2174 = vmatpush2.bf16.msra.mxu0 0
        %2175 = vmatprep.subr.bf16.mxu0 0
        %2176 = vmatpush2.bf16.msra.mxu0 0
        %2177 = vmatprep.subr.bf16.mxu0 0
        %2178 = vmatpush2.bf16.msra.mxu0 0
        %2179 = vmatprep.mubr.bf16.mxu0 0
        %2180 = vmatmul.mubr.bf16.gmra.mxu0 %v2075
        %v2181 = vpop.f32.mrf.mxu0
        %v2182 = vadd.f32 %v2097, %v2181
        %v2183 = vpop.f32.mrf.mxu0
        %v2184 = vpop.f32.mrf.mxu0
        %v2185 = vpop.f32.mrf.mxu0
        %2186 = vdwg.mxu0
        %v2187 = vadd.f32 %v1990, %v2182
        %v2188 = vsel %vm662, %v2187, 0.0
        %2189 = vadd.xlane.f32.xlu0 %v2188
        %v2190 = vpop.xlane.xlu0 %2189
        %v2191 = vmul.f32 %v2190, %v1254
        %v2192 = vsub.f32 %v2187, %v2191
        %v2193 = vmul.f32 %v2192, %v2192
        %v2194 = vsel %vm662, %v2193, 0.0
        %2195 = vadd.xlane.f32.xlu0 %v2194
        %v2196 = vpop.xlane.xlu0 %2195
        %v2197 = vmul.f32 %v2196, %v1254
        %v2198 = vadd.f32 %v2197, 1e-05
        %v2199 = vrsqrt.pop %v2198
        %v2200 = vmul.f32 %v2192, %v2199
        %v2201 = vmul.f32 %v2200, %v1269
        %v2202 = vadd.f32 %v2201, %v1276
        %s2203 = scalar_lea.vmem %s16, 1
        %v2204 = vld [vmem:[%s2203] sm:$0x1]
        %s2205 = scalar_lea.vmem %s17, 1
        %v2206 = vld [vmem:[%s2205] sm:$0x1]
        %v2207 = vpack.c.bf16 %v2202, %v2202
        %s2208 = scalar_lea.vmem %s2, 64
        %v2209 = vld [vmem:[%s2208] sm:$0xff]
        %v2210 = vld [vmem:[%s2208 + $0x8] sm:$0xff]
        %v2211 = vld [vmem:[%s2208 + $0x10] sm:$0xff]
        %v2212 = vld [vmem:[%s2208 + $0x18] sm:$0xff]
        %v2213 = vld [vmem:[%s2208 + $0x20] sm:$0xff]
        %v2214 = vld [vmem:[%s2208 + $0x28] sm:$0xff]
        %v2215 = vld [vmem:[%s2208 + $0x30] sm:$0xff]
        %v2216 = vld [vmem:[%s2208 + $0x38] sm:$0xff]
        %s2217 = scalar_lea.vmem %s3, 2
        %v2218 = vld [vmem:[%s2217] sm:$0x3]
        %v2220 = vlaneseq
        %v2221 = vshrl.u32 %v2220, 7
        %v2222 = vsub.s32 0, %v2221
        %v2223 = vrot.slane %v2218, %v2222
        %v2224 = vlaneseq
        %v2225 = vshrl.u32 %v2224, 7
        %v2226 = vsub.s32 1, %v2225
        %v2227 = vrot.slane %v2218, %v2226
        %v2238 = vunpack.c.l.b16 %v2209
        %v2239 = vunpack.c.h.b16 %v2209
        %v2240 = vunpack.c.l.b16 %v2210
        %v2241 = vunpack.c.h.b16 %v2210
        %v2242 = vunpack.c.l.b16 %v2211
        %v2243 = vunpack.c.h.b16 %v2211
        %v2244 = vunpack.c.l.b16 %v2212
        %v2245 = vunpack.c.h.b16 %v2212
        %v2246 = vunpack.c.l.b16 %v2213
        %v2247 = vunpack.c.h.b16 %v2213
        %v2248 = vunpack.c.l.b16 %v2214
        %v2249 = vunpack.c.h.b16 %v2214
        %v2250 = vunpack.c.l.b16 %v2215
        %v2251 = vunpack.c.h.b16 %v2215
        %v2252 = vunpack.c.l.b16 %v2216
        %v2253 = vunpack.c.h.b16 %v2216
        %v2254 = vpack.c.b16 %v2240, %v2238
        %v2255 = vpack.c.b16 %v2241, %v2239
        %v2256 = vpack.c.b16 %v2244, %v2242
        %v2257 = vpack.c.b16 %v2245, %v2243
        %v2258 = vpack.c.b16 %v2248, %v2246
        %v2259 = vpack.c.b16 %v2249, %v2247
        %v2260 = vpack.c.b16 %v2252, %v2250
        %v2261 = vpack.c.b16 %v2253, %v2251
        %v2271 = vsel %vm662, %v2207, 0
        %2273 = vmatprep.subr.bf16.mxu0 0
        %2274 = vmatpush1.bf16.msra.mxu0 0
        %2275 = vmatprep.subr.bf16.mxu0 0
        %2276 = vmatpush1.bf16.msra.mxu0 0
        %2277 = vmatprep.subr.bf16.mxu0 0
        %2278 = vmatpush1.bf16.msra.mxu0 0
        %2279 = vmatprep.subr.bf16.mxu0 0
        %2280 = vmatpush1.bf16.msra.mxu0 0
        %2281 = vmatprep.subr.bf16.mxu0 %v2261
        %2282 = vmatpush1.bf16.msra.mxu0 %v2260
        %2283 = vmatprep.subr.bf16.mxu0 %v2259
        %2284 = vmatpush1.bf16.msra.mxu0 %v2258
        %2285 = vmatprep.subr.bf16.mxu0 %v2257
        %2286 = vmatpush1.bf16.msra.mxu0 %v2256
        %2287 = vmatprep.subr.bf16.mxu0 %v2255
        %2288 = vmatpush1.bf16.msra.mxu0 %v2254
        %2289 = vmatprep.subr.bf16.mxu0 0
        %2290 = vmatpush2.bf16.msra.mxu0 0
        %2291 = vmatprep.subr.bf16.mxu0 0
        %2292 = vmatpush2.bf16.msra.mxu0 0
        %2293 = vmatprep.subr.bf16.mxu0 0
        %2294 = vmatpush2.bf16.msra.mxu0 0
        %2295 = vmatprep.subr.bf16.mxu0 0
        %2296 = vmatpush2.bf16.msra.mxu0 0
        %2297 = vmatprep.subr.bf16.mxu0 0
        %2298 = vmatpush2.bf16.msra.mxu0 0
        %2299 = vmatprep.subr.bf16.mxu0 0
        %2300 = vmatpush2.bf16.msra.mxu0 0
        %2301 = vmatprep.subr.bf16.mxu0 0
        %2302 = vmatpush2.bf16.msra.mxu0 0
        %2303 = vmatprep.subr.bf16.mxu0 0
        %2304 = vmatpush2.bf16.msra.mxu0 0
        %2305 = vmatprep.mubr.bf16.mxu0 0
        %2306 = vmatmul.mubr.bf16.gmra.mxu0 %v2271
        %v2307 = vpop.f32.mrf.mxu0
        %v2308 = vadd.f32 %v2223, %v2307
        %v2309 = vpop.f32.mrf.mxu0
        %v2310 = vadd.f32 %v2227, %v2309
        %v2311 = vpop.f32.mrf.mxu0
        %v2312 = vpop.f32.mrf.mxu0
        %2313 = vdwg.mxu0
        %v2314 = vpack.c.bf16 %v2308, %v2308
        %v2315 = vpack.c.bf16 %v2310, %v2310
        %2317 = vrot.lane.b32.xlu0 %v2314, 64
        %v2318 = vpop.permute.xlu0 %2317
        %v2320 = vsel %vm712, %v2314, 0
        %v2323 = vsel %vm712, %v2318, 0
        %2325 = vmatprep.subr.bf16.mxu0 0
        %2326 = vmatpush1.bf16.xpose.msra.mxu0 0
        %2327 = vmatprep.subr.bf16.mxu0 0
        %2328 = vmatpush1.bf16.xpose.msra.mxu0 0
        %2329 = vmatprep.subr.bf16.mxu0 0
        %2330 = vmatpush1.bf16.xpose.msra.mxu0 0
        %2331 = vmatprep.subr.bf16.mxu0 0
        %2332 = vmatpush1.bf16.xpose.msra.mxu0 0
        %2333 = vmatprep.subr.bf16.mxu0 0
        %2334 = vmatpush1.bf16.xpose.msra.mxu0 0
        %2335 = vmatprep.subr.bf16.mxu0 0
        %2336 = vmatpush1.bf16.xpose.msra.mxu0 0
        %2337 = vmatprep.subr.bf16.mxu0 0
        %2338 = vmatpush1.bf16.xpose.msra.mxu0 0
        %2339 = vmatprep.subr.bf16.mxu0 0
        %2340 = vmatpush1.bf16.xpose.msra.mxu0 %v2323
        %2341 = vmatprep.subr.bf16.mxu0 0
        %2342 = vmatpush2.bf16.xpose.msra.mxu0 0
        %2343 = vmatprep.subr.bf16.mxu0 0
        %2344 = vmatpush2.bf16.xpose.msra.mxu0 0
        %2345 = vmatprep.subr.bf16.mxu0 0
        %2346 = vmatpush2.bf16.xpose.msra.mxu0 0
        %2347 = vmatprep.subr.bf16.mxu0 0
        %2348 = vmatpush2.bf16.xpose.msra.mxu0 0
        %2349 = vmatprep.subr.bf16.mxu0 0
        %2350 = vmatpush2.bf16.xpose.msra.mxu0 0
        %2351 = vmatprep.subr.bf16.mxu0 0
        %2352 = vmatpush2.bf16.xpose.msra.mxu0 0
        %2353 = vmatprep.subr.bf16.mxu0 0
        %2354 = vmatpush2.bf16.xpose.msra.mxu0 0
        %2355 = vmatprep.subr.bf16.mxu0 0
        %2356 = vmatpush2.bf16.xpose.msra.mxu0 0
        %2357 = vmatprep.mubr.bf16.mxu0 0
        %2358 = vmatmul.mubr.bf16.gmra.mxu0 %v2320
        %v2359 = vpop.f32.mrf.mxu0
        %v2360 = vadd.f32 0.0, %v2359
        %v2361 = vpop.f32.mrf.mxu0
        %v2362 = vpop.f32.mrf.mxu0
        %v2363 = vpop.f32.mrf.mxu0
        %2364 = vdwg.mxu0
        %v2365 = vsel %vm759, %v2360, -inf
        %2366 = vmax.xlane.f32.xlu0 %v2365
        %v2367 = vpop.xlane.xlu0 %2366
        %v2368 = vsub.f32 %v2360, %v2367
        %v2369 = vmul.f32 %v2368, 1.442695
        %v2370 = vpow.pop %v2369
        %v2371 = vsel %vm759, %v2370, 0.0
        %2372 = vadd.xlane.f32.xlu0 %v2371
        %v2373 = vpop.xlane.xlu0 %2372
        %v2374 = vrcp.pop %v2373
        %v2375 = vmul.f32 %v2370, %v2374
        %v2376 = vpack.c.bf16 %v2375, %v2375
        %v2378 = vsel %vm759, %v2376, 0
        %v2381 = vsel %vm775, %v2315, 0
        %2383 = vmatprep.subr.bf16.mxu0 0
        %2384 = vmatpush1.bf16.msra.mxu0 0
        %2385 = vmatprep.subr.bf16.mxu0 0
        %2386 = vmatpush1.bf16.msra.mxu0 0
        %2387 = vmatprep.subr.bf16.mxu0 0
        %2388 = vmatpush1.bf16.msra.mxu0 0
        %2389 = vmatprep.subr.bf16.mxu0 0
        %2390 = vmatpush1.bf16.msra.mxu0 0
        %2391 = vmatprep.subr.bf16.mxu0 0
        %2392 = vmatpush1.bf16.msra.mxu0 0
        %2393 = vmatprep.subr.bf16.mxu0 0
        %2394 = vmatpush1.bf16.msra.mxu0 0
        %2395 = vmatprep.subr.bf16.mxu0 0
        %2396 = vmatpush1.bf16.msra.mxu0 0
        %2397 = vmatprep.subr.bf16.mxu0 0
        %2398 = vmatpush1.bf16.msra.mxu0 %v2381
        %2399 = vmatprep.subr.bf16.mxu0 0
        %2400 = vmatpush2.bf16.msra.mxu0 0
        %2401 = vmatprep.subr.bf16.mxu0 0
        %2402 = vmatpush2.bf16.msra.mxu0 0
        %2403 = vmatprep.subr.bf16.mxu0 0
        %2404 = vmatpush2.bf16.msra.mxu0 0
        %2405 = vmatprep.subr.bf16.mxu0 0
        %2406 = vmatpush2.bf16.msra.mxu0 0
        %2407 = vmatprep.subr.bf16.mxu0 0
        %2408 = vmatpush2.bf16.msra.mxu0 0
        %2409 = vmatprep.subr.bf16.mxu0 0
        %2410 = vmatpush2.bf16.msra.mxu0 0
        %2411 = vmatprep.subr.bf16.mxu0 0
        %2412 = vmatpush2.bf16.msra.mxu0 0
        %2413 = vmatprep.subr.bf16.mxu0 0
        %2414 = vmatpush2.bf16.msra.mxu0 0
        %2415 = vmatprep.mubr.bf16.mxu0 0
        %2416 = vmatmul.mubr.bf16.gmra.mxu0 %v2378
        %v2417 = vpop.f32.mrf.mxu0
        %v2418 = vadd.f32 0.0, %v2417
        %v2419 = vpop.f32.mrf.mxu0
        %v2420 = vpop.f32.mrf.mxu0
        %v2421 = vpop.f32.mrf.mxu0
        %2422 = vdwg.mxu0
        %2423 = vrot.lane.b32.xlu0 %v2314, 112
        %v2424 = vpop.permute.xlu0 %2423
        %2425 = vrot.lane.b32.xlu0 %v2314, 48
        %v2426 = vpop.permute.xlu0 %2425
        %v2428 = vsel %vm712, %v2424, 0
        %v2431 = vsel %vm712, %v2426, 0
        %2433 = vmatprep.subr.bf16.mxu0 0
        %2434 = vmatpush1.bf16.xpose.msra.mxu0 0
        %2435 = vmatprep.subr.bf16.mxu0 0
        %2436 = vmatpush1.bf16.xpose.msra.mxu0 0
        %2437 = vmatprep.subr.bf16.mxu0 0
        %2438 = vmatpush1.bf16.xpose.msra.mxu0 0
        %2439 = vmatprep.subr.bf16.mxu0 0
        %2440 = vmatpush1.bf16.xpose.msra.mxu0 0
        %2441 = vmatprep.subr.bf16.mxu0 0
        %2442 = vmatpush1.bf16.xpose.msra.mxu0 0
        %2443 = vmatprep.subr.bf16.mxu0 0
        %2444 = vmatpush1.bf16.xpose.msra.mxu0 0
        %2445 = vmatprep.subr.bf16.mxu0 0
        %2446 = vmatpush1.bf16.xpose.msra.mxu0 0
        %2447 = vmatprep.subr.bf16.mxu0 0
        %2448 = vmatpush1.bf16.xpose.msra.mxu0 %v2431
        %2449 = vmatprep.subr.bf16.mxu0 0
        %2450 = vmatpush2.bf16.xpose.msra.mxu0 0
        %2451 = vmatprep.subr.bf16.mxu0 0
        %2452 = vmatpush2.bf16.xpose.msra.mxu0 0
        %2453 = vmatprep.subr.bf16.mxu0 0
        %2454 = vmatpush2.bf16.xpose.msra.mxu0 0
        %2455 = vmatprep.subr.bf16.mxu0 0
        %2456 = vmatpush2.bf16.xpose.msra.mxu0 0
        %2457 = vmatprep.subr.bf16.mxu0 0
        %2458 = vmatpush2.bf16.xpose.msra.mxu0 0
        %2459 = vmatprep.subr.bf16.mxu0 0
        %2460 = vmatpush2.bf16.xpose.msra.mxu0 0
        %2461 = vmatprep.subr.bf16.mxu0 0
        %2462 = vmatpush2.bf16.xpose.msra.mxu0 0
        %2463 = vmatprep.subr.bf16.mxu0 0
        %2464 = vmatpush2.bf16.xpose.msra.mxu0 0
        %2465 = vmatprep.mubr.bf16.mxu0 0
        %2466 = vmatmul.mubr.bf16.gmra.mxu0 %v2428
        %v2467 = vpop.f32.mrf.mxu0
        %v2468 = vadd.f32 0.0, %v2467
        %v2469 = vpop.f32.mrf.mxu0
        %v2470 = vpop.f32.mrf.mxu0
        %v2471 = vpop.f32.mrf.mxu0
        %2472 = vdwg.mxu0
        %v2473 = vsel %vm759, %v2468, -inf
        %2474 = vmax.xlane.f32.xlu0 %v2473
        %v2475 = vpop.xlane.xlu0 %2474
        %v2476 = vsub.f32 %v2468, %v2475
        %v2477 = vmul.f32 %v2476, 1.442695
        %v2478 = vpow.pop %v2477
        %v2479 = vsel %vm759, %v2478, 0.0
        %2480 = vadd.xlane.f32.xlu0 %v2479
        %v2481 = vpop.xlane.xlu0 %2480
        %v2482 = vrcp.pop %v2481
        %v2483 = vmul.f32 %v2478, %v2482
        %v2484 = vpack.c.bf16 %v2483, %v2483
        %2486 = vrot.lane.b32.xlu0 %v2315, 112
        %v2487 = vpop.permute.xlu0 %2486
        %v2489 = vsel %vm759, %v2484, 0
        %v2492 = vsel %vm775, %v2487, 0
        %2494 = vmatprep.subr.bf16.mxu0 0
        %2495 = vmatpush1.bf16.msra.mxu0 0
        %2496 = vmatprep.subr.bf16.mxu0 0
        %2497 = vmatpush1.bf16.msra.mxu0 0
        %2498 = vmatprep.subr.bf16.mxu0 0
        %2499 = vmatpush1.bf16.msra.mxu0 0
        %2500 = vmatprep.subr.bf16.mxu0 0
        %2501 = vmatpush1.bf16.msra.mxu0 0
        %2502 = vmatprep.subr.bf16.mxu0 0
        %2503 = vmatpush1.bf16.msra.mxu0 0
        %2504 = vmatprep.subr.bf16.mxu0 0
        %2505 = vmatpush1.bf16.msra.mxu0 0
        %2506 = vmatprep.subr.bf16.mxu0 0
        %2507 = vmatpush1.bf16.msra.mxu0 0
        %2508 = vmatprep.subr.bf16.mxu0 0
        %2509 = vmatpush1.bf16.msra.mxu0 %v2492
        %2510 = vmatprep.subr.bf16.mxu0 0
        %2511 = vmatpush2.bf16.msra.mxu0 0
        %2512 = vmatprep.subr.bf16.mxu0 0
        %2513 = vmatpush2.bf16.msra.mxu0 0
        %2514 = vmatprep.subr.bf16.mxu0 0
        %2515 = vmatpush2.bf16.msra.mxu0 0
        %2516 = vmatprep.subr.bf16.mxu0 0
        %2517 = vmatpush2.bf16.msra.mxu0 0
        %2518 = vmatprep.subr.bf16.mxu0 0
        %2519 = vmatpush2.bf16.msra.mxu0 0
        %2520 = vmatprep.subr.bf16.mxu0 0
        %2521 = vmatpush2.bf16.msra.mxu0 0
        %2522 = vmatprep.subr.bf16.mxu0 0
        %2523 = vmatpush2.bf16.msra.mxu0 0
        %2524 = vmatprep.subr.bf16.mxu0 0
        %2525 = vmatpush2.bf16.msra.mxu0 0
        %2526 = vmatprep.mubr.bf16.mxu0 0
        %2527 = vmatmul.mubr.bf16.gmra.mxu0 %v2489
        %v2528 = vpop.f32.mrf.mxu0
        %v2529 = vadd.f32 0.0, %v2528
        %v2530 = vpop.f32.mrf.mxu0
        %v2531 = vpop.f32.mrf.mxu0
        %v2532 = vpop.f32.mrf.mxu0
        %2533 = vdwg.mxu0
        %2534 = vrot.lane.b32.xlu0 %v2314, 96
        %v2535 = vpop.permute.xlu0 %2534
        %2536 = vrot.lane.b32.xlu0 %v2314, 32
        %v2537 = vpop.permute.xlu0 %2536
        %v2539 = vsel %vm712, %v2535, 0
        %v2542 = vsel %vm712, %v2537, 0
        %2544 = vmatprep.subr.bf16.mxu0 0
        %2545 = vmatpush1.bf16.xpose.msra.mxu0 0
        %2546 = vmatprep.subr.bf16.mxu0 0
        %2547 = vmatpush1.bf16.xpose.msra.mxu0 0
        %2548 = vmatprep.subr.bf16.mxu0 0
        %2549 = vmatpush1.bf16.xpose.msra.mxu0 0
        %2550 = vmatprep.subr.bf16.mxu0 0
        %2551 = vmatpush1.bf16.xpose.msra.mxu0 0
        %2552 = vmatprep.subr.bf16.mxu0 0
        %2553 = vmatpush1.bf16.xpose.msra.mxu0 0
        %2554 = vmatprep.subr.bf16.mxu0 0
        %2555 = vmatpush1.bf16.xpose.msra.mxu0 0
        %2556 = vmatprep.subr.bf16.mxu0 0
        %2557 = vmatpush1.bf16.xpose.msra.mxu0 0
        %2558 = vmatprep.subr.bf16.mxu0 0
        %2559 = vmatpush1.bf16.xpose.msra.mxu0 %v2542
        %2560 = vmatprep.subr.bf16.mxu0 0
        %2561 = vmatpush2.bf16.xpose.msra.mxu0 0
        %2562 = vmatprep.subr.bf16.mxu0 0
        %2563 = vmatpush2.bf16.xpose.msra.mxu0 0
        %2564 = vmatprep.subr.bf16.mxu0 0
        %2565 = vmatpush2.bf16.xpose.msra.mxu0 0
        %2566 = vmatprep.subr.bf16.mxu0 0
        %2567 = vmatpush2.bf16.xpose.msra.mxu0 0
        %2568 = vmatprep.subr.bf16.mxu0 0
        %2569 = vmatpush2.bf16.xpose.msra.mxu0 0
        %2570 = vmatprep.subr.bf16.mxu0 0
        %2571 = vmatpush2.bf16.xpose.msra.mxu0 0
        %2572 = vmatprep.subr.bf16.mxu0 0
        %2573 = vmatpush2.bf16.xpose.msra.mxu0 0
        %2574 = vmatprep.subr.bf16.mxu0 0
        %2575 = vmatpush2.bf16.xpose.msra.mxu0 0
        %2576 = vmatprep.mubr.bf16.mxu0 0
        %2577 = vmatmul.mubr.bf16.gmra.mxu0 %v2539
        %v2578 = vpop.f32.mrf.mxu0
        %v2579 = vadd.f32 0.0, %v2578
        %v2580 = vpop.f32.mrf.mxu0
        %v2581 = vpop.f32.mrf.mxu0
        %v2582 = vpop.f32.mrf.mxu0
        %2583 = vdwg.mxu0
        %v2584 = vsel %vm759, %v2579, -inf
        %2585 = vmax.xlane.f32.xlu0 %v2584
        %v2586 = vpop.xlane.xlu0 %2585
        %v2587 = vsub.f32 %v2579, %v2586
        %v2588 = vmul.f32 %v2587, 1.442695
        %v2589 = vpow.pop %v2588
        %v2590 = vsel %vm759, %v2589, 0.0
        %2591 = vadd.xlane.f32.xlu0 %v2590
        %v2592 = vpop.xlane.xlu0 %2591
        %v2593 = vrcp.pop %v2592
        %v2594 = vmul.f32 %v2589, %v2593
        %v2595 = vpack.c.bf16 %v2594, %v2594
        %2596 = vrot.lane.b32.xlu0 %v2315, 96
        %v2597 = vpop.permute.xlu0 %2596
        %v2599 = vsel %vm759, %v2595, 0
        %v2602 = vsel %vm775, %v2597, 0
        %2604 = vmatprep.subr.bf16.mxu0 0
        %2605 = vmatpush1.bf16.msra.mxu0 0
        %2606 = vmatprep.subr.bf16.mxu0 0
        %2607 = vmatpush1.bf16.msra.mxu0 0
        %2608 = vmatprep.subr.bf16.mxu0 0
        %2609 = vmatpush1.bf16.msra.mxu0 0
        %2610 = vmatprep.subr.bf16.mxu0 0
        %2611 = vmatpush1.bf16.msra.mxu0 0
        %2612 = vmatprep.subr.bf16.mxu0 0
        %2613 = vmatpush1.bf16.msra.mxu0 0
        %2614 = vmatprep.subr.bf16.mxu0 0
        %2615 = vmatpush1.bf16.msra.mxu0 0
        %2616 = vmatprep.subr.bf16.mxu0 0
        %2617 = vmatpush1.bf16.msra.mxu0 0
        %2618 = vmatprep.subr.bf16.mxu0 0
        %2619 = vmatpush1.bf16.msra.mxu0 %v2602
        %2620 = vmatprep.subr.bf16.mxu0 0
        %2621 = vmatpush2.bf16.msra.mxu0 0
        %2622 = vmatprep.subr.bf16.mxu0 0
        %2623 = vmatpush2.bf16.msra.mxu0 0
        %2624 = vmatprep.subr.bf16.mxu0 0
        %2625 = vmatpush2.bf16.msra.mxu0 0
        %2626 = vmatprep.subr.bf16.mxu0 0
        %2627 = vmatpush2.bf16.msra.mxu0 0
        %2628 = vmatprep.subr.bf16.mxu0 0
        %2629 = vmatpush2.bf16.msra.mxu0 0
        %2630 = vmatprep.subr.bf16.mxu0 0
        %2631 = vmatpush2.bf16.msra.mxu0 0
        %2632 = vmatprep.subr.bf16.mxu0 0
        %2633 = vmatpush2.bf16.msra.mxu0 0
        %2634 = vmatprep.subr.bf16.mxu0 0
        %2635 = vmatpush2.bf16.msra.mxu0 0
        %2636 = vmatprep.mubr.bf16.mxu0 0
        %2637 = vmatmul.mubr.bf16.gmra.mxu0 %v2599
        %v2638 = vpop.f32.mrf.mxu0
        %v2639 = vadd.f32 0.0, %v2638
        %v2640 = vpop.f32.mrf.mxu0
        %v2641 = vpop.f32.mrf.mxu0
        %v2642 = vpop.f32.mrf.mxu0
        %2643 = vdwg.mxu0
        %2644 = vrot.lane.b32.xlu0 %v2314, 80
        %v2645 = vpop.permute.xlu0 %2644
        %2646 = vrot.lane.b32.xlu0 %v2314, 16
        %v2647 = vpop.permute.xlu0 %2646
        %v2649 = vsel %vm712, %v2645, 0
        %v2652 = vsel %vm712, %v2647, 0
        %2654 = vmatprep.subr.bf16.mxu0 0
        %2655 = vmatpush1.bf16.xpose.msra.mxu0 0
        %2656 = vmatprep.subr.bf16.mxu0 0
        %2657 = vmatpush1.bf16.xpose.msra.mxu0 0
        %2658 = vmatprep.subr.bf16.mxu0 0
        %2659 = vmatpush1.bf16.xpose.msra.mxu0 0
        %2660 = vmatprep.subr.bf16.mxu0 0
        %2661 = vmatpush1.bf16.xpose.msra.mxu0 0
        %2662 = vmatprep.subr.bf16.mxu0 0
        %2663 = vmatpush1.bf16.xpose.msra.mxu0 0
        %2664 = vmatprep.subr.bf16.mxu0 0
        %2665 = vmatpush1.bf16.xpose.msra.mxu0 0
        %2666 = vmatprep.subr.bf16.mxu0 0
        %2667 = vmatpush1.bf16.xpose.msra.mxu0 0
        %2668 = vmatprep.subr.bf16.mxu0 0
        %2669 = vmatpush1.bf16.xpose.msra.mxu0 %v2652
        %2670 = vmatprep.subr.bf16.mxu0 0
        %2671 = vmatpush2.bf16.xpose.msra.mxu0 0
        %2672 = vmatprep.subr.bf16.mxu0 0
        %2673 = vmatpush2.bf16.xpose.msra.mxu0 0
        %2674 = vmatprep.subr.bf16.mxu0 0
        %2675 = vmatpush2.bf16.xpose.msra.mxu0 0
        %2676 = vmatprep.subr.bf16.mxu0 0
        %2677 = vmatpush2.bf16.xpose.msra.mxu0 0
        %2678 = vmatprep.subr.bf16.mxu0 0
        %2679 = vmatpush2.bf16.xpose.msra.mxu0 0
        %2680 = vmatprep.subr.bf16.mxu0 0
        %2681 = vmatpush2.bf16.xpose.msra.mxu0 0
        %2682 = vmatprep.subr.bf16.mxu0 0
        %2683 = vmatpush2.bf16.xpose.msra.mxu0 0
        %2684 = vmatprep.subr.bf16.mxu0 0
        %2685 = vmatpush2.bf16.xpose.msra.mxu0 0
        %2686 = vmatprep.mubr.bf16.mxu0 0
        %2687 = vmatmul.mubr.bf16.gmra.mxu0 %v2649
        %v2688 = vpop.f32.mrf.mxu0
        %v2689 = vadd.f32 0.0, %v2688
        %v2690 = vpop.f32.mrf.mxu0
        %v2691 = vpop.f32.mrf.mxu0
        %v2692 = vpop.f32.mrf.mxu0
        %2693 = vdwg.mxu0
        %v2694 = vsel %vm759, %v2689, -inf
        %2695 = vmax.xlane.f32.xlu0 %v2694
        %v2696 = vpop.xlane.xlu0 %2695
        %v2697 = vsub.f32 %v2689, %v2696
        %v2698 = vmul.f32 %v2697, 1.442695
        %v2699 = vpow.pop %v2698
        %v2700 = vsel %vm759, %v2699, 0.0
        %2701 = vadd.xlane.f32.xlu0 %v2700
        %v2702 = vpop.xlane.xlu0 %2701
        %v2703 = vrcp.pop %v2702
        %v2704 = vmul.f32 %v2699, %v2703
        %v2705 = vpack.c.bf16 %v2704, %v2704
        %2706 = vrot.lane.b32.xlu0 %v2315, 80
        %v2707 = vpop.permute.xlu0 %2706
        %v2709 = vsel %vm759, %v2705, 0
        %v2712 = vsel %vm775, %v2707, 0
        %2714 = vmatprep.subr.bf16.mxu0 0
        %2715 = vmatpush1.bf16.msra.mxu0 0
        %2716 = vmatprep.subr.bf16.mxu0 0
        %2717 = vmatpush1.bf16.msra.mxu0 0
        %2718 = vmatprep.subr.bf16.mxu0 0
        %2719 = vmatpush1.bf16.msra.mxu0 0
        %2720 = vmatprep.subr.bf16.mxu0 0
        %2721 = vmatpush1.bf16.msra.mxu0 0
        %2722 = vmatprep.subr.bf16.mxu0 0
        %2723 = vmatpush1.bf16.msra.mxu0 0
        %2724 = vmatprep.subr.bf16.mxu0 0
        %2725 = vmatpush1.bf16.msra.mxu0 0
        %2726 = vmatprep.subr.bf16.mxu0 0
        %2727 = vmatpush1.bf16.msra.mxu0 0
        %2728 = vmatprep.subr.bf16.mxu0 0
        %2729 = vmatpush1.bf16.msra.mxu0 %v2712
        %2730 = vmatprep.subr.bf16.mxu0 0
        %2731 = vmatpush2.bf16.msra.mxu0 0
        %2732 = vmatprep.subr.bf16.mxu0 0
        %2733 = vmatpush2.bf16.msra.mxu0 0
        %2734 = vmatprep.subr.bf16.mxu0 0
        %2735 = vmatpush2.bf16.msra.mxu0 0
        %2736 = vmatprep.subr.bf16.mxu0 0
        %2737 = vmatpush2.bf16.msra.mxu0 0
        %2738 = vmatprep.subr.bf16.mxu0 0
        %2739 = vmatpush2.bf16.msra.mxu0 0
        %2740 = vmatprep.subr.bf16.mxu0 0
        %2741 = vmatpush2.bf16.msra.mxu0 0
        %2742 = vmatprep.subr.bf16.mxu0 0
        %2743 = vmatpush2.bf16.msra.mxu0 0
        %2744 = vmatprep.subr.bf16.mxu0 0
        %2745 = vmatpush2.bf16.msra.mxu0 0
        %2746 = vmatprep.mubr.bf16.mxu0 0
        %2747 = vmatmul.mubr.bf16.gmra.mxu0 %v2709
        %v2748 = vpop.f32.mrf.mxu0
        %v2749 = vadd.f32 0.0, %v2748
        %v2750 = vpop.f32.mrf.mxu0
        %v2751 = vpop.f32.mrf.mxu0
        %v2752 = vpop.f32.mrf.mxu0
        %2753 = vdwg.mxu0
        %2755 = vrot.lane.b32.xlu0 %v2529, 16
        %v2756 = vpop.permute.xlu0 %2755
        %2759 = vrot.lane.b32.xlu0 %v2639, 32
        %v2760 = vpop.permute.xlu0 %2759
        %2763 = vrot.lane.b32.xlu0 %v2749, 48
        %v2764 = vpop.permute.xlu0 %2763
        %v2766 = vsel %vm712, %v2418, %v2756
        %v2767 = vsel %vm1163, %v2766, %v2760
        %v2768 = vsel %vm1165, %v2767, %v2764
        %v2769 = vpack.c.bf16 %v2768, %v2768
        %s2770 = scalar_lea.vmem %s4, 32
        %v2771 = vld [vmem:[%s2770] sm:$0xf]
        %v2772 = vld [vmem:[%s2770 + $0x4] sm:$0xf]
        %v2773 = vld [vmem:[%s2770 + $0x8] sm:$0xf]
        %v2774 = vld [vmem:[%s2770 + $0xc] sm:$0xf]
        %v2775 = vld [vmem:[%s2770 + $0x10] sm:$0xf]
        %v2776 = vld [vmem:[%s2770 + $0x14] sm:$0xf]
        %v2777 = vld [vmem:[%s2770 + $0x18] sm:$0xf]
        %v2778 = vld [vmem:[%s2770 + $0x1c] sm:$0xf]
        %s2779 = scalar_lea.vmem %s5, 1
        %v2780 = vld [vmem:[%s2779] sm:$0x1]
        %v2782 = vlaneseq
        %v2783 = vshrl.u32 %v2782, 7
        %v2784 = vsub.s32 0, %v2783
        %v2785 = vrot.slane %v2780, %v2784
        %v2795 = vunpack.c.l.b16 %v2771
        %v2796 = vunpack.c.l.b16 %v2772
        %v2797 = vunpack.c.l.b16 %v2773
        %v2798 = vunpack.c.l.b16 %v2774
        %v2799 = vunpack.c.l.b16 %v2775
        %v2800 = vunpack.c.l.b16 %v2776
        %v2801 = vunpack.c.l.b16 %v2777
        %v2802 = vunpack.c.l.b16 %v2778
        %v2803 = vpack.c.b16 %v2796, %v2795
        %v2804 = vpack.c.b16 %v2798, %v2797
        %v2805 = vpack.c.b16 %v2800, %v2799
        %v2806 = vpack.c.b16 %v2802, %v2801
        %v2812 = vsel %vm662, %v2769, 0
        %2814 = vmatprep.subr.bf16.mxu0 0
        %2815 = vmatpush1.bf16.msra.mxu0 0
        %2816 = vmatprep.subr.bf16.mxu0 0
        %2817 = vmatpush1.bf16.msra.mxu0 0
        %2818 = vmatprep.subr.bf16.mxu0 0
        %2819 = vmatpush1.bf16.msra.mxu0 0
        %2820 = vmatprep.subr.bf16.mxu0 0
        %2821 = vmatpush1.bf16.msra.mxu0 0
        %2822 = vmatprep.subr.bf16.mxu0 0
        %2823 = vmatpush1.bf16.msra.mxu0 %v2806
        %2824 = vmatprep.subr.bf16.mxu0 0
        %2825 = vmatpush1.bf16.msra.mxu0 %v2805
        %2826 = vmatprep.subr.bf16.mxu0 0
        %2827 = vmatpush1.bf16.msra.mxu0 %v2804
        %2828 = vmatprep.subr.bf16.mxu0 0
        %2829 = vmatpush1.bf16.msra.mxu0 %v2803
        %2830 = vmatprep.subr.bf16.mxu0 0
        %2831 = vmatpush2.bf16.msra.mxu0 0
        %2832 = vmatprep.subr.bf16.mxu0 0
        %2833 = vmatpush2.bf16.msra.mxu0 0
        %2834 = vmatprep.subr.bf16.mxu0 0
        %2835 = vmatpush2.bf16.msra.mxu0 0
        %2836 = vmatprep.subr.bf16.mxu0 0
        %2837 = vmatpush2.bf16.msra.mxu0 0
        %2838 = vmatprep.subr.bf16.mxu0 0
        %2839 = vmatpush2.bf16.msra.mxu0 0
        %2840 = vmatprep.subr.bf16.mxu0 0
        %2841 = vmatpush2.bf16.msra.mxu0 0
        %2842 = vmatprep.subr.bf16.mxu0 0
        %2843 = vmatpush2.bf16.msra.mxu0 0
        %2844 = vmatprep.subr.bf16.mxu0 0
        %2845 = vmatpush2.bf16.msra.mxu0 0
        %2846 = vmatprep.mubr.bf16.mxu0 0
        %2847 = vmatmul.mubr.bf16.gmra.mxu0 %v2812
        %v2848 = vpop.f32.mrf.mxu0
        %v2849 = vadd.f32 %v2785, %v2848
        %v2850 = vpop.f32.mrf.mxu0
        %v2851 = vpop.f32.mrf.mxu0
        %v2852 = vpop.f32.mrf.mxu0
        %2853 = vdwg.mxu0
        %v2854 = vadd.f32 %v2202, %v2849
        %v2855 = vsel %vm662, %v2854, 0.0
        %2856 = vadd.xlane.f32.xlu0 %v2855
        %v2857 = vpop.xlane.xlu0 %2856
        %v2858 = vmul.f32 %v2857, %v1254
        %v2859 = vsub.f32 %v2854, %v2858
        %v2860 = vmul.f32 %v2859, %v2859
        %v2861 = vsel %vm662, %v2860, 0.0
        %2862 = vadd.xlane.f32.xlu0 %v2861
        %v2863 = vpop.xlane.xlu0 %2862
        %v2864 = vmul.f32 %v2863, %v1254
        %v2865 = vadd.f32 %v2864, 1e-05
        %v2866 = vrsqrt.pop %v2865
        %v2867 = vmul.f32 %v2859, %v2866
        %v2869 = vlaneseq
        %v2870 = vshrl.u32 %v2869, 7
        %v2871 = vsub.s32 0, %v2870
        %v2872 = vrot.slane %v2204, %v2871
        %v2874 = vmul.f32 %v2867, %v2872
        %v2876 = vlaneseq
        %v2877 = vshrl.u32 %v2876, 7
        %v2878 = vsub.s32 0, %v2877
        %v2879 = vrot.slane %v2206, %v2878
        %v2881 = vadd.f32 %v2874, %v2879
        %v2882 = vpack.c.bf16 %v2881, %v2881
        %s2883 = scalar_lea.vmem %s6, 32
        %v2884 = vld [vmem:[%s2883] sm:$0xf]
        %v2885 = vld [vmem:[%s2883 + $0x4] sm:$0xf]
        %v2886 = vld [vmem:[%s2883 + $0x8] sm:$0xf]
        %v2887 = vld [vmem:[%s2883 + $0xc] sm:$0xf]
        %v2888 = vld [vmem:[%s2883 + $0x10] sm:$0xf]
        %v2889 = vld [vmem:[%s2883 + $0x14] sm:$0xf]
        %v2890 = vld [vmem:[%s2883 + $0x18] sm:$0xf]
        %v2891 = vld [vmem:[%s2883 + $0x1c] sm:$0xf]
        %s2892 = scalar_lea.vmem %s7, 1
        %v2893 = vld [vmem:[%s2892] sm:$0x1]
        %v2895 = vlaneseq
        %v2896 = vshrl.u32 %v2895, 7
        %v2897 = vsub.s32 0, %v2896
        %v2898 = vrot.slane %v2893, %v2897
        %v2908 = vunpack.c.l.b16 %v2884
        %v2909 = vunpack.c.l.b16 %v2885
        %v2910 = vunpack.c.l.b16 %v2886
        %v2911 = vunpack.c.l.b16 %v2887
        %v2912 = vunpack.c.l.b16 %v2888
        %v2913 = vunpack.c.l.b16 %v2889
        %v2914 = vunpack.c.l.b16 %v2890
        %v2915 = vunpack.c.l.b16 %v2891
        %v2916 = vpack.c.b16 %v2909, %v2908
        %v2917 = vpack.c.b16 %v2911, %v2910
        %v2918 = vpack.c.b16 %v2913, %v2912
        %v2919 = vpack.c.b16 %v2915, %v2914
        %v2925 = vsel %vm662, %v2882, 0
        %2927 = vmatprep.subr.bf16.mxu0 0
        %2928 = vmatpush1.bf16.msra.mxu0 0
        %2929 = vmatprep.subr.bf16.mxu0 0
        %2930 = vmatpush1.bf16.msra.mxu0 0
        %2931 = vmatprep.subr.bf16.mxu0 0
        %2932 = vmatpush1.bf16.msra.mxu0 0
        %2933 = vmatprep.subr.bf16.mxu0 0
        %2934 = vmatpush1.bf16.msra.mxu0 0
        %2935 = vmatprep.subr.bf16.mxu0 0
        %2936 = vmatpush1.bf16.msra.mxu0 %v2919
        %2937 = vmatprep.subr.bf16.mxu0 0
        %2938 = vmatpush1.bf16.msra.mxu0 %v2918
        %2939 = vmatprep.subr.bf16.mxu0 0
        %2940 = vmatpush1.bf16.msra.mxu0 %v2917
        %2941 = vmatprep.subr.bf16.mxu0 0
        %2942 = vmatpush1.bf16.msra.mxu0 %v2916
        %2943 = vmatprep.subr.bf16.mxu0 0
        %2944 = vmatpush2.bf16.msra.mxu0 0
        %2945 = vmatprep.subr.bf16.mxu0 0
        %2946 = vmatpush2.bf16.msra.mxu0 0
        %2947 = vmatprep.subr.bf16.mxu0 0
        %2948 = vmatpush2.bf16.msra.mxu0 0
        %2949 = vmatprep.subr.bf16.mxu0 0
        %2950 = vmatpush2.bf16.msra.mxu0 0
        %2951 = vmatprep.subr.bf16.mxu0 0
        %2952 = vmatpush2.bf16.msra.mxu0 0
        %2953 = vmatprep.subr.bf16.mxu0 0
        %2954 = vmatpush2.bf16.msra.mxu0 0
        %2955 = vmatprep.subr.bf16.mxu0 0
        %2956 = vmatpush2.bf16.msra.mxu0 0
        %2957 = vmatprep.subr.bf16.mxu0 0
        %2958 = vmatpush2.bf16.msra.mxu0 0
        %2959 = vmatprep.mubr.bf16.mxu0 0
        %2960 = vmatmul.mubr.bf16.gmra.mxu0 %v2925
        %v2961 = vpop.f32.mrf.mxu0
        %v2962 = vadd.f32 %v2898, %v2961
        %v2963 = vpop.f32.mrf.mxu0
        %v2964 = vpop.f32.mrf.mxu0
        %v2965 = vpop.f32.mrf.mxu0
        %2966 = vdwg.mxu0
        %s2967 = scalar_lea.vmem %s8, 32
        %v2968 = vld [vmem:[%s2967] sm:$0xf]
        %v2969 = vld [vmem:[%s2967 + $0x4] sm:$0xf]
        %v2970 = vld [vmem:[%s2967 + $0x8] sm:$0xf]
        %v2971 = vld [vmem:[%s2967 + $0xc] sm:$0xf]
        %v2972 = vld [vmem:[%s2967 + $0x10] sm:$0xf]
        %v2973 = vld [vmem:[%s2967 + $0x14] sm:$0xf]
        %v2974 = vld [vmem:[%s2967 + $0x18] sm:$0xf]
        %v2975 = vld [vmem:[%s2967 + $0x1c] sm:$0xf]
        %s2976 = scalar_lea.vmem %s9, 1
        %v2977 = vld [vmem:[%s2976] sm:$0x1]
        %v2979 = vlaneseq
        %v2980 = vshrl.u32 %v2979, 7
        %v2981 = vsub.s32 0, %v2980
        %v2982 = vrot.slane %v2977, %v2981
        %v2992 = vunpack.c.l.b16 %v2968
        %v2993 = vunpack.c.l.b16 %v2969
        %v2994 = vunpack.c.l.b16 %v2970
        %v2995 = vunpack.c.l.b16 %v2971
        %v2996 = vunpack.c.l.b16 %v2972
        %v2997 = vunpack.c.l.b16 %v2973
        %v2998 = vunpack.c.l.b16 %v2974
        %v2999 = vunpack.c.l.b16 %v2975
        %v3000 = vpack.c.b16 %v2993, %v2992
        %v3001 = vpack.c.b16 %v2995, %v2994
        %v3002 = vpack.c.b16 %v2997, %v2996
        %v3003 = vpack.c.b16 %v2999, %v2998
        %3008 = vmatprep.subr.bf16.mxu0 0
        %3009 = vmatpush1.bf16.msra.mxu0 0
        %3010 = vmatprep.subr.bf16.mxu0 0
        %3011 = vmatpush1.bf16.msra.mxu0 0
        %3012 = vmatprep.subr.bf16.mxu0 0
        %3013 = vmatpush1.bf16.msra.mxu0 0
        %3014 = vmatprep.subr.bf16.mxu0 0
        %3015 = vmatpush1.bf16.msra.mxu0 0
        %3016 = vmatprep.subr.bf16.mxu0 0
        %3017 = vmatpush1.bf16.msra.mxu0 %v3003
        %3018 = vmatprep.subr.bf16.mxu0 0
        %3019 = vmatpush1.bf16.msra.mxu0 %v3002
        %3020 = vmatprep.subr.bf16.mxu0 0
        %3021 = vmatpush1.bf16.msra.mxu0 %v3001
        %3022 = vmatprep.subr.bf16.mxu0 0
        %3023 = vmatpush1.bf16.msra.mxu0 %v3000
        %3024 = vmatprep.subr.bf16.mxu0 0
        %3025 = vmatpush2.bf16.msra.mxu0 0
        %3026 = vmatprep.subr.bf16.mxu0 0
        %3027 = vmatpush2.bf16.msra.mxu0 0
        %3028 = vmatprep.subr.bf16.mxu0 0
        %3029 = vmatpush2.bf16.msra.mxu0 0
        %3030 = vmatprep.subr.bf16.mxu0 0
        %3031 = vmatpush2.bf16.msra.mxu0 0
        %3032 = vmatprep.subr.bf16.mxu0 0
        %3033 = vmatpush2.bf16.msra.mxu0 0
        %3034 = vmatprep.subr.bf16.mxu0 0
        %3035 = vmatpush2.bf16.msra.mxu0 0
        %3036 = vmatprep.subr.bf16.mxu0 0
        %3037 = vmatpush2.bf16.msra.mxu0 0
        %3038 = vmatprep.subr.bf16.mxu0 0
        %3039 = vmatpush2.bf16.msra.mxu0 0
        %3040 = vmatprep.mubr.bf16.mxu0 0
        %3041 = vmatmul.mubr.bf16.gmra.mxu0 %v1402
        %v3042 = vpop.f32.mrf.mxu0
        %v3043 = vadd.f32 %v2982, %v3042
        %v3044 = vpop.f32.mrf.mxu0
        %v3045 = vpop.f32.mrf.mxu0
        %v3046 = vadd.f32 %v2982, %v3045
        %v3047 = vpop.f32.mrf.mxu0
        %3048 = vdwg.mxu0
        %v3049 = vpack.c.bf16 %v2962, %v2962
        %v3050 = vpack.c.bf16 %v3046, %v3043
        %v3052 = vsel %vm712, %v3049, 0
        %v3055 = vsel %vm712, %v3050, 0
        %3057 = vmatprep.subr.bf16.mxu0 0
        %3058 = vmatpush1.bf16.xpose.msra.mxu0 0
        %3059 = vmatprep.subr.bf16.mxu0 0
        %3060 = vmatpush1.bf16.xpose.msra.mxu0 0
        %3061 = vmatprep.subr.bf16.mxu0 0
        %3062 = vmatpush1.bf16.xpose.msra.mxu0 0
        %3063 = vmatprep.subr.bf16.mxu0 0
        %3064 = vmatpush1.bf16.xpose.msra.mxu0 0
        %3065 = vmatprep.subr.bf16.mxu0 0
        %3066 = vmatpush1.bf16.xpose.msra.mxu0 0
        %3067 = vmatprep.subr.bf16.mxu0 0
        %3068 = vmatpush1.bf16.xpose.msra.mxu0 0
        %3069 = vmatprep.subr.bf16.mxu0 0
        %3070 = vmatpush1.bf16.xpose.msra.mxu0 0
        %3071 = vmatprep.subr.bf16.mxu0 0
        %3072 = vmatpush1.bf16.xpose.msra.mxu0 %v3055
        %3073 = vmatprep.subr.bf16.mxu0 0
        %3074 = vmatpush2.bf16.xpose.msra.mxu0 0
        %3075 = vmatprep.subr.bf16.mxu0 0
        %3076 = vmatpush2.bf16.xpose.msra.mxu0 0
        %3077 = vmatprep.subr.bf16.mxu0 0
        %3078 = vmatpush2.bf16.xpose.msra.mxu0 0
        %3079 = vmatprep.subr.bf16.mxu0 0
        %3080 = vmatpush2.bf16.xpose.msra.mxu0 0
        %3081 = vmatprep.subr.bf16.mxu0 0
        %3082 = vmatpush2.bf16.xpose.msra.mxu0 0
        %3083 = vmatprep.subr.bf16.mxu0 0
        %3084 = vmatpush2.bf16.xpose.msra.mxu0 0
        %3085 = vmatprep.subr.bf16.mxu0 0
        %3086 = vmatpush2.bf16.xpose.msra.mxu0 0
        %3087 = vmatprep.subr.bf16.mxu0 0
        %3088 = vmatpush2.bf16.xpose.msra.mxu0 0
        %3089 = vmatprep.mubr.bf16.mxu0 0
        %3090 = vmatmul.mubr.bf16.gmra.mxu0 %v3052
        %v3091 = vpop.f32.mrf.mxu0
        %v3092 = vadd.f32 0.0, %v3091
        %v3093 = vpop.f32.mrf.mxu0
        %v3094 = vpop.f32.mrf.mxu0
        %v3095 = vpop.f32.mrf.mxu0
        %3096 = vdwg.mxu0
        %v3097 = vsel %vm712, %v3092, -inf
        %3098 = vmax.xlane.f32.xlu0 %v3097
        %v3099 = vpop.xlane.xlu0 %3098
        %v3100 = vsub.f32 %v3092, %v3099
        %v3101 = vmul.f32 %v3100, 1.442695
        %v3102 = vpow.pop %v3101
        %v3103 = vsel %vm712, %v3102, 0.0
        %3104 = vadd.xlane.f32.xlu0 %v3103
        %v3105 = vpop.xlane.xlu0 %3104
        %v3106 = vrcp.pop %v3105
        %v3107 = vmul.f32 %v3102, %v3106
        %v3108 = vpack.c.bf16 %v3107, %v3107
        %3110 = vrot.lane.b32.xlu0 %v3050, 64
        %v3111 = vpop.permute.xlu0 %3110
        %v3114 = vsel %vm712, %v3108, 0
        %3116 = vmatprep.subr.bf16.mxu0 0
        %3117 = vmatpush1.bf16.msra.mxu0 0
        %3118 = vmatprep.subr.bf16.mxu0 0
        %3119 = vmatpush1.bf16.msra.mxu0 0
        %3120 = vmatprep.subr.bf16.mxu0 0
        %3121 = vmatpush1.bf16.msra.mxu0 0
        %3122 = vmatprep.subr.bf16.mxu0 0
        %3123 = vmatpush1.bf16.msra.mxu0 0
        %3124 = vmatprep.subr.bf16.mxu0 0
        %3125 = vmatpush1.bf16.msra.mxu0 0
        %3126 = vmatprep.subr.bf16.mxu0 0
        %3127 = vmatpush1.bf16.msra.mxu0 0
        %3128 = vmatprep.subr.bf16.mxu0 0
        %3129 = vmatpush1.bf16.msra.mxu0 0
        %3130 = vmatprep.subr.bf16.mxu0 0
        %3131 = vmatpush1.bf16.msra.mxu0 %v3111
        %3132 = vmatprep.subr.bf16.mxu0 0
        %3133 = vmatpush2.bf16.msra.mxu0 0
        %3134 = vmatprep.subr.bf16.mxu0 0
        %3135 = vmatpush2.bf16.msra.mxu0 0
        %3136 = vmatprep.subr.bf16.mxu0 0
        %3137 = vmatpush2.bf16.msra.mxu0 0
        %3138 = vmatprep.subr.bf16.mxu0 0
        %3139 = vmatpush2.bf16.msra.mxu0 0
        %3140 = vmatprep.subr.bf16.mxu0 0
        %3141 = vmatpush2.bf16.msra.mxu0 0
        %3142 = vmatprep.subr.bf16.mxu0 0
        %3143 = vmatpush2.bf16.msra.mxu0 0
        %3144 = vmatprep.subr.bf16.mxu0 0
        %3145 = vmatpush2.bf16.msra.mxu0 0
        %3146 = vmatprep.subr.bf16.mxu0 0
        %3147 = vmatpush2.bf16.msra.mxu0 0
        %3148 = vmatprep.mubr.bf16.mxu0 0
        %3149 = vmatmul.mubr.bf16.gmra.mxu0 %v3114
        %v3150 = vpop.f32.mrf.mxu0
        %v3151 = vadd.f32 0.0, %v3150
        %v3152 = vpop.f32.mrf.mxu0
        %v3153 = vpop.f32.mrf.mxu0
        %v3154 = vpop.f32.mrf.mxu0
        %3155 = vdwg.mxu0
        %3157 = vrot.lane.b32.xlu0 %v3049, 112
        %v3158 = vpop.permute.xlu0 %3157
        %3159 = vrot.lane.b32.xlu0 %v3050, 112
        %v3160 = vpop.permute.xlu0 %3159
        %v3162 = vsel %vm712, %v3158, 0
        %v3165 = vsel %vm712, %v3160, 0
        %3167 = vmatprep.subr.bf16.mxu0 0
        %3168 = vmatpush1.bf16.xpose.msra.mxu0 0
        %3169 = vmatprep.subr.bf16.mxu0 0
        %3170 = vmatpush1.bf16.xpose.msra.mxu0 0
        %3171 = vmatprep.subr.bf16.mxu0 0
        %3172 = vmatpush1.bf16.xpose.msra.mxu0 0
        %3173 = vmatprep.subr.bf16.mxu0 0
        %3174 = vmatpush1.bf16.xpose.msra.mxu0 0
        %3175 = vmatprep.subr.bf16.mxu0 0
        %3176 = vmatpush1.bf16.xpose.msra.mxu0 0
        %3177 = vmatprep.subr.bf16.mxu0 0
        %3178 = vmatpush1.bf16.xpose.msra.mxu0 0
        %3179 = vmatprep.subr.bf16.mxu0 0
        %3180 = vmatpush1.bf16.xpose.msra.mxu0 0
        %3181 = vmatprep.subr.bf16.mxu0 0
        %3182 = vmatpush1.bf16.xpose.msra.mxu0 %v3165
        %3183 = vmatprep.subr.bf16.mxu0 0
        %3184 = vmatpush2.bf16.xpose.msra.mxu0 0
        %3185 = vmatprep.subr.bf16.mxu0 0
        %3186 = vmatpush2.bf16.xpose.msra.mxu0 0
        %3187 = vmatprep.subr.bf16.mxu0 0
        %3188 = vmatpush2.bf16.xpose.msra.mxu0 0
        %3189 = vmatprep.subr.bf16.mxu0 0
        %3190 = vmatpush2.bf16.xpose.msra.mxu0 0
        %3191 = vmatprep.subr.bf16.mxu0 0
        %3192 = vmatpush2.bf16.xpose.msra.mxu0 0
        %3193 = vmatprep.subr.bf16.mxu0 0
        %3194 = vmatpush2.bf16.xpose.msra.mxu0 0
        %3195 = vmatprep.subr.bf16.mxu0 0
        %3196 = vmatpush2.bf16.xpose.msra.mxu0 0
        %3197 = vmatprep.subr.bf16.mxu0 0
        %3198 = vmatpush2.bf16.xpose.msra.mxu0 0
        %3199 = vmatprep.mubr.bf16.mxu0 0
        %3200 = vmatmul.mubr.bf16.gmra.mxu0 %v3162
        %v3201 = vpop.f32.mrf.mxu0
        %v3202 = vadd.f32 0.0, %v3201
        %v3203 = vpop.f32.mrf.mxu0
        %v3204 = vpop.f32.mrf.mxu0
        %v3205 = vpop.f32.mrf.mxu0
        %3206 = vdwg.mxu0
        %v3207 = vsel %vm712, %v3202, -inf
        %3208 = vmax.xlane.f32.xlu0 %v3207
        %v3209 = vpop.xlane.xlu0 %3208
        %v3210 = vsub.f32 %v3202, %v3209
        %v3211 = vmul.f32 %v3210, 1.442695
        %v3212 = vpow.pop %v3211
        %v3213 = vsel %vm712, %v3212, 0.0
        %3214 = vadd.xlane.f32.xlu0 %v3213
        %v3215 = vpop.xlane.xlu0 %3214
        %v3216 = vrcp.pop %v3215
        %v3217 = vmul.f32 %v3212, %v3216
        %v3218 = vpack.c.bf16 %v3217, %v3217
        %3219 = vrot.lane.b32.xlu0 %v3050, 48
        %v3220 = vpop.permute.xlu0 %3219
        %v3223 = vsel %vm712, %v3218, 0
        %3225 = vmatprep.subr.bf16.mxu0 0
        %3226 = vmatpush1.bf16.msra.mxu0 0
        %3227 = vmatprep.subr.bf16.mxu0 0
        %3228 = vmatpush1.bf16.msra.mxu0 0
        %3229 = vmatprep.subr.bf16.mxu0 0
        %3230 = vmatpush1.bf16.msra.mxu0 0
        %3231 = vmatprep.subr.bf16.mxu0 0
        %3232 = vmatpush1.bf16.msra.mxu0 0
        %3233 = vmatprep.subr.bf16.mxu0 0
        %3234 = vmatpush1.bf16.msra.mxu0 0
        %3235 = vmatprep.subr.bf16.mxu0 0
        %3236 = vmatpush1.bf16.msra.mxu0 0
        %3237 = vmatprep.subr.bf16.mxu0 0
        %3238 = vmatpush1.bf16.msra.mxu0 0
        %3239 = vmatprep.subr.bf16.mxu0 0
        %3240 = vmatpush1.bf16.msra.mxu0 %v3220
        %3241 = vmatprep.subr.bf16.mxu0 0
        %3242 = vmatpush2.bf16.msra.mxu0 0
        %3243 = vmatprep.subr.bf16.mxu0 0
        %3244 = vmatpush2.bf16.msra.mxu0 0
        %3245 = vmatprep.subr.bf16.mxu0 0
        %3246 = vmatpush2.bf16.msra.mxu0 0
        %3247 = vmatprep.subr.bf16.mxu0 0
        %3248 = vmatpush2.bf16.msra.mxu0 0
        %3249 = vmatprep.subr.bf16.mxu0 0
        %3250 = vmatpush2.bf16.msra.mxu0 0
        %3251 = vmatprep.subr.bf16.mxu0 0
        %3252 = vmatpush2.bf16.msra.mxu0 0
        %3253 = vmatprep.subr.bf16.mxu0 0
        %3254 = vmatpush2.bf16.msra.mxu0 0
        %3255 = vmatprep.subr.bf16.mxu0 0
        %3256 = vmatpush2.bf16.msra.mxu0 0
        %3257 = vmatprep.mubr.bf16.mxu0 0
        %3258 = vmatmul.mubr.bf16.gmra.mxu0 %v3223
        %v3259 = vpop.f32.mrf.mxu0
        %v3260 = vadd.f32 0.0, %v3259
        %v3261 = vpop.f32.mrf.mxu0
        %v3262 = vpop.f32.mrf.mxu0
        %v3263 = vpop.f32.mrf.mxu0
        %3264 = vdwg.mxu0
        %3265 = vrot.lane.b32.xlu0 %v3049, 96
        %v3266 = vpop.permute.xlu0 %3265
        %3267 = vrot.lane.b32.xlu0 %v3050, 96
        %v3268 = vpop.permute.xlu0 %3267
        %v3270 = vsel %vm712, %v3266, 0
        %v3273 = vsel %vm712, %v3268, 0
        %3275 = vmatprep.subr.bf16.mxu0 0
        %3276 = vmatpush1.bf16.xpose.msra.mxu0 0
        %3277 = vmatprep.subr.bf16.mxu0 0
        %3278 = vmatpush1.bf16.xpose.msra.mxu0 0
        %3279 = vmatprep.subr.bf16.mxu0 0
        %3280 = vmatpush1.bf16.xpose.msra.mxu0 0
        %3281 = vmatprep.subr.bf16.mxu0 0
        %3282 = vmatpush1.bf16.xpose.msra.mxu0 0
        %3283 = vmatprep.subr.bf16.mxu0 0
        %3284 = vmatpush1.bf16.xpose.msra.mxu0 0
        %3285 = vmatprep.subr.bf16.mxu0 0
        %3286 = vmatpush1.bf16.xpose.msra.mxu0 0
        %3287 = vmatprep.subr.bf16.mxu0 0
        %3288 = vmatpush1.bf16.xpose.msra.mxu0 0
        %3289 = vmatprep.subr.bf16.mxu0 0
        %3290 = vmatpush1.bf16.xpose.msra.mxu0 %v3273
        %3291 = vmatprep.subr.bf16.mxu0 0
        %3292 = vmatpush2.bf16.xpose.msra.mxu0 0
        %3293 = vmatprep.subr.bf16.mxu0 0
        %3294 = vmatpush2.bf16.xpose.msra.mxu0 0
        %3295 = vmatprep.subr.bf16.mxu0 0
        %3296 = vmatpush2.bf16.xpose.msra.mxu0 0
        %3297 = vmatprep.subr.bf16.mxu0 0
        %3298 = vmatpush2.bf16.xpose.msra.mxu0 0
        %3299 = vmatprep.subr.bf16.mxu0 0
        %3300 = vmatpush2.bf16.xpose.msra.mxu0 0
        %3301 = vmatprep.subr.bf16.mxu0 0
        %3302 = vmatpush2.bf16.xpose.msra.mxu0 0
        %3303 = vmatprep.subr.bf16.mxu0 0
        %3304 = vmatpush2.bf16.xpose.msra.mxu0 0
        %3305 = vmatprep.subr.bf16.mxu0 0
        %3306 = vmatpush2.bf16.xpose.msra.mxu0 0
        %3307 = vmatprep.mubr.bf16.mxu0 0
        %3308 = vmatmul.mubr.bf16.gmra.mxu0 %v3270
        %v3309 = vpop.f32.mrf.mxu0
        %v3310 = vadd.f32 0.0, %v3309
        %v3311 = vpop.f32.mrf.mxu0
        %v3312 = vpop.f32.mrf.mxu0
        %v3313 = vpop.f32.mrf.mxu0
        %3314 = vdwg.mxu0
        %v3315 = vsel %vm712, %v3310, -inf
        %3316 = vmax.xlane.f32.xlu0 %v3315
        %v3317 = vpop.xlane.xlu0 %3316
        %v3318 = vsub.f32 %v3310, %v3317
        %v3319 = vmul.f32 %v3318, 1.442695
        %v3320 = vpow.pop %v3319
        %v3321 = vsel %vm712, %v3320, 0.0
        %3322 = vadd.xlane.f32.xlu0 %v3321
        %v3323 = vpop.xlane.xlu0 %3322
        %v3324 = vrcp.pop %v3323
        %v3325 = vmul.f32 %v3320, %v3324
        %v3326 = vpack.c.bf16 %v3325, %v3325
        %3327 = vrot.lane.b32.xlu0 %v3050, 32
        %v3328 = vpop.permute.xlu0 %3327
        %v3331 = vsel %vm712, %v3326, 0
        %3333 = vmatprep.subr.bf16.mxu0 0
        %3334 = vmatpush1.bf16.msra.mxu0 0
        %3335 = vmatprep.subr.bf16.mxu0 0
        %3336 = vmatpush1.bf16.msra.mxu0 0
        %3337 = vmatprep.subr.bf16.mxu0 0
        %3338 = vmatpush1.bf16.msra.mxu0 0
        %3339 = vmatprep.subr.bf16.mxu0 0
        %3340 = vmatpush1.bf16.msra.mxu0 0
        %3341 = vmatprep.subr.bf16.mxu0 0
        %3342 = vmatpush1.bf16.msra.mxu0 0
        %3343 = vmatprep.subr.bf16.mxu0 0
        %3344 = vmatpush1.bf16.msra.mxu0 0
        %3345 = vmatprep.subr.bf16.mxu0 0
        %3346 = vmatpush1.bf16.msra.mxu0 0
        %3347 = vmatprep.subr.bf16.mxu0 0
        %3348 = vmatpush1.bf16.msra.mxu0 %v3328
        %3349 = vmatprep.subr.bf16.mxu0 0
        %3350 = vmatpush2.bf16.msra.mxu0 0
        %3351 = vmatprep.subr.bf16.mxu0 0
        %3352 = vmatpush2.bf16.msra.mxu0 0
        %3353 = vmatprep.subr.bf16.mxu0 0
        %3354 = vmatpush2.bf16.msra.mxu0 0
        %3355 = vmatprep.subr.bf16.mxu0 0
        %3356 = vmatpush2.bf16.msra.mxu0 0
        %3357 = vmatprep.subr.bf16.mxu0 0
        %3358 = vmatpush2.bf16.msra.mxu0 0
        %3359 = vmatprep.subr.bf16.mxu0 0
        %3360 = vmatpush2.bf16.msra.mxu0 0
        %3361 = vmatprep.subr.bf16.mxu0 0
        %3362 = vmatpush2.bf16.msra.mxu0 0
        %3363 = vmatprep.subr.bf16.mxu0 0
        %3364 = vmatpush2.bf16.msra.mxu0 0
        %3365 = vmatprep.mubr.bf16.mxu0 0
        %3366 = vmatmul.mubr.bf16.gmra.mxu0 %v3331
        %v3367 = vpop.f32.mrf.mxu0
        %v3368 = vadd.f32 0.0, %v3367
        %v3369 = vpop.f32.mrf.mxu0
        %v3370 = vpop.f32.mrf.mxu0
        %v3371 = vpop.f32.mrf.mxu0
        %3372 = vdwg.mxu0
        %3373 = vrot.lane.b32.xlu0 %v3049, 80
        %v3374 = vpop.permute.xlu0 %3373
        %3375 = vrot.lane.b32.xlu0 %v3050, 80
        %v3376 = vpop.permute.xlu0 %3375
        %v3378 = vsel %vm712, %v3374, 0
        %v3381 = vsel %vm712, %v3376, 0
        %3383 = vmatprep.subr.bf16.mxu0 0
        %3384 = vmatpush1.bf16.xpose.msra.mxu0 0
        %3385 = vmatprep.subr.bf16.mxu0 0
        %3386 = vmatpush1.bf16.xpose.msra.mxu0 0
        %3387 = vmatprep.subr.bf16.mxu0 0
        %3388 = vmatpush1.bf16.xpose.msra.mxu0 0
        %3389 = vmatprep.subr.bf16.mxu0 0
        %3390 = vmatpush1.bf16.xpose.msra.mxu0 0
        %3391 = vmatprep.subr.bf16.mxu0 0
        %3392 = vmatpush1.bf16.xpose.msra.mxu0 0
        %3393 = vmatprep.subr.bf16.mxu0 0
        %3394 = vmatpush1.bf16.xpose.msra.mxu0 0
        %3395 = vmatprep.subr.bf16.mxu0 0
        %3396 = vmatpush1.bf16.xpose.msra.mxu0 0
        %3397 = vmatprep.subr.bf16.mxu0 0
        %3398 = vmatpush1.bf16.xpose.msra.mxu0 %v3381
        %3399 = vmatprep.subr.bf16.mxu0 0
        %3400 = vmatpush2.bf16.xpose.msra.mxu0 0
        %3401 = vmatprep.subr.bf16.mxu0 0
        %3402 = vmatpush2.bf16.xpose.msra.mxu0 0
        %3403 = vmatprep.subr.bf16.mxu0 0
        %3404 = vmatpush2.bf16.xpose.msra.mxu0 0
        %3405 = vmatprep.subr.bf16.mxu0 0
        %3406 = vmatpush2.bf16.xpose.msra.mxu0 0
        %3407 = vmatprep.subr.bf16.mxu0 0
        %3408 = vmatpush2.bf16.xpose.msra.mxu0 0
        %3409 = vmatprep.subr.bf16.mxu0 0
        %3410 = vmatpush2.bf16.xpose.msra.mxu0 0
        %3411 = vmatprep.subr.bf16.mxu0 0
        %3412 = vmatpush2.bf16.xpose.msra.mxu0 0
        %3413 = vmatprep.subr.bf16.mxu0 0
        %3414 = vmatpush2.bf16.xpose.msra.mxu0 0
        %3415 = vmatprep.mubr.bf16.mxu0 0
        %3416 = vmatmul.mubr.bf16.gmra.mxu0 %v3378
        %v3417 = vpop.f32.mrf.mxu0
        %v3418 = vadd.f32 0.0, %v3417
        %v3419 = vpop.f32.mrf.mxu0
        %v3420 = vpop.f32.mrf.mxu0
        %v3421 = vpop.f32.mrf.mxu0
        %3422 = vdwg.mxu0
        %v3423 = vsel %vm712, %v3418, -inf
        %3424 = vmax.xlane.f32.xlu0 %v3423
        %v3425 = vpop.xlane.xlu0 %3424
        %v3426 = vsub.f32 %v3418, %v3425
        %v3427 = vmul.f32 %v3426, 1.442695
        %v3428 = vpow.pop %v3427
        %v3429 = vsel %vm712, %v3428, 0.0
        %3430 = vadd.xlane.f32.xlu0 %v3429
        %v3431 = vpop.xlane.xlu0 %3430
        %v3432 = vrcp.pop %v3431
        %v3433 = vmul.f32 %v3428, %v3432
        %v3434 = vpack.c.bf16 %v3433, %v3433
        %3435 = vrot.lane.b32.xlu0 %v3050, 16
        %v3436 = vpop.permute.xlu0 %3435
        %v3439 = vsel %vm712, %v3434, 0
        %3441 = vmatprep.subr.bf16.mxu0 0
        %3442 = vmatpush1.bf16.msra.mxu0 0
        %3443 = vmatprep.subr.bf16.mxu0 0
        %3444 = vmatpush1.bf16.msra.mxu0 0
        %3445 = vmatprep.subr.bf16.mxu0 0
        %3446 = vmatpush1.bf16.msra.mxu0 0
        %3447 = vmatprep.subr.bf16.mxu0 0
        %3448 = vmatpush1.bf16.msra.mxu0 0
        %3449 = vmatprep.subr.bf16.mxu0 0
        %3450 = vmatpush1.bf16.msra.mxu0 0
        %3451 = vmatprep.subr.bf16.mxu0 0
        %3452 = vmatpush1.bf16.msra.mxu0 0
        %3453 = vmatprep.subr.bf16.mxu0 0
        %3454 = vmatpush1.bf16.msra.mxu0 0
        %3455 = vmatprep.subr.bf16.mxu0 0
        %3456 = vmatpush1.bf16.msra.mxu0 %v3436
        %3457 = vmatprep.subr.bf16.mxu0 0
        %3458 = vmatpush2.bf16.msra.mxu0 0
        %3459 = vmatprep.subr.bf16.mxu0 0
        %3460 = vmatpush2.bf16.msra.mxu0 0
        %3461 = vmatprep.subr.bf16.mxu0 0
        %3462 = vmatpush2.bf16.msra.mxu0 0
        %3463 = vmatprep.subr.bf16.mxu0 0
        %3464 = vmatpush2.bf16.msra.mxu0 0
        %3465 = vmatprep.subr.bf16.mxu0 0
        %3466 = vmatpush2.bf16.msra.mxu0 0
        %3467 = vmatprep.subr.bf16.mxu0 0
        %3468 = vmatpush2.bf16.msra.mxu0 0
        %3469 = vmatprep.subr.bf16.mxu0 0
        %3470 = vmatpush2.bf16.msra.mxu0 0
        %3471 = vmatprep.subr.bf16.mxu0 0
        %3472 = vmatpush2.bf16.msra.mxu0 0
        %3473 = vmatprep.mubr.bf16.mxu0 0
        %3474 = vmatmul.mubr.bf16.gmra.mxu0 %v3439
        %v3475 = vpop.f32.mrf.mxu0
        %v3476 = vadd.f32 0.0, %v3475
        %v3477 = vpop.f32.mrf.mxu0
        %v3478 = vpop.f32.mrf.mxu0
        %v3479 = vpop.f32.mrf.mxu0
        %3480 = vdwg.mxu0
        %3482 = vrot.lane.b32.xlu0 %v3260, 16
        %v3483 = vpop.permute.xlu0 %3482
        %3486 = vrot.lane.b32.xlu0 %v3368, 32
        %v3487 = vpop.permute.xlu0 %3486
        %3490 = vrot.lane.b32.xlu0 %v3476, 48
        %v3491 = vpop.permute.xlu0 %3490
        %v3493 = vsel %vm712, %v3151, %v3483
        %v3494 = vsel %vm1163, %v3493, %v3487
        %v3495 = vsel %vm1165, %v3494, %v3491
        %v3496 = vpack.c.bf16 %v3495, %v3495
        %s3497 = scalar_lea.vmem %s10, 32
        %v3498 = vld [vmem:[%s3497] sm:$0xf]
        %v3499 = vld [vmem:[%s3497 + $0x4] sm:$0xf]
        %v3500 = vld [vmem:[%s3497 + $0x8] sm:$0xf]
        %v3501 = vld [vmem:[%s3497 + $0xc] sm:$0xf]
        %v3502 = vld [vmem:[%s3497 + $0x10] sm:$0xf]
        %v3503 = vld [vmem:[%s3497 + $0x14] sm:$0xf]
        %v3504 = vld [vmem:[%s3497 + $0x18] sm:$0xf]
        %v3505 = vld [vmem:[%s3497 + $0x1c] sm:$0xf]
        %s3506 = scalar_lea.vmem %s11, 1
        %v3507 = vld [vmem:[%s3506] sm:$0x1]
        %v3509 = vlaneseq
        %v3510 = vshrl.u32 %v3509, 7
        %v3511 = vsub.s32 0, %v3510
        %v3512 = vrot.slane %v3507, %v3511
        %v3522 = vunpack.c.l.b16 %v3498
        %v3523 = vunpack.c.l.b16 %v3499
        %v3524 = vunpack.c.l.b16 %v3500
        %v3525 = vunpack.c.l.b16 %v3501
        %v3526 = vunpack.c.l.b16 %v3502
        %v3527 = vunpack.c.l.b16 %v3503
        %v3528 = vunpack.c.l.b16 %v3504
        %v3529 = vunpack.c.l.b16 %v3505
        %v3530 = vpack.c.b16 %v3523, %v3522
        %v3531 = vpack.c.b16 %v3525, %v3524
        %v3532 = vpack.c.b16 %v3527, %v3526
        %v3533 = vpack.c.b16 %v3529, %v3528
        %v3539 = vsel %vm662, %v3496, 0
        %3541 = vmatprep.subr.bf16.mxu0 0
        %3542 = vmatpush1.bf16.msra.mxu0 0
        %3543 = vmatprep.subr.bf16.mxu0 0
        %3544 = vmatpush1.bf16.msra.mxu0 0
        %3545 = vmatprep.subr.bf16.mxu0 0
        %3546 = vmatpush1.bf16.msra.mxu0 0
        %3547 = vmatprep.subr.bf16.mxu0 0
        %3548 = vmatpush1.bf16.msra.mxu0 0
        %3549 = vmatprep.subr.bf16.mxu0 0
        %3550 = vmatpush1.bf16.msra.mxu0 %v3533
        %3551 = vmatprep.subr.bf16.mxu0 0
        %3552 = vmatpush1.bf16.msra.mxu0 %v3532
        %3553 = vmatprep.subr.bf16.mxu0 0
        %3554 = vmatpush1.bf16.msra.mxu0 %v3531
        %3555 = vmatprep.subr.bf16.mxu0 0
        %3556 = vmatpush1.bf16.msra.mxu0 %v3530
        %3557 = vmatprep.subr.bf16.mxu0 0
        %3558 = vmatpush2.bf16.msra.mxu0 0
        %3559 = vmatprep.subr.bf16.mxu0 0
        %3560 = vmatpush2.bf16.msra.mxu0 0
        %3561 = vmatprep.subr.bf16.mxu0 0
        %3562 = vmatpush2.bf16.msra.mxu0 0
        %3563 = vmatprep.subr.bf16.mxu0 0
        %3564 = vmatpush2.bf16.msra.mxu0 0
        %3565 = vmatprep.subr.bf16.mxu0 0
        %3566 = vmatpush2.bf16.msra.mxu0 0
        %3567 = vmatprep.subr.bf16.mxu0 0
        %3568 = vmatpush2.bf16.msra.mxu0 0
        %3569 = vmatprep.subr.bf16.mxu0 0
        %3570 = vmatpush2.bf16.msra.mxu0 0
        %3571 = vmatprep.subr.bf16.mxu0 0
        %3572 = vmatpush2.bf16.msra.mxu0 0
        %3573 = vmatprep.mubr.bf16.mxu0 0
        %3574 = vmatmul.mubr.bf16.gmra.mxu0 %v3539
        %v3575 = vpop.f32.mrf.mxu0
        %v3576 = vadd.f32 %v3512, %v3575
        %v3577 = vpop.f32.mrf.mxu0
        %v3578 = vpop.f32.mrf.mxu0
        %v3579 = vpop.f32.mrf.mxu0
        %3580 = vdwg.mxu0
        %v3581 = vadd.f32 %v2881, %v3576
        %v3582 = vsel %vm662, %v3581, 0.0
        %3583 = vadd.xlane.f32.xlu0 %v3582
        %v3584 = vpop.xlane.xlu0 %3583
        %v3585 = vmul.f32 %v3584, %v1254
        %v3586 = vsub.f32 %v3581, %v3585
        %v3587 = vmul.f32 %v3586, %v3586
        %v3588 = vsel %vm662, %v3587, 0.0
        %3589 = vadd.xlane.f32.xlu0 %v3588
        %v3590 = vpop.xlane.xlu0 %3589
        %v3591 = vmul.f32 %v3590, %v1254
        %v3592 = vadd.f32 %v3591, 1e-05
        %v3593 = vrsqrt.pop %v3592
        %v3594 = vmul.f32 %v3586, %v3593
        %v3595 = vmul.f32 %v3594, %v2872
        %v3596 = vadd.f32 %v3595, %v2879
        %v3597 = vpack.c.bf16 %v3596, %v3596
        %s3598 = scalar_lea.vmem %s12, 32
        %v3599 = vld [vmem:[%s3598] sm:$0xf]
        %v3600 = vld [vmem:[%s3598 + $0x4] sm:$0xf]
        %v3601 = vld [vmem:[%s3598 + $0x8] sm:$0xf]
        %v3602 = vld [vmem:[%s3598 + $0xc] sm:$0xf]
        %v3603 = vld [vmem:[%s3598 + $0x10] sm:$0xf]
        %v3604 = vld [vmem:[%s3598 + $0x14] sm:$0xf]
        %v3605 = vld [vmem:[%s3598 + $0x18] sm:$0xf]
        %v3606 = vld [vmem:[%s3598 + $0x1c] sm:$0xf]
        %s3607 = scalar_lea.vmem %s13, 1
        %v3608 = vld [vmem:[%s3607] sm:$0x1]
        %v3610 = vlaneseq
        %v3611 = vshrl.u32 %v3610, 7
        %v3612 = vsub.s32 0, %v3611
        %v3613 = vrot.slane %v3608, %v3612
        %v3623 = vunpack.c.l.b16 %v3599
        %v3624 = vunpack.c.l.b16 %v3600
        %v3625 = vunpack.c.l.b16 %v3601
        %v3626 = vunpack.c.l.b16 %v3602
        %v3627 = vunpack.c.l.b16 %v3603
        %v3628 = vunpack.c.l.b16 %v3604
        %v3629 = vunpack.c.l.b16 %v3605
        %v3630 = vunpack.c.l.b16 %v3606
        %v3631 = vpack.c.b16 %v3624, %v3623
        %v3632 = vpack.c.b16 %v3626, %v3625
        %v3633 = vpack.c.b16 %v3628, %v3627
        %v3634 = vpack.c.b16 %v3630, %v3629
        %v3640 = vsel %vm662, %v3597, 0
        %3642 = vmatprep.subr.bf16.mxu0 0
        %3643 = vmatpush1.bf16.msra.mxu0 0
        %3644 = vmatprep.subr.bf16.mxu0 0
        %3645 = vmatpush1.bf16.msra.mxu0 0
        %3646 = vmatprep.subr.bf16.mxu0 0
        %3647 = vmatpush1.bf16.msra.mxu0 0
        %3648 = vmatprep.subr.bf16.mxu0 0
        %3649 = vmatpush1.bf16.msra.mxu0 0
        %3650 = vmatprep.subr.bf16.mxu0 0
        %3651 = vmatpush1.bf16.msra.mxu0 %v3634
        %3652 = vmatprep.subr.bf16.mxu0 0
        %3653 = vmatpush1.bf16.msra.mxu0 %v3633
        %3654 = vmatprep.subr.bf16.mxu0 0
        %3655 = vmatpush1.bf16.msra.mxu0 %v3632
        %3656 = vmatprep.subr.bf16.mxu0 0
        %3657 = vmatpush1.bf16.msra.mxu0 %v3631
        %3658 = vmatprep.subr.bf16.mxu0 0
        %3659 = vmatpush2.bf16.msra.mxu0 0
        %3660 = vmatprep.subr.bf16.mxu0 0
        %3661 = vmatpush2.bf16.msra.mxu0 0
        %3662 = vmatprep.subr.bf16.mxu0 0
        %3663 = vmatpush2.bf16.msra.mxu0 0
        %3664 = vmatprep.subr.bf16.mxu0 0
        %3665 = vmatpush2.bf16.msra.mxu0 0
        %3666 = vmatprep.subr.bf16.mxu0 0
        %3667 = vmatpush2.bf16.msra.mxu0 0
        %3668 = vmatprep.subr.bf16.mxu0 0
        %3669 = vmatpush2.bf16.msra.mxu0 0
        %3670 = vmatprep.subr.bf16.mxu0 0
        %3671 = vmatpush2.bf16.msra.mxu0 0
        %3672 = vmatprep.subr.bf16.mxu0 0
        %3673 = vmatpush2.bf16.msra.mxu0 0
        %3674 = vmatprep.mubr.bf16.mxu0 0
        %3675 = vmatmul.mubr.bf16.gmra.mxu0 %v3640
        %v3676 = vpop.f32.mrf.mxu0
        %v3677 = vadd.f32 %v3613, %v3676
        %v3678 = vpop.f32.mrf.mxu0
        %v3679 = vpop.f32.mrf.mxu0
        %v3680 = vpop.f32.mrf.mxu0
        %3681 = vdwg.mxu0
        %v3682 = vmax.f32 %v3677, 0.0
        %v3683 = vpack.c.bf16 %v3682, %v3682
        %s3684 = scalar_lea.vmem %s14, 64
        %v3685 = vld [vmem:[%s3684] sm:$0xf]
        %v3686 = vld [vmem:[%s3684 + $0x4] sm:$0xf]
        %v3687 = vld [vmem:[%s3684 + $0x8] sm:$0xf]
        %v3688 = vld [vmem:[%s3684 + $0xc] sm:$0xf]
        %v3689 = vld [vmem:[%s3684 + $0x10] sm:$0xf]
        %v3690 = vld [vmem:[%s3684 + $0x14] sm:$0xf]
        %v3691 = vld [vmem:[%s3684 + $0x18] sm:$0xf]
        %v3692 = vld [vmem:[%s3684 + $0x1c] sm:$0xf]
        %v3693 = vld [vmem:[%s3684 + $0x20] sm:$0xf]
        %v3694 = vld [vmem:[%s3684 + $0x24] sm:$0xf]
        %v3695 = vld [vmem:[%s3684 + $0x28] sm:$0xf]
        %v3696 = vld [vmem:[%s3684 + $0x2c] sm:$0xf]
        %v3697 = vld [vmem:[%s3684 + $0x30] sm:$0xf]
        %v3698 = vld [vmem:[%s3684 + $0x34] sm:$0xf]
        %v3699 = vld [vmem:[%s3684 + $0x38] sm:$0xf]
        %v3700 = vld [vmem:[%s3684 + $0x3c] sm:$0xf]
        %s3701 = scalar_lea.vmem %s15, 1
        %v3702 = vld [vmem:[%s3701] sm:$0x1]
        %v3704 = vlaneseq
        %v3705 = vshrl.u32 %v3704, 7
        %v3706 = vsub.s32 0, %v3705
        %v3707 = vrot.slane %v3702, %v3706
        %v3725 = vunpack.c.l.b16 %v3685
        %v3726 = vunpack.c.l.b16 %v3686
        %v3727 = vunpack.c.l.b16 %v3687
        %v3728 = vunpack.c.l.b16 %v3688
        %v3729 = vunpack.c.l.b16 %v3689
        %v3730 = vunpack.c.l.b16 %v3690
        %v3731 = vunpack.c.l.b16 %v3691
        %v3732 = vunpack.c.l.b16 %v3692
        %v3733 = vunpack.c.l.b16 %v3693
        %v3734 = vunpack.c.l.b16 %v3694
        %v3735 = vunpack.c.l.b16 %v3695
        %v3736 = vunpack.c.l.b16 %v3696
        %v3737 = vunpack.c.l.b16 %v3697
        %v3738 = vunpack.c.l.b16 %v3698
        %v3739 = vunpack.c.l.b16 %v3699
        %v3740 = vunpack.c.l.b16 %v3700
        %v3741 = vpack.c.b16 %v3726, %v3725
        %v3742 = vpack.c.b16 %v3728, %v3727
        %v3743 = vpack.c.b16 %v3730, %v3729
        %v3744 = vpack.c.b16 %v3732, %v3731
        %v3745 = vpack.c.b16 %v3734, %v3733
        %v3746 = vpack.c.b16 %v3736, %v3735
        %v3747 = vpack.c.b16 %v3738, %v3737
        %v3748 = vpack.c.b16 %v3740, %v3739
        %3757 = vmatprep.subr.bf16.mxu0 0
        %3758 = vmatpush1.bf16.msra.mxu0 %v3748
        %3759 = vmatprep.subr.bf16.mxu0 0
        %3760 = vmatpush1.bf16.msra.mxu0 %v3747
        %3761 = vmatprep.subr.bf16.mxu0 0
        %3762 = vmatpush1.bf16.msra.mxu0 %v3746
        %3763 = vmatprep.subr.bf16.mxu0 0
        %3764 = vmatpush1.bf16.msra.mxu0 %v3745
        %3765 = vmatprep.subr.bf16.mxu0 0
        %3766 = vmatpush1.bf16.msra.mxu0 %v3744
        %3767 = vmatprep.subr.bf16.mxu0 0
        %3768 = vmatpush1.bf16.msra.mxu0 %v3743
        %3769 = vmatprep.subr.bf16.mxu0 0
        %3770 = vmatpush1.bf16.msra.mxu0 %v3742
        %3771 = vmatprep.subr.bf16.mxu0 0
        %3772 = vmatpush1.bf16.msra.mxu0 %v3741
        %3773 = vmatprep.subr.bf16.mxu0 0
        %3774 = vmatpush2.bf16.msra.mxu0 0
        %3775 = vmatprep.subr.bf16.mxu0 0
        %3776 = vmatpush2.bf16.msra.mxu0 0
        %3777 = vmatprep.subr.bf16.mxu0 0
        %3778 = vmatpush2.bf16.msra.mxu0 0
        %3779 = vmatprep.subr.bf16.mxu0 0
        %3780 = vmatpush2.bf16.msra.mxu0 0
        %3781 = vmatprep.subr.bf16.mxu0 0
        %3782 = vmatpush2.bf16.msra.mxu0 0
        %3783 = vmatprep.subr.bf16.mxu0 0
        %3784 = vmatpush2.bf16.msra.mxu0 0
        %3785 = vmatprep.subr.bf16.mxu0 0
        %3786 = vmatpush2.bf16.msra.mxu0 0
        %3787 = vmatprep.subr.bf16.mxu0 0
        %3788 = vmatpush2.bf16.msra.mxu0 0
        %3789 = vmatprep.mubr.bf16.mxu0 0
        %3790 = vmatmul.mubr.bf16.gmra.mxu0 %v3683
        %v3791 = vpop.f32.mrf.mxu0
        %v3792 = vadd.f32 %v3707, %v3791
        %v3793 = vpop.f32.mrf.mxu0
        %v3794 = vpop.f32.mrf.mxu0
        %v3795 = vpop.f32.mrf.mxu0
        %3796 = vdwg.mxu0
        %v3797 = vadd.f32 %v3596, %v3792
        %v3798 = vsel %vm662, %v3797, 0.0
        %3799 = vadd.xlane.f32.xlu0 %v3798
        %v3800 = vpop.xlane.xlu0 %3799
        %v3801 = vmul.f32 %v3800, %v1254
        %v3802 = vsub.f32 %v3797, %v3801
        %v3803 = vmul.f32 %v3802, %v3802
        %v3804 = vsel %vm662, %v3803, 0.0
        %3805 = vadd.xlane.f32.xlu0 %v3804
        %v3806 = vpop.xlane.xlu0 %3805
        %v3807 = vmul.f32 %v3806, %v1254
        %v3808 = vadd.f32 %v3807, 1e-05
        %v3809 = vrsqrt.pop %v3808
        %v3810 = vmul.f32 %v3802, %v3809
        %v3811 = vmul.f32 %v3810, %v2872
        %v3812 = vadd.f32 %v3811, %v2879
        %3813 = vst.msk [vmem:[%s582] sm:$0xff] %vm662, %v3812
        %3814 = vst.msk [vmem:[%s582 + $0x8] sm:$0xff] %vm662, %v596
        %3815 = vst.msk [vmem:[%s582 + $0x10] sm:$0xff] %vm662, %v597
        %s3816 = sand.u32 %s428, 1
        %s3817 = scalar_lea.sflag [#allocation3], %s3816
        %s3818 = sand.u32 %s428, 1
        %s3819 = smul.addr %s3818, 24
        %s3820 = scalar_lea.vmem [#allocation2], %s3819
        // Predicated region
        $region93: #{decoder_forward.1} parent=91 // pred_check
          %p3821 = pneg %p438
        $region94: #{decoder_forward.1} parent=91 // pred_check_branch
          %3823 = sbr.rel (%p3821) target = $region96
        $region95: #{decoder_forward.1} parent=91 // pred_region
          %s3824 = smul.u32 3, %s32
          %s3826 = ssub.s32 384, 384
          %3827 = vsyncadd %s3817, %s3826
          %s3828 = smul.addr %s3824, 128
          %s3829 = scalar_lea.hbm %s18, %s3828
          %s3830 = sshll.u32 %s3820, 4
          %s3831 = int_to_ptr.vmem [resolvable:$true] %s3830
          %3836 = dma.vmem_to_hbm [thread:$0]  %s3831, 384, %s3829, %s3817, 128, 128, 8
        $region96: #{decoder_forward.1} parent=91 // pred_fallthru
          _
      $region92: #{decoder_forward.1} parent=5 // pred_fallthru
        _
      %p3837 = scmp.le.s32.totalorder 2, %s27
      // Predicated region
      $region97: #{decoder_forward.1} parent=5 // pred_check
        %p3838 = pneg %p3837
      $region98: #{decoder_forward.1} parent=5 // pred_check_branch
        %3840 = sbr.rel (%p3838) target = $region100
      $region99: #{decoder_forward.1} parent=5 // pred_region
        %s3841 = ssub.s32 %s27, 2
        // Predicated region
        $region101: #{decoder_forward.1} parent=99 // pred_check
          %p3842 = pneg %p444
        $region102: #{decoder_forward.1} parent=99 // pred_check_branch
          %3844 = sbr.rel (%p3842) target = $region104
        $region103: #{decoder_forward.1} parent=99 // pred_region
          %s3845 = sand.u32 %s429, 1
          %s3846 = scalar_lea.sflag [#allocation3], %s3845
          %s3847 = sand.u32 %s429, 1
          %s3848 = smul.addr %s3847, 24
          %s3849 = scalar_lea.vmem [#allocation2], %s3848
          %3850 = dma.done %s3846, 384
        $region104: #{decoder_forward.1} parent=99 // pred_fallthru
          _
      $region100: #{decoder_forward.1} parent=5 // pred_fallthru
        _
    $region6: #{decoder_forward.1} parent=1 // loop_footer
      %s31 = sadd.s32 1, %s27
    $region7: #{decoder_forward.1} parent=1 // loop_footer_branch
      %26 = sbr.rel target = $region3
    $region8: #{decoder_forward.1} parent=1 // loop_exit
      _
    %3851 = vsyncpa [#allocation3], 1
    %s3852 = scalar_lea.sflag [#allocation3], 1
    %3853 = vsyncpa %s3852, 1

</llo_original>
